<compile_context>
chip_gen: v5e
topology: v5e:2x2
jax: 0.10.0
libtpu: 0.0.40
codegen_flags: <defaults>
</compile_context>

<pallas_src>
import functools

import jax
import jax.numpy as jnp
from jax.experimental import pallas as pl
from jax.experimental.pallas import tpu as pltpu

INPUT_DIM = 256
NUM_CHANNELS = 2
LABEL_SIZE = 2
LATENT_DIM = 32
H1, H2, H3 = 1024, 512, 256
D_X = INPUT_DIM * NUM_CHANNELS          # 512 (already a multiple of 128)
D_HEAD = 2 * LATENT_DIM                 # fused mu|logvar head width (64)
D_OUT = 3 * LATENT_DIM                  # useful output lanes: mu | logvar | z (96)
D_OUT_PAD = 128                         # lane-dense padded output width
AUX_W = 128                             # packed auxiliary input: c | pad | eps | pad
EPS_OFF = 64                            # eps lives at lanes [64, 96) of the aux block


def _round_up(n, m):
    return ((n + m - 1) // m) * m


def _encoder_kernel(x_ref, aux_ref, w1x_ref, w1c_ref, b1_ref, w2_ref, b2_ref,
                    w3_ref, b3_ref, w4_ref, b4_ref, out_ref):
    """Whole MLP fused: 5 MXU matmuls (bf16 x bf16 -> f32) + VPU bias/ReLU/reparam."""
    # fc1: main (512-wide) part on the MXU in bf16 (x already arrives as bf16).
    x = x_ref[...]                                                    # [tb, 512] bf16
    h = jnp.dot(x, w1x_ref[...], preferred_element_type=jnp.float32)  # [tb, 1024] f32

    # fc1: label part (K = 2) also on the MXU (pads to one sublane tile, ~free).
    aux = aux_ref[...]                                                # [tb, 128] f32
    c = aux[:, :LABEL_SIZE].astype(jnp.bfloat16)                      # [tb, 2]
    eps = aux[:, EPS_OFF:EPS_OFF + LATENT_DIM]                        # [tb, 32] f32
    h = h + jnp.dot(c, w1c_ref[...], preferred_element_type=jnp.float32)
    h = jnp.maximum(h + b1_ref[...], 0.0)

    # fc2 / fc3
    h = jnp.dot(h.astype(jnp.bfloat16), w2_ref[...],
                preferred_element_type=jnp.float32) + b2_ref[...]
    h = jnp.maximum(h, 0.0)
    h = jnp.dot(h.astype(jnp.bfloat16), w3_ref[...],
                preferred_element_type=jnp.float32) + b3_ref[...]
    h = jnp.maximum(h, 0.0)

    # fused heads: one [256, 64] matmul, then split mu / logvar.
    head = jnp.dot(h.astype(jnp.bfloat16), w4_ref[...],
                   preferred_element_type=jnp.float32) + b4_ref[...]  # [tb, 64]
    mu = head[:, :LATENT_DIM]
    logvar = head[:, LATENT_DIM:]

    # reparametrize: z = mu + exp(0.5 * logvar) * eps
    # TODO(synk): PyTorch casts eps to float64; TPU kernel keeps float32.
    z = mu + jnp.exp(0.5 * logvar) * eps

    # single lane-dense (128-wide) store: mu | logvar | z | zero-pad
    pad = jnp.zeros((z.shape[0], D_OUT_PAD - D_OUT), jnp.float32)
    out_ref[...] = jnp.concatenate([head, z, pad], axis=-1)           # [tb, 128]


def prepare_params(params):
    """Split/fuse + bf16-cast the f32 [in, out] params into kernel-ready form (once)."""
    (w1, b1, w2, b2, w3, b3, w41, b41, w42, b42) = params
    w1x = w1[:D_X].astype(jnp.bfloat16)                              # MXU part of fc1
    w1c = w1[D_X:].astype(jnp.bfloat16)                              # label part (MXU too)
    w4 = jnp.concatenate([w41, w42], axis=1).astype(jnp.bfloat16)    # fused heads
    b4 = jnp.concatenate([b41, b42], axis=1)
    return (w1x, w1c, b1, w2.astype(jnp.bfloat16), b2,
            w3.astype(jnp.bfloat16), b3, w4, b4)


@functools.partial(jax.jit, static_argnames=("tile_b",))
def encoder_forward(x, c, prep_params, eps, *, tile_b=None):
    """x: [B, 512], c: [B, 2], eps: [B, 32]; prep_params from prepare_params()."""
    (w1x, w1c, b1, w2, b2, w3, b3, w4, b4) = prep_params
    B = x.shape[0]

    if tile_b is None:
        # Big batch tiles amortize resident weights and the ~0.35us/step overhead.
        tile_b = min(_round_up(B, 8), 512)
        if B >= 16:
            # Guarantee >= 2 grid steps so the "parallel" batch axis can shard
            # across both TensorCores on v7x.
            tile_b = min(tile_b, _round_up((B + 1) // 2, 8))
    tile_b = max(8, _round_up(tile_b, 8))

    # Cast the matmul LHS to bf16 once in the wrapper (halves the per-step HBM read);
    # c / eps stay f32 for exact VPU math.
    x = x.astype(jnp.bfloat16)

    # Pack c and eps into one lane-dense [B, 128] auxiliary input (one DMA per step).
    aux = jnp.zeros((B, AUX_W), jnp.float32)
    aux = aux.at[:, :LABEL_SIZE].set(c)
    aux = aux.at[:, EPS_OFF:EPS_OFF + LATENT_DIM].set(eps)

    # Pad the batch so no tail rows are dropped; padded rows are sliced off below.
    Bp = _round_up(B, tile_b)
    if Bp != B:
        pad = Bp - B
        x = jnp.pad(x, ((0, pad), (0, 0)))
        aux = jnp.pad(aux, ((0, pad), (0, 0)))

    grid = (Bp // tile_b,)

    def full(shape):
        # weights / biases: same (resident) block for every grid step
        return pl.BlockSpec(shape, lambda i: (0,) * len(shape))

    def batched(feat):
        return pl.BlockSpec((tile_b, feat), lambda i: (i, 0))

    out = pl.pallas_call(
        _encoder_kernel,
        out_shape=jax.ShapeDtypeStruct((Bp, D_OUT_PAD), jnp.float32),
        grid_spec=pltpu.PrefetchScalarGridSpec(
            num_scalar_prefetch=0,
            grid=grid,
            in_specs=[
                batched(D_X),                       # x (bf16)
                batched(AUX_W),                     # packed c | eps
                full((D_X, H1)),                    # w1 (x part, bf16)
                full((LABEL_SIZE, H1)),             # w1 (label part, bf16)
                full((1, H1)),                      # b1
                full((H1, H2)), full((1, H2)),      # fc2
                full((H2, H3)), full((1, H3)),      # fc3
                full((H3, D_HEAD)), full((1, D_HEAD)),  # fused fc41|fc42
            ],
            out_specs=batched(D_OUT_PAD),
        ),
        compiler_params=pltpu.CompilerParams(
            dimension_semantics=("parallel",),
            vmem_limit_bytes=32 << 20,
        ),
    )(x, aux, w1x, w1c, b1, w2, b2, w3, b3, w4, b4)

    out = out[:B, :D_OUT]
    mu = out[:, :LATENT_DIM]
    logvar = out[:, LATENT_DIM:2 * LATENT_DIM]
    z = out[:, 2 * LATENT_DIM:]
    return z, mu, logvar


def init_params(key):
    """Deterministic parameter init. Weights stored as [in, out] (transposed vs torch)."""
    dims = [
        (INPUT_DIM * NUM_CHANNELS + LABEL_SIZE, H1),
        (H1, H2),
        (H2, H3),
        (H3, LATENT_DIM),
        (H3, LATENT_DIM),
    ]
    params = []
    for (d_in, d_out) in dims:
        key, kw, kb = jax.random.split(key, 3)
        bound = 1.0 / jnp.sqrt(d_in)
        w = jax.random.uniform(kw, (d_in, d_out), jnp.float32, -bound, bound)
        b = jax.random.uniform(kb, (1, d_out), jnp.float32, -bound, bound)
        params += [w, b]
    return tuple(params)


def reference_forward_matched(x, c, params, eps):
    """Pure-JAX reference mirroring the kernel's bf16-operand / f32-accumulate math."""
    (w1, b1, w2, b2, w3, b3, w41, b41, w42, b42) = params
    bf = lambda a: a.astype(jnp.bfloat16).astype(jnp.float32)
    h = bf(x) @ bf(w1[:D_X]) + bf(c) @ bf(w1[D_X:]) + b1
    h = jax.nn.relu(h)
    h = jax.nn.relu(bf(h) @ bf(w2) + b2)
    h = jax.nn.relu(bf(h) @ bf(w3) + b3)
    mu = bf(h) @ bf(w41) + b41
    logvar = bf(h) @ bf(w42) + b42
    z = mu + jnp.exp(0.5 * logvar) * eps
    return z, mu, logvar


def reference_forward_f32(x, c, params, eps):
    """Full-f32 reference (the original PyTorch math)."""
    (w1, b1, w2, b2, w3, b3, w41, b41, w42, b42) = params
    xc = jnp.concatenate([x, c], axis=1)
    h = jax.nn.relu(xc @ w1 + b1)
    h = jax.nn.relu(h @ w2 + b2)
    h = jax.nn.relu(h @ w3 + b3)
    mu = h @ w41 + b41
    logvar = h @ w42 + b42
    z = mu + jnp.exp(0.5 * logvar) * eps
    return z, mu, logvar


def _check(B, key):
    kp, kx, kc, ke = jax.random.split(key, 4)
    params = init_params(kp)
    prep = prepare_params(params)
    x = jax.random.normal(kx, (B, INPUT_DIM * NUM_CHANNELS), jnp.float32)
    c = jax.random.normal(kc, (B, LABEL_SIZE), jnp.float32)
    eps = jax.random.normal(ke, (B, LATENT_DIM), jnp.float32)

    z, mu, logvar = encoder_forward(x, c, prep, eps)
    jax.block_until_ready((z, mu, logvar))

    # Tight check against a reference that matches the kernel's precision recipe.
    z_m, mu_m, lv_m = reference_forward_matched(x, c, params, eps)
    assert jnp.allclose(mu, mu_m, atol=2e-3, rtol=2e-3)
    assert jnp.allclose(logvar, lv_m, atol=2e-3, rtol=2e-3)
    assert jnp.allclose(z, z_m, atol=2e-3, rtol=2e-3)

    # Loose sanity check against the full-f32 (PyTorch-equivalent) math.
    z_f, mu_f, lv_f = reference_forward_f32(x, c, params, eps)
    assert jnp.allclose(mu, mu_f, atol=1e-1, rtol=1e-1)
    assert jnp.allclose(logvar, lv_f, atol=1e-1, rtol=1e-1)
    assert jnp.allclose(z, z_f, atol=1e-1, rtol=1e-1)


if __name__ == "__main__":
    key = jax.random.PRNGKey(0)
    k1, k2 = jax.random.split(key)

    # B=12: not a multiple of 8 -> exercises the batch-tail padding path (1 grid step).
    _check(12, k1)
    # B=40: exercises the >=2-grid-step path (tile_b=24, Bp=48, 2 parallel tiles).
    _check(40, k2)

    print("KERNEL_OK")
</pallas_src>

<mosaic_0001>
module attributes {stable_mosaic.version = 11 : i64} {
  func.func @_encoder_kernel(%arg0: i32, %arg1: memref<16x512xbf16, #tpu.memory_space<vmem>>, %arg2: memref<16x128xf32, #tpu.memory_space<vmem>>, %arg3: memref<512x1024xbf16, #tpu.memory_space<vmem>>, %arg4: memref<2x1024xbf16, #tpu.memory_space<vmem>>, %arg5: memref<1x1024xf32, #tpu.memory_space<vmem>>, %arg6: memref<1024x512xbf16, #tpu.memory_space<vmem>>, %arg7: memref<1x512xf32, #tpu.memory_space<vmem>>, %arg8: memref<512x256xbf16, #tpu.memory_space<vmem>>, %arg9: memref<1x256xf32, #tpu.memory_space<vmem>>, %arg10: memref<256x64xbf16, #tpu.memory_space<vmem>>, %arg11: memref<1x64xf32, #tpu.memory_space<vmem>>, %arg12: memref<16x128xf32, #tpu.memory_space<vmem>>) attributes {dimension_semantics = [#tpu.dimension_semantics<parallel>], iteration_bounds = array<i64: 1>, scalar_prefetch = 0 : i64, scratch_operands = 0 : i64, tpu.core_type = #tpu.core_type<tc>, window_params = [{transform_indices = @transform_0, window_bounds = array<i64: 16, 512>}, {transform_indices = @transform_1, window_bounds = array<i64: 16, 128>}, {pipeline_mode = #tpu.pipeline_mode<synchronous>, transform_indices = @transform_2, window_bounds = array<i64: 512, 1024>}, {pipeline_mode = #tpu.pipeline_mode<synchronous>, transform_indices = @transform_3, window_bounds = array<i64: 2, 1024>}, {pipeline_mode = #tpu.pipeline_mode<synchronous>, transform_indices = @transform_4, window_bounds = array<i64: 1, 1024>}, {pipeline_mode = #tpu.pipeline_mode<synchronous>, transform_indices = @transform_5, window_bounds = array<i64: 1024, 512>}, {pipeline_mode = #tpu.pipeline_mode<synchronous>, transform_indices = @transform_6, window_bounds = array<i64: 1, 512>}, {pipeline_mode = #tpu.pipeline_mode<synchronous>, transform_indices = @transform_7, window_bounds = array<i64: 512, 256>}, {pipeline_mode = #tpu.pipeline_mode<synchronous>, transform_indices = @transform_8, window_bounds = array<i64: 1, 256>}, {pipeline_mode = #tpu.pipeline_mode<synchronous>, transform_indices = @transform_9, window_bounds = array<i64: 256, 64>}, {pipeline_mode = #tpu.pipeline_mode<synchronous>, transform_indices = @transform_10, window_bounds = array<i64: 1, 64>}, {transform_indices = @transform_11, window_bounds = array<i64: 16, 128>}]} {
    %c0 = arith.constant 0 : index
    %c0_0 = arith.constant 0 : index
    %0 = vector.load %arg1[%c0, %c0_0] : memref<16x512xbf16, #tpu.memory_space<vmem>>, vector<16x512xbf16>
    %c0_1 = arith.constant 0 : index
    %c0_2 = arith.constant 0 : index
    %1 = vector.load %arg3[%c0_1, %c0_2] : memref<512x1024xbf16, #tpu.memory_space<vmem>>, vector<512x1024xbf16>
    %cst = arith.constant dense<0.000000e+00> : vector<16x1024xf32>
    %2 = tpu.matmul %0, %1, %cst {dimension_numbers = #tpu.dot_dimension_numbers<[1], [0], [0], [1], [0, 0, 1, 1], [], []>} : vector<16x512xbf16>, vector<512x1024xbf16>, vector<16x1024xf32> -> vector<16x1024xf32>
    %c0_3 = arith.constant 0 : index
    %c0_4 = arith.constant 0 : index
    %3 = vector.load %arg2[%c0_3, %c0_4] : memref<16x128xf32, #tpu.memory_space<vmem>>, vector<16x128xf32>
    %4 = vector.extract_strided_slice %3 {offsets = [0, 0], sizes = [16, 2], strides = [1, 1]} : vector<16x128xf32> to vector<16x2xf32>
    %5 = arith.truncf %4 : vector<16x2xf32> to vector<16x2xbf16>
    %6 = vector.extract_strided_slice %3 {offsets = [0, 64], sizes = [16, 32], strides = [1, 1]} : vector<16x128xf32> to vector<16x32xf32>
    %c0_5 = arith.constant 0 : index
    %c0_6 = arith.constant 0 : index
    %7 = vector.load %arg4[%c0_5, %c0_6] : memref<2x1024xbf16, #tpu.memory_space<vmem>>, vector<2x1024xbf16>
    %cst_7 = arith.constant dense<0.000000e+00> : vector<16x1024xf32>
    %8 = tpu.matmul %5, %7, %cst_7 {dimension_numbers = #tpu.dot_dimension_numbers<[1], [0], [0], [1], [0, 0, 1, 1], [], []>} : vector<16x2xbf16>, vector<2x1024xbf16>, vector<16x1024xf32> -> vector<16x1024xf32>
    %9 = arith.addf %2, %8 : vector<16x1024xf32>
    %c0_8 = arith.constant 0 : index
    %c0_9 = arith.constant 0 : index
    %10 = vector.load %arg5[%c0_8, %c0_9] : memref<1x1024xf32, #tpu.memory_space<vmem>>, vector<1x1024xf32>
    %11 = vector.broadcast %10 : vector<1x1024xf32> to vector<16x1024xf32>
    %12 = arith.addf %9, %11 : vector<16x1024xf32>
    %cst_10 = arith.constant 0.000000e+00 : f32
    %13 = vector.broadcast %cst_10 : f32 to vector<16x1024xf32>
    %14 = arith.maximumf %12, %13 : vector<16x1024xf32>
    %15 = arith.truncf %14 : vector<16x1024xf32> to vector<16x1024xbf16>
    %c0_11 = arith.constant 0 : index
    %c0_12 = arith.constant 0 : index
    %16 = vector.load %arg6[%c0_11, %c0_12] : memref<1024x512xbf16, #tpu.memory_space<vmem>>, vector<1024x512xbf16>
    %cst_13 = arith.constant dense<0.000000e+00> : vector<16x512xf32>
    %17 = tpu.matmul %15, %16, %cst_13 {dimension_numbers = #tpu.dot_dimension_numbers<[1], [0], [0], [1], [0, 0, 1, 1], [], []>} : vector<16x1024xbf16>, vector<1024x512xbf16>, vector<16x512xf32> -> vector<16x512xf32>
    %c0_14 = arith.constant 0 : index
    %c0_15 = arith.constant 0 : index
    %18 = vector.load %arg7[%c0_14, %c0_15] : memref<1x512xf32, #tpu.memory_space<vmem>>, vector<1x512xf32>
    %19 = vector.broadcast %18 : vector<1x512xf32> to vector<16x512xf32>
    %20 = arith.addf %17, %19 : vector<16x512xf32>
    %cst_16 = arith.constant 0.000000e+00 : f32
    %21 = vector.broadcast %cst_16 : f32 to vector<16x512xf32>
    %22 = arith.maximumf %20, %21 : vector<16x512xf32>
    %23 = arith.truncf %22 : vector<16x512xf32> to vector<16x512xbf16>
    %c0_17 = arith.constant 0 : index
    %c0_18 = arith.constant 0 : index
    %24 = vector.load %arg8[%c0_17, %c0_18] : memref<512x256xbf16, #tpu.memory_space<vmem>>, vector<512x256xbf16>
    %cst_19 = arith.constant dense<0.000000e+00> : vector<16x256xf32>
    %25 = tpu.matmul %23, %24, %cst_19 {dimension_numbers = #tpu.dot_dimension_numbers<[1], [0], [0], [1], [0, 0, 1, 1], [], []>} : vector<16x512xbf16>, vector<512x256xbf16>, vector<16x256xf32> -> vector<16x256xf32>
    %c0_20 = arith.constant 0 : index
    %c0_21 = arith.constant 0 : index
    %26 = vector.load %arg9[%c0_20, %c0_21] : memref<1x256xf32, #tpu.memory_space<vmem>>, vector<1x256xf32>
    %27 = vector.broadcast %26 : vector<1x256xf32> to vector<16x256xf32>
    %28 = arith.addf %25, %27 : vector<16x256xf32>
    %cst_22 = arith.constant 0.000000e+00 : f32
    %29 = vector.broadcast %cst_22 : f32 to vector<16x256xf32>
    %30 = arith.maximumf %28, %29 : vector<16x256xf32>
    %31 = arith.truncf %30 : vector<16x256xf32> to vector<16x256xbf16>
    %c0_23 = arith.constant 0 : index
    %c0_24 = arith.constant 0 : index
    %32 = vector.load %arg10[%c0_23, %c0_24] : memref<256x64xbf16, #tpu.memory_space<vmem>>, vector<256x64xbf16>
    %cst_25 = arith.constant dense<0.000000e+00> : vector<16x64xf32>
    %33 = tpu.matmul %31, %32, %cst_25 {dimension_numbers = #tpu.dot_dimension_numbers<[1], [0], [0], [1], [0, 0, 1, 1], [], []>} : vector<16x256xbf16>, vector<256x64xbf16>, vector<16x64xf32> -> vector<16x64xf32>
    %c0_26 = arith.constant 0 : index
    %c0_27 = arith.constant 0 : index
    %34 = vector.load %arg11[%c0_26, %c0_27] : memref<1x64xf32, #tpu.memory_space<vmem>>, vector<1x64xf32>
    %35 = vector.broadcast %34 : vector<1x64xf32> to vector<16x64xf32>
    %36 = arith.addf %33, %35 : vector<16x64xf32>
    %37 = vector.extract_strided_slice %36 {offsets = [0, 0], sizes = [16, 32], strides = [1, 1]} : vector<16x64xf32> to vector<16x32xf32>
    %38 = vector.extract_strided_slice %36 {offsets = [0, 32], sizes = [16, 32], strides = [1, 1]} : vector<16x64xf32> to vector<16x32xf32>
    %cst_28 = arith.constant 5.000000e-01 : f32
    %39 = vector.broadcast %cst_28 : f32 to vector<16x32xf32>
    %40 = arith.mulf %39, %38 : vector<16x32xf32>
    %41 = math.exp %40 : vector<16x32xf32>
    %42 = arith.mulf %41, %6 : vector<16x32xf32>
    %43 = arith.addf %37, %42 : vector<16x32xf32>
    %cst_29 = arith.constant 0.000000e+00 : f32
    %44 = vector.broadcast %cst_29 : f32 to vector<16x32xf32>
    %45 = tpu.concatenate %36, %43, %44 in 1 : vector<16x64xf32>, vector<16x32xf32>, vector<16x32xf32> -> vector<16x128xf32>
    %c0_30 = arith.constant 0 : index
    %c0_31 = arith.constant 0 : index
    %46 = vector.load %arg12[%c0_30, %c0_31] : memref<16x128xf32, #tpu.memory_space<vmem>>, vector<16x128xf32>
    tpu.vector_store %arg12[%c0_30, %c0_31], %45 {strides = array<i32>} : memref<16x128xf32, #tpu.memory_space<vmem>>, vector<16x128xf32>,
    return
  }
  func.func @transform_0(%arg0: i32) -> (i32, i32) {
    %c0_i32 = arith.constant 0 : i32
    %c0_i32_0 = arith.constant 0 : i32
    return %arg0, %c0_i32 : i32, i32
  }
  func.func @transform_1(%arg0: i32) -> (i32, i32) {
    %c0_i32 = arith.constant 0 : i32
    %c0_i32_0 = arith.constant 0 : i32
    return %arg0, %c0_i32 : i32, i32
  }
  func.func @transform_2(%arg0: i32) -> (i32, i32) {
    %c0_i32 = arith.constant 0 : i32
    %c0_i32_0 = arith.constant 0 : i32
    %c0_i32_1 = arith.constant 0 : i32
    return %c0_i32, %c0_i32_0 : i32, i32
  }
  func.func @transform_3(%arg0: i32) -> (i32, i32) {
    %c0_i32 = arith.constant 0 : i32
    %c0_i32_0 = arith.constant 0 : i32
    %c0_i32_1 = arith.constant 0 : i32
    return %c0_i32, %c0_i32_0 : i32, i32
  }
  func.func @transform_4(%arg0: i32) -> (i32, i32) {
    %c0_i32 = arith.constant 0 : i32
    %c0_i32_0 = arith.constant 0 : i32
    %c0_i32_1 = arith.constant 0 : i32
    return %c0_i32, %c0_i32_0 : i32, i32
  }
  func.func @transform_5(%arg0: i32) -> (i32, i32) {
    %c0_i32 = arith.constant 0 : i32
    %c0_i32_0 = arith.constant 0 : i32
    %c0_i32_1 = arith.constant 0 : i32
    return %c0_i32, %c0_i32_0 : i32, i32
  }
  func.func @transform_6(%arg0: i32) -> (i32, i32) {
    %c0_i32 = arith.constant 0 : i32
    %c0_i32_0 = arith.constant 0 : i32
    %c0_i32_1 = arith.constant 0 : i32
    return %c0_i32, %c0_i32_0 : i32, i32
  }
  func.func @transform_7(%arg0: i32) -> (i32, i32) {
    %c0_i32 = arith.constant 0 : i32
    %c0_i32_0 = arith.constant 0 : i32
    %c0_i32_1 = arith.constant 0 : i32
    return %c0_i32, %c0_i32_0 : i32, i32
  }
  func.func @transform_8(%arg0: i32) -> (i32, i32) {
    %c0_i32 = arith.constant 0 : i32
    %c0_i32_0 = arith.constant 0 : i32
    %c0_i32_1 = arith.constant 0 : i32
    return %c0_i32, %c0_i32_0 : i32, i32
  }
  func.func @transform_9(%arg0: i32) -> (i32, i32) {
    %c0_i32 = arith.constant 0 : i32
    %c0_i32_0 = arith.constant 0 : i32
    %c0_i32_1 = arith.constant 0 : i32
    return %c0_i32, %c0_i32_0 : i32, i32
  }
  func.func @transform_10(%arg0: i32) -> (i32, i32) {
    %c0_i32 = arith.constant 0 : i32
    %c0_i32_0 = arith.constant 0 : i32
    %c0_i32_1 = arith.constant 0 : i32
    return %c0_i32, %c0_i32_0 : i32, i32
  }
  func.func @transform_11(%arg0: i32) -> (i32, i32) {
    %c0_i32 = arith.constant 0 : i32
    %c0_i32_0 = arith.constant 0 : i32
    return %arg0, %c0_i32 : i32, i32
  }
}

</mosaic_0001>

<llo_original>
// kernel: encoder_forward.1
$region0: #{encoder_forward.1}
  #allocation0 [shape = 'u32[]', space=smem, size = 0x4, offset = 0x4, fixed_abs, tag = 'smem constant byte address 0x4 - core index']
  #allocation1 [shape = 'u32[72,128]{1,0:T(1,128)}', space=vmem, size = 0x9000, scoped, tag = 'internal scratch']
  %s0 = inlined_call_operand.vmem [shape: bf16[16,512], index: 0, kind: input, shape index: {}]
  %s1 = inlined_call_operand.vmem [shape: f32[16,128], index: 1, kind: input, shape index: {}]
  %s2 = inlined_call_operand.hbm [shape: bf16[512,1024], index: 2, kind: input, shape index: {}]
  %s3 = inlined_call_operand.vmem [shape: bf16[2,1024], index: 3, kind: input, shape index: {}]
  %s4 = inlined_call_operand.vmem [shape: f32[1,1024], index: 4, kind: input, shape index: {}]
  %s5 = inlined_call_operand.hbm [shape: bf16[1024,512], index: 5, kind: input, shape index: {}]
  %s6 = inlined_call_operand.vmem [shape: f32[1,512], index: 6, kind: input, shape index: {}]
  %s7 = inlined_call_operand.hbm [shape: bf16[512,256], index: 7, kind: input, shape index: {}]
  %s8 = inlined_call_operand.vmem [shape: f32[1,256], index: 8, kind: input, shape index: {}]
  %s9 = inlined_call_operand.vmem [shape: bf16[256,64], index: 9, kind: input, shape index: {}]
  %s10 = inlined_call_operand.vmem [shape: f32[1,64], index: 10, kind: input, shape index: {}]
  %s11 = inlined_call_operand.vmem [shape: f32[16,128], index: 11, kind: output, shape index: {}]
  %s12 = sld [smem:[#allocation0]]
  $region66: #{encoder_forward.1} parent=0
    _
  %s14 = ssub.s32 1, %s12
  %s15 = scalar_select 0, %s14, %s12
  $region1: #{encoder_forward.1} parent=0
    #allocation2 [shape = 'u8[1048576]{0}', space=vmem, size = 0x100000, scoped, tag = 'input window, operand 2, single buffered']
    #allocation3 [shape = 's32[1]{0}', space=sflag, size = 0x4, scoped, tag = 'scoped memory for encoder_forward.1']
    #allocation4 [shape = 'u8[1048576]{0}', space=vmem, size = 0x100000, scoped, tag = 'input window, operand 5, single buffered']
    #allocation5 [shape = 's32[1]{0}', space=sflag, size = 0x4, scoped, tag = 'scoped memory for encoder_forward.1']
    #allocation6 [shape = 'u8[262144]{0}', space=vmem, size = 0x40000, scoped, tag = 'input window, operand 7, single buffered']
    %16 = vsyncpa [#allocation3], 0
    %17 = vsyncpa [#allocation5], 0
    // Predicated region
    $region2: #{encoder_forward.1} parent=1 // pred_check
      _
    $region3: #{encoder_forward.1} parent=1 // pred_check_branch
      %19 = sbr.rel (0) target = $region5
    $region4: #{encoder_forward.1} parent=1 // pred_region
      _
    $region5: #{encoder_forward.1} parent=1 // pred_fallthru
      _
    // Predicated region
    $region6: #{encoder_forward.1} parent=1 // pred_check
      _
    $region7: #{encoder_forward.1} parent=1 // pred_check_branch
      %21 = sbr.rel (0) target = $region9
    $region8: #{encoder_forward.1} parent=1 // pred_region
      _
    $region9: #{encoder_forward.1} parent=1 // pred_fallthru
      _
    // Predicated region
    $region10: #{encoder_forward.1} parent=1 // pred_check
      _
    $region11: #{encoder_forward.1} parent=1 // pred_check_branch
      %23 = sbr.rel (0) target = $region13
    $region12: #{encoder_forward.1} parent=1 // pred_region
      %25 = vsyncadd [#allocation3], 0
      %s26 = sshll.u32 %s2, 4
      %s27 = int_to_ptr.hbm [resolvable:$true] %s26
      %s28 = sshll.u32 [#allocation2], 4
      %s29 = int_to_ptr.vmem [resolvable:$true] %s28
      %34 = dma.hbm_to_vmem [thread:$0]  %s27, 32768, %s29, [#allocation3], 512, 512, 32
    $region13: #{encoder_forward.1} parent=1 // pred_fallthru
      _
    // Predicated region
    $region14: #{encoder_forward.1} parent=1 // pred_check
      _
    $region15: #{encoder_forward.1} parent=1 // pred_check_branch
      %36 = sbr.rel (0) target = $region17
    $region16: #{encoder_forward.1} parent=1 // pred_region
      _
    $region17: #{encoder_forward.1} parent=1 // pred_fallthru
      _
    // Predicated region
    $region18: #{encoder_forward.1} parent=1 // pred_check
      _
    $region19: #{encoder_forward.1} parent=1 // pred_check_branch
      %38 = sbr.rel (0) target = $region21
    $region20: #{encoder_forward.1} parent=1 // pred_region
      _
    $region21: #{encoder_forward.1} parent=1 // pred_fallthru
      _
    // Predicated region
    $region22: #{encoder_forward.1} parent=1 // pred_check
      _
    $region23: #{encoder_forward.1} parent=1 // pred_check_branch
      %40 = sbr.rel (0) target = $region25
    $region24: #{encoder_forward.1} parent=1 // pred_region
      %42 = vsyncadd [#allocation5], 0
      %s43 = sshll.u32 %s5, 4
      %s44 = int_to_ptr.hbm [resolvable:$true] %s43
      %s45 = sshll.u32 [#allocation4], 4
      %s46 = int_to_ptr.vmem [resolvable:$true] %s45
      %51 = dma.hbm_to_vmem [thread:$0]  %s44, 32768, %s46, [#allocation5], 256, 256, 16
    $region25: #{encoder_forward.1} parent=1 // pred_fallthru
      _
    // Predicated region
    $region26: #{encoder_forward.1} parent=1 // pred_check
      _
    $region27: #{encoder_forward.1} parent=1 // pred_check_branch
      %53 = sbr.rel (0) target = $region29
    $region28: #{encoder_forward.1} parent=1 // pred_region
      _
    $region29: #{encoder_forward.1} parent=1 // pred_fallthru
      _
    // Predicated region
    $region30: #{encoder_forward.1} parent=1 // pred_check
      _
    $region31: #{encoder_forward.1} parent=1 // pred_check_branch
      %55 = sbr.rel (0) target = $region33
    $region32: #{encoder_forward.1} parent=1 // pred_region
      %57 = vsyncadd [#allocation5], 0
      %s58 = sshll.u32 %s7, 4
      %s59 = int_to_ptr.hbm [resolvable:$true] %s58
      %s60 = sshll.u32 [#allocation6], 4
      %s61 = int_to_ptr.vmem [resolvable:$true] %s60
      %66 = dma.hbm_to_vmem [thread:$0]  %s59, 8192, %s61, [#allocation5], 128, 128, 8
    $region33: #{encoder_forward.1} parent=1 // pred_fallthru
      _
    // Predicated region
    $region34: #{encoder_forward.1} parent=1 // pred_check
      _
    $region35: #{encoder_forward.1} parent=1 // pred_check_branch
      %68 = sbr.rel (0) target = $region37
    $region36: #{encoder_forward.1} parent=1 // pred_region
      _
    $region37: #{encoder_forward.1} parent=1 // pred_fallthru
      _
    // Predicated region
    $region38: #{encoder_forward.1} parent=1 // pred_check
      _
    $region39: #{encoder_forward.1} parent=1 // pred_check_branch
      %70 = sbr.rel (0) target = $region41
    $region40: #{encoder_forward.1} parent=1 // pred_region
      _
    $region41: #{encoder_forward.1} parent=1 // pred_fallthru
      _
    // Predicated region
    $region42: #{encoder_forward.1} parent=1 // pred_check
      _
    $region43: #{encoder_forward.1} parent=1 // pred_check_branch
      %72 = sbr.rel (0) target = $region45
    $region44: #{encoder_forward.1} parent=1 // pred_region
      _
    $region45: #{encoder_forward.1} parent=1 // pred_fallthru
      _
    // Predicated region
    $region46: #{encoder_forward.1} parent=1 // pred_check
      _
    $region47: #{encoder_forward.1} parent=1 // pred_check_branch
      %74 = sbr.rel (0) target = $region49
    $region48: #{encoder_forward.1} parent=1 // pred_region
      %76 = dma.done [#allocation3], 32768
    $region49: #{encoder_forward.1} parent=1 // pred_fallthru
      _
    // Predicated region
    $region50: #{encoder_forward.1} parent=1 // pred_check
      _
    $region51: #{encoder_forward.1} parent=1 // pred_check_branch
      %78 = sbr.rel (0) target = $region53
    $region52: #{encoder_forward.1} parent=1 // pred_region
      %80 = dma.done [#allocation5], 32768
    $region53: #{encoder_forward.1} parent=1 // pred_fallthru
      _
    // Predicated region
    $region54: #{encoder_forward.1} parent=1 // pred_check
      _
    $region55: #{encoder_forward.1} parent=1 // pred_check_branch
      %82 = sbr.rel (0) target = $region57
    $region56: #{encoder_forward.1} parent=1 // pred_region
      %84 = dma.done [#allocation5], 8192
    $region57: #{encoder_forward.1} parent=1 // pred_fallthru
      _
    %v86 = vld [vmem:[%s0] sm:$0xff]
    %v87 = vld [vmem:[%s0 + $0x8] sm:$0xff]
    %v88 = vld [vmem:[%s0 + $0x10] sm:$0xff]
    %v89 = vld [vmem:[%s0 + $0x18] sm:$0xff]
    %v90 = vld [vmem:[#allocation2] sm:$0xff]
    %v91 = vld [vmem:[#allocation2 + $0x8] sm:$0xff]
    %v92 = vld [vmem:[#allocation2 + $0x10] sm:$0xff]
    %v93 = vld [vmem:[#allocation2 + $0x18] sm:$0xff]
    %v94 = vld [vmem:[#allocation2 + $0x20] sm:$0xff]
    %v95 = vld [vmem:[#allocation2 + $0x28] sm:$0xff]
    %v96 = vld [vmem:[#allocation2 + $0x30] sm:$0xff]
    %v97 = vld [vmem:[#allocation2 + $0x38] sm:$0xff]
    %v98 = vld [vmem:[#allocation2 + $0x40] sm:$0xff]
    %v99 = vld [vmem:[#allocation2 + $0x48] sm:$0xff]
    %v100 = vld [vmem:[#allocation2 + $0x50] sm:$0xff]
    %v101 = vld [vmem:[#allocation2 + $0x58] sm:$0xff]
    %v102 = vld [vmem:[#allocation2 + $0x60] sm:$0xff]
    %v103 = vld [vmem:[#allocation2 + $0x68] sm:$0xff]
    %v104 = vld [vmem:[#allocation2 + $0x70] sm:$0xff]
    %v105 = vld [vmem:[#allocation2 + $0x78] sm:$0xff]
    %v106 = vld [vmem:[#allocation2 + $0x80] sm:$0xff]
    %v107 = vld [vmem:[#allocation2 + $0x88] sm:$0xff]
    %v108 = vld [vmem:[#allocation2 + $0x90] sm:$0xff]
    %v109 = vld [vmem:[#allocation2 + $0x98] sm:$0xff]
    %v110 = vld [vmem:[#allocation2 + $0xa0] sm:$0xff]
    %v111 = vld [vmem:[#allocation2 + $0xa8] sm:$0xff]
    %v112 = vld [vmem:[#allocation2 + $0xb0] sm:$0xff]
    %v113 = vld [vmem:[#allocation2 + $0xb8] sm:$0xff]
    %v114 = vld [vmem:[#allocation2 + $0xc0] sm:$0xff]
    %v115 = vld [vmem:[#allocation2 + $0xc8] sm:$0xff]
    %v116 = vld [vmem:[#allocation2 + $0xd0] sm:$0xff]
    %v117 = vld [vmem:[#allocation2 + $0xd8] sm:$0xff]
    %v118 = vld [vmem:[#allocation2 + $0xe0] sm:$0xff]
    %v119 = vld [vmem:[#allocation2 + $0xe8] sm:$0xff]
    %v120 = vld [vmem:[#allocation2 + $0xf0] sm:$0xff]
    %v121 = vld [vmem:[#allocation2 + $0xf8] sm:$0xff]
    %v122 = vld [vmem:[#allocation2 + $0x100] sm:$0xff]
    %v123 = vld [vmem:[#allocation2 + $0x108] sm:$0xff]
    %v124 = vld [vmem:[#allocation2 + $0x110] sm:$0xff]
    %v125 = vld [vmem:[#allocation2 + $0x118] sm:$0xff]
    %v126 = vld [vmem:[#allocation2 + $0x120] sm:$0xff]
    %v127 = vld [vmem:[#allocation2 + $0x128] sm:$0xff]
    %v128 = vld [vmem:[#allocation2 + $0x130] sm:$0xff]
    %v129 = vld [vmem:[#allocation2 + $0x138] sm:$0xff]
    %v130 = vld [vmem:[#allocation2 + $0x140] sm:$0xff]
    %v131 = vld [vmem:[#allocation2 + $0x148] sm:$0xff]
    %v132 = vld [vmem:[#allocation2 + $0x150] sm:$0xff]
    %v133 = vld [vmem:[#allocation2 + $0x158] sm:$0xff]
    %v134 = vld [vmem:[#allocation2 + $0x160] sm:$0xff]
    %v135 = vld [vmem:[#allocation2 + $0x168] sm:$0xff]
    %v136 = vld [vmem:[#allocation2 + $0x170] sm:$0xff]
    %v137 = vld [vmem:[#allocation2 + $0x178] sm:$0xff]
    %v138 = vld [vmem:[#allocation2 + $0x180] sm:$0xff]
    %v139 = vld [vmem:[#allocation2 + $0x188] sm:$0xff]
    %v140 = vld [vmem:[#allocation2 + $0x190] sm:$0xff]
    %v141 = vld [vmem:[#allocation2 + $0x198] sm:$0xff]
    %v142 = vld [vmem:[#allocation2 + $0x1a0] sm:$0xff]
    %v143 = vld [vmem:[#allocation2 + $0x1a8] sm:$0xff]
    %v144 = vld [vmem:[#allocation2 + $0x1b0] sm:$0xff]
    %v145 = vld [vmem:[#allocation2 + $0x1b8] sm:$0xff]
    %v146 = vld [vmem:[#allocation2 + $0x1c0] sm:$0xff]
    %v147 = vld [vmem:[#allocation2 + $0x1c8] sm:$0xff]
    %v148 = vld [vmem:[#allocation2 + $0x1d0] sm:$0xff]
    %v149 = vld [vmem:[#allocation2 + $0x1d8] sm:$0xff]
    %v150 = vld [vmem:[#allocation2 + $0x1e0] sm:$0xff]
    %v151 = vld [vmem:[#allocation2 + $0x1e8] sm:$0xff]
    %v152 = vld [vmem:[#allocation2 + $0x1f0] sm:$0xff]
    %v153 = vld [vmem:[#allocation2 + $0x1f8] sm:$0xff]
    %v154 = vld [vmem:[#allocation2 + $0x200] sm:$0xff]
    %v155 = vld [vmem:[#allocation2 + $0x208] sm:$0xff]
    %v156 = vld [vmem:[#allocation2 + $0x210] sm:$0xff]
    %v157 = vld [vmem:[#allocation2 + $0x218] sm:$0xff]
    %v158 = vld [vmem:[#allocation2 + $0x220] sm:$0xff]
    %v159 = vld [vmem:[#allocation2 + $0x228] sm:$0xff]
    %v160 = vld [vmem:[#allocation2 + $0x230] sm:$0xff]
    %v161 = vld [vmem:[#allocation2 + $0x238] sm:$0xff]
    %v162 = vld [vmem:[#allocation2 + $0x240] sm:$0xff]
    %v163 = vld [vmem:[#allocation2 + $0x248] sm:$0xff]
    %v164 = vld [vmem:[#allocation2 + $0x250] sm:$0xff]
    %v165 = vld [vmem:[#allocation2 + $0x258] sm:$0xff]
    %v166 = vld [vmem:[#allocation2 + $0x260] sm:$0xff]
    %v167 = vld [vmem:[#allocation2 + $0x268] sm:$0xff]
    %v168 = vld [vmem:[#allocation2 + $0x270] sm:$0xff]
    %v169 = vld [vmem:[#allocation2 + $0x278] sm:$0xff]
    %v170 = vld [vmem:[#allocation2 + $0x280] sm:$0xff]
    %v171 = vld [vmem:[#allocation2 + $0x288] sm:$0xff]
    %v172 = vld [vmem:[#allocation2 + $0x290] sm:$0xff]
    %v173 = vld [vmem:[#allocation2 + $0x298] sm:$0xff]
    %v174 = vld [vmem:[#allocation2 + $0x2a0] sm:$0xff]
    %v175 = vld [vmem:[#allocation2 + $0x2a8] sm:$0xff]
    %v176 = vld [vmem:[#allocation2 + $0x2b0] sm:$0xff]
    %v177 = vld [vmem:[#allocation2 + $0x2b8] sm:$0xff]
    %v178 = vld [vmem:[#allocation2 + $0x2c0] sm:$0xff]
    %v179 = vld [vmem:[#allocation2 + $0x2c8] sm:$0xff]
    %v180 = vld [vmem:[#allocation2 + $0x2d0] sm:$0xff]
    %v181 = vld [vmem:[#allocation2 + $0x2d8] sm:$0xff]
    %v182 = vld [vmem:[#allocation2 + $0x2e0] sm:$0xff]
    %v183 = vld [vmem:[#allocation2 + $0x2e8] sm:$0xff]
    %v184 = vld [vmem:[#allocation2 + $0x2f0] sm:$0xff]
    %v185 = vld [vmem:[#allocation2 + $0x2f8] sm:$0xff]
    %v186 = vld [vmem:[#allocation2 + $0x300] sm:$0xff]
    %v187 = vld [vmem:[#allocation2 + $0x308] sm:$0xff]
    %v188 = vld [vmem:[#allocation2 + $0x310] sm:$0xff]
    %v189 = vld [vmem:[#allocation2 + $0x318] sm:$0xff]
    %v190 = vld [vmem:[#allocation2 + $0x320] sm:$0xff]
    %v191 = vld [vmem:[#allocation2 + $0x328] sm:$0xff]
    %v192 = vld [vmem:[#allocation2 + $0x330] sm:$0xff]
    %v193 = vld [vmem:[#allocation2 + $0x338] sm:$0xff]
    %v194 = vld [vmem:[#allocation2 + $0x340] sm:$0xff]
    %v195 = vld [vmem:[#allocation2 + $0x348] sm:$0xff]
    %v196 = vld [vmem:[#allocation2 + $0x350] sm:$0xff]
    %v197 = vld [vmem:[#allocation2 + $0x358] sm:$0xff]
    %v198 = vld [vmem:[#allocation2 + $0x360] sm:$0xff]
    %v199 = vld [vmem:[#allocation2 + $0x368] sm:$0xff]
    %v200 = vld [vmem:[#allocation2 + $0x370] sm:$0xff]
    %v201 = vld [vmem:[#allocation2 + $0x378] sm:$0xff]
    %v202 = vld [vmem:[#allocation2 + $0x380] sm:$0xff]
    %v203 = vld [vmem:[#allocation2 + $0x388] sm:$0xff]
    %v204 = vld [vmem:[#allocation2 + $0x390] sm:$0xff]
    %v205 = vld [vmem:[#allocation2 + $0x398] sm:$0xff]
    %v206 = vld [vmem:[#allocation2 + $0x3a0] sm:$0xff]
    %v207 = vld [vmem:[#allocation2 + $0x3a8] sm:$0xff]
    %v208 = vld [vmem:[#allocation2 + $0x3b0] sm:$0xff]
    %v209 = vld [vmem:[#allocation2 + $0x3b8] sm:$0xff]
    %v210 = vld [vmem:[#allocation2 + $0x3c0] sm:$0xff]
    %v211 = vld [vmem:[#allocation2 + $0x3c8] sm:$0xff]
    %v212 = vld [vmem:[#allocation2 + $0x3d0] sm:$0xff]
    %v213 = vld [vmem:[#allocation2 + $0x3d8] sm:$0xff]
    %v214 = vld [vmem:[#allocation2 + $0x3e0] sm:$0xff]
    %v215 = vld [vmem:[#allocation2 + $0x3e8] sm:$0xff]
    %v216 = vld [vmem:[#allocation2 + $0x3f0] sm:$0xff]
    %v217 = vld [vmem:[#allocation2 + $0x3f8] sm:$0xff]
    %v218 = vld [vmem:[#allocation2 + $0x400] sm:$0xff]
    %v219 = vld [vmem:[#allocation2 + $0x408] sm:$0xff]
    %v220 = vld [vmem:[#allocation2 + $0x410] sm:$0xff]
    %v221 = vld [vmem:[#allocation2 + $0x418] sm:$0xff]
    %v222 = vld [vmem:[#allocation2 + $0x420] sm:$0xff]
    %v223 = vld [vmem:[#allocation2 + $0x428] sm:$0xff]
    %v224 = vld [vmem:[#allocation2 + $0x430] sm:$0xff]
    %v225 = vld [vmem:[#allocation2 + $0x438] sm:$0xff]
    %v226 = vld [vmem:[#allocation2 + $0x440] sm:$0xff]
    %v227 = vld [vmem:[#allocation2 + $0x448] sm:$0xff]
    %v228 = vld [vmem:[#allocation2 + $0x450] sm:$0xff]
    %v229 = vld [vmem:[#allocation2 + $0x458] sm:$0xff]
    %v230 = vld [vmem:[#allocation2 + $0x460] sm:$0xff]
    %v231 = vld [vmem:[#allocation2 + $0x468] sm:$0xff]
    %v232 = vld [vmem:[#allocation2 + $0x470] sm:$0xff]
    %v233 = vld [vmem:[#allocation2 + $0x478] sm:$0xff]
    %v234 = vld [vmem:[#allocation2 + $0x480] sm:$0xff]
    %v235 = vld [vmem:[#allocation2 + $0x488] sm:$0xff]
    %v236 = vld [vmem:[#allocation2 + $0x490] sm:$0xff]
    %v237 = vld [vmem:[#allocation2 + $0x498] sm:$0xff]
    %v238 = vld [vmem:[#allocation2 + $0x4a0] sm:$0xff]
    %v239 = vld [vmem:[#allocation2 + $0x4a8] sm:$0xff]
    %v240 = vld [vmem:[#allocation2 + $0x4b0] sm:$0xff]
    %v241 = vld [vmem:[#allocation2 + $0x4b8] sm:$0xff]
    %v242 = vld [vmem:[#allocation2 + $0x4c0] sm:$0xff]
    %v243 = vld [vmem:[#allocation2 + $0x4c8] sm:$0xff]
    %v244 = vld [vmem:[#allocation2 + $0x4d0] sm:$0xff]
    %v245 = vld [vmem:[#allocation2 + $0x4d8] sm:$0xff]
    %v246 = vld [vmem:[#allocation2 + $0x4e0] sm:$0xff]
    %v247 = vld [vmem:[#allocation2 + $0x4e8] sm:$0xff]
    %v248 = vld [vmem:[#allocation2 + $0x4f0] sm:$0xff]
    %v249 = vld [vmem:[#allocation2 + $0x4f8] sm:$0xff]
    %v250 = vld [vmem:[#allocation2 + $0x500] sm:$0xff]
    %v251 = vld [vmem:[#allocation2 + $0x508] sm:$0xff]
    %v252 = vld [vmem:[#allocation2 + $0x510] sm:$0xff]
    %v253 = vld [vmem:[#allocation2 + $0x518] sm:$0xff]
    %v254 = vld [vmem:[#allocation2 + $0x520] sm:$0xff]
    %v255 = vld [vmem:[#allocation2 + $0x528] sm:$0xff]
    %v256 = vld [vmem:[#allocation2 + $0x530] sm:$0xff]
    %v257 = vld [vmem:[#allocation2 + $0x538] sm:$0xff]
    %v258 = vld [vmem:[#allocation2 + $0x540] sm:$0xff]
    %v259 = vld [vmem:[#allocation2 + $0x548] sm:$0xff]
    %v260 = vld [vmem:[#allocation2 + $0x550] sm:$0xff]
    %v261 = vld [vmem:[#allocation2 + $0x558] sm:$0xff]
    %v262 = vld [vmem:[#allocation2 + $0x560] sm:$0xff]
    %v263 = vld [vmem:[#allocation2 + $0x568] sm:$0xff]
    %v264 = vld [vmem:[#allocation2 + $0x570] sm:$0xff]
    %v265 = vld [vmem:[#allocation2 + $0x578] sm:$0xff]
    %v266 = vld [vmem:[#allocation2 + $0x580] sm:$0xff]
    %v267 = vld [vmem:[#allocation2 + $0x588] sm:$0xff]
    %v268 = vld [vmem:[#allocation2 + $0x590] sm:$0xff]
    %v269 = vld [vmem:[#allocation2 + $0x598] sm:$0xff]
    %v270 = vld [vmem:[#allocation2 + $0x5a0] sm:$0xff]
    %v271 = vld [vmem:[#allocation2 + $0x5a8] sm:$0xff]
    %v272 = vld [vmem:[#allocation2 + $0x5b0] sm:$0xff]
    %v273 = vld [vmem:[#allocation2 + $0x5b8] sm:$0xff]
    %v274 = vld [vmem:[#allocation2 + $0x5c0] sm:$0xff]
    %v275 = vld [vmem:[#allocation2 + $0x5c8] sm:$0xff]
    %v276 = vld [vmem:[#allocation2 + $0x5d0] sm:$0xff]
    %v277 = vld [vmem:[#allocation2 + $0x5d8] sm:$0xff]
    %v278 = vld [vmem:[#allocation2 + $0x5e0] sm:$0xff]
    %v279 = vld [vmem:[#allocation2 + $0x5e8] sm:$0xff]
    %v280 = vld [vmem:[#allocation2 + $0x5f0] sm:$0xff]
    %v281 = vld [vmem:[#allocation2 + $0x5f8] sm:$0xff]
    %v282 = vld [vmem:[#allocation2 + $0x600] sm:$0xff]
    %v283 = vld [vmem:[#allocation2 + $0x608] sm:$0xff]
    %v284 = vld [vmem:[#allocation2 + $0x610] sm:$0xff]
    %v285 = vld [vmem:[#allocation2 + $0x618] sm:$0xff]
    %v286 = vld [vmem:[#allocation2 + $0x620] sm:$0xff]
    %v287 = vld [vmem:[#allocation2 + $0x628] sm:$0xff]
    %v288 = vld [vmem:[#allocation2 + $0x630] sm:$0xff]
    %v289 = vld [vmem:[#allocation2 + $0x638] sm:$0xff]
    %v290 = vld [vmem:[#allocation2 + $0x640] sm:$0xff]
    %v291 = vld [vmem:[#allocation2 + $0x648] sm:$0xff]
    %v292 = vld [vmem:[#allocation2 + $0x650] sm:$0xff]
    %v293 = vld [vmem:[#allocation2 + $0x658] sm:$0xff]
    %v294 = vld [vmem:[#allocation2 + $0x660] sm:$0xff]
    %v295 = vld [vmem:[#allocation2 + $0x668] sm:$0xff]
    %v296 = vld [vmem:[#allocation2 + $0x670] sm:$0xff]
    %v297 = vld [vmem:[#allocation2 + $0x678] sm:$0xff]
    %v298 = vld [vmem:[#allocation2 + $0x680] sm:$0xff]
    %v299 = vld [vmem:[#allocation2 + $0x688] sm:$0xff]
    %v300 = vld [vmem:[#allocation2 + $0x690] sm:$0xff]
    %v301 = vld [vmem:[#allocation2 + $0x698] sm:$0xff]
    %v302 = vld [vmem:[#allocation2 + $0x6a0] sm:$0xff]
    %v303 = vld [vmem:[#allocation2 + $0x6a8] sm:$0xff]
    %v304 = vld [vmem:[#allocation2 + $0x6b0] sm:$0xff]
    %v305 = vld [vmem:[#allocation2 + $0x6b8] sm:$0xff]
    %v306 = vld [vmem:[#allocation2 + $0x6c0] sm:$0xff]
    %v307 = vld [vmem:[#allocation2 + $0x6c8] sm:$0xff]
    %v308 = vld [vmem:[#allocation2 + $0x6d0] sm:$0xff]
    %v309 = vld [vmem:[#allocation2 + $0x6d8] sm:$0xff]
    %v310 = vld [vmem:[#allocation2 + $0x6e0] sm:$0xff]
    %v311 = vld [vmem:[#allocation2 + $0x6e8] sm:$0xff]
    %v312 = vld [vmem:[#allocation2 + $0x6f0] sm:$0xff]
    %v313 = vld [vmem:[#allocation2 + $0x6f8] sm:$0xff]
    %v314 = vld [vmem:[#allocation2 + $0x700] sm:$0xff]
    %v315 = vld [vmem:[#allocation2 + $0x708] sm:$0xff]
    %v316 = vld [vmem:[#allocation2 + $0x710] sm:$0xff]
    %v317 = vld [vmem:[#allocation2 + $0x718] sm:$0xff]
    %v318 = vld [vmem:[#allocation2 + $0x720] sm:$0xff]
    %v319 = vld [vmem:[#allocation2 + $0x728] sm:$0xff]
    %v320 = vld [vmem:[#allocation2 + $0x730] sm:$0xff]
    %v321 = vld [vmem:[#allocation2 + $0x738] sm:$0xff]
    %v322 = vld [vmem:[#allocation2 + $0x740] sm:$0xff]
    %v323 = vld [vmem:[#allocation2 + $0x748] sm:$0xff]
    %v324 = vld [vmem:[#allocation2 + $0x750] sm:$0xff]
    %v325 = vld [vmem:[#allocation2 + $0x758] sm:$0xff]
    %v326 = vld [vmem:[#allocation2 + $0x760] sm:$0xff]
    %v327 = vld [vmem:[#allocation2 + $0x768] sm:$0xff]
    %v328 = vld [vmem:[#allocation2 + $0x770] sm:$0xff]
    %v329 = vld [vmem:[#allocation2 + $0x778] sm:$0xff]
    %v330 = vld [vmem:[#allocation2 + $0x780] sm:$0xff]
    %v331 = vld [vmem:[#allocation2 + $0x788] sm:$0xff]
    %v332 = vld [vmem:[#allocation2 + $0x790] sm:$0xff]
    %v333 = vld [vmem:[#allocation2 + $0x798] sm:$0xff]
    %v334 = vld [vmem:[#allocation2 + $0x7a0] sm:$0xff]
    %v335 = vld [vmem:[#allocation2 + $0x7a8] sm:$0xff]
    %v336 = vld [vmem:[#allocation2 + $0x7b0] sm:$0xff]
    %v337 = vld [vmem:[#allocation2 + $0x7b8] sm:$0xff]
    %v338 = vld [vmem:[#allocation2 + $0x7c0] sm:$0xff]
    %v339 = vld [vmem:[#allocation2 + $0x7c8] sm:$0xff]
    %v340 = vld [vmem:[#allocation2 + $0x7d0] sm:$0xff]
    %v341 = vld [vmem:[#allocation2 + $0x7d8] sm:$0xff]
    %v342 = vld [vmem:[#allocation2 + $0x7e0] sm:$0xff]
    %v343 = vld [vmem:[#allocation2 + $0x7e8] sm:$0xff]
    %v344 = vld [vmem:[#allocation2 + $0x7f0] sm:$0xff]
    %v345 = vld [vmem:[#allocation2 + $0x7f8] sm:$0xff]
    %v346 = vld [vmem:[%s1] sm:$0xff]
    %v347 = vld [vmem:[%s1 + $0x8] sm:$0xff]
    %v348 = vpack.c.bf16 %v347, %v346
    %v349 = vld [vmem:[%s3] sm:$0xff]
    %351 = vst [vmem:[#allocation1] ss:$9 sm:$0xff] %v349
    %v352 = vld [vmem:[#allocation1] sm:$0xff]
    %v353 = vld [vmem:[#allocation1 + $0x9] sm:$0xff]
    %v354 = vld [vmem:[#allocation1 + $0x12] sm:$0xff]
    %v355 = vld [vmem:[#allocation1 + $0x1b] sm:$0xff]
    %v356 = vld [vmem:[#allocation1 + $0x24] sm:$0xff]
    %v357 = vld [vmem:[#allocation1 + $0x2d] sm:$0xff]
    %v358 = vld [vmem:[#allocation1 + $0x36] sm:$0xff]
    %v359 = vld [vmem:[#allocation1 + $0x3f] sm:$0xff]
    %vm360 = vcmask 15360
    %v362 = vsel %vm360, %v348, 0
    %vm364 = vcmask 1040384
    %v365 = vsel %vm364, %v352, 0
    %v367 = vsel %vm364, %v353, 0
    %v369 = vsel %vm364, %v354, 0
    %v371 = vsel %vm364, %v355, 0
    %v373 = vsel %vm364, %v356, 0
    %v375 = vsel %vm364, %v357, 0
    %v377 = vsel %vm364, %v358, 0
    %v379 = vsel %vm364, %v359, 0
    %381 = vmatpush.bf16.msra.mxu0 0
    %382 = vmatpush.bf16.msra.mxu0 0
    %383 = vmatpush.bf16.msra.mxu0 0
    %384 = vmatpush.bf16.msra.mxu0 0
    %385 = vmatpush.bf16.msra.mxu0 0
    %386 = vmatpush.bf16.msra.mxu0 0
    %387 = vmatpush.bf16.msra.mxu0 0
    %388 = vmatpush.bf16.msra.mxu0 %v365
    %389 = vmatmul.bf16.gmra.mxu0 %v362
    %v390 = vpop.f32.mrf.mxu0
    %v391 = vadd.f32 0.0, %v390
    %v392 = vpop.f32.mrf.mxu0
    %v393 = vadd.f32 0.0, %v392
    %394 = vdwg.mxu0
    %395 = vmatpush.bf16.msra.mxu0 0
    %396 = vmatpush.bf16.msra.mxu0 0
    %397 = vmatpush.bf16.msra.mxu0 0
    %398 = vmatpush.bf16.msra.mxu0 0
    %399 = vmatpush.bf16.msra.mxu0 0
    %400 = vmatpush.bf16.msra.mxu0 0
    %401 = vmatpush.bf16.msra.mxu0 0
    %402 = vmatpush.bf16.msra.mxu0 %v367
    %403 = vmatmul.bf16.gmra.mxu0 %v362
    %v404 = vpop.f32.mrf.mxu0
    %v405 = vadd.f32 0.0, %v404
    %v406 = vpop.f32.mrf.mxu0
    %v407 = vadd.f32 0.0, %v406
    %408 = vdwg.mxu0
    %409 = vmatpush.bf16.msra.mxu0 0
    %410 = vmatpush.bf16.msra.mxu0 0
    %411 = vmatpush.bf16.msra.mxu0 0
    %412 = vmatpush.bf16.msra.mxu0 0
    %413 = vmatpush.bf16.msra.mxu0 0
    %414 = vmatpush.bf16.msra.mxu0 0
    %415 = vmatpush.bf16.msra.mxu0 0
    %416 = vmatpush.bf16.msra.mxu0 %v369
    %417 = vmatmul.bf16.gmra.mxu0 %v362
    %v418 = vpop.f32.mrf.mxu0
    %v419 = vadd.f32 0.0, %v418
    %v420 = vpop.f32.mrf.mxu0
    %v421 = vadd.f32 0.0, %v420
    %422 = vdwg.mxu0
    %423 = vmatpush.bf16.msra.mxu0 0
    %424 = vmatpush.bf16.msra.mxu0 0
    %425 = vmatpush.bf16.msra.mxu0 0
    %426 = vmatpush.bf16.msra.mxu0 0
    %427 = vmatpush.bf16.msra.mxu0 0
    %428 = vmatpush.bf16.msra.mxu0 0
    %429 = vmatpush.bf16.msra.mxu0 0
    %430 = vmatpush.bf16.msra.mxu0 %v371
    %431 = vmatmul.bf16.gmra.mxu0 %v362
    %v432 = vpop.f32.mrf.mxu0
    %v433 = vadd.f32 0.0, %v432
    %v434 = vpop.f32.mrf.mxu0
    %v435 = vadd.f32 0.0, %v434
    %436 = vdwg.mxu0
    %437 = vmatpush.bf16.msra.mxu0 0
    %438 = vmatpush.bf16.msra.mxu0 0
    %439 = vmatpush.bf16.msra.mxu0 0
    %440 = vmatpush.bf16.msra.mxu0 0
    %441 = vmatpush.bf16.msra.mxu0 0
    %442 = vmatpush.bf16.msra.mxu0 0
    %443 = vmatpush.bf16.msra.mxu0 0
    %444 = vmatpush.bf16.msra.mxu0 %v373
    %445 = vmatmul.bf16.gmra.mxu0 %v362
    %v446 = vpop.f32.mrf.mxu0
    %v447 = vadd.f32 0.0, %v446
    %v448 = vpop.f32.mrf.mxu0
    %v449 = vadd.f32 0.0, %v448
    %450 = vdwg.mxu0
    %451 = vmatpush.bf16.msra.mxu0 0
    %452 = vmatpush.bf16.msra.mxu0 0
    %453 = vmatpush.bf16.msra.mxu0 0
    %454 = vmatpush.bf16.msra.mxu0 0
    %455 = vmatpush.bf16.msra.mxu0 0
    %456 = vmatpush.bf16.msra.mxu0 0
    %457 = vmatpush.bf16.msra.mxu0 0
    %458 = vmatpush.bf16.msra.mxu0 %v375
    %459 = vmatmul.bf16.gmra.mxu0 %v362
    %v460 = vpop.f32.mrf.mxu0
    %v461 = vadd.f32 0.0, %v460
    %v462 = vpop.f32.mrf.mxu0
    %v463 = vadd.f32 0.0, %v462
    %464 = vdwg.mxu0
    %465 = vmatpush.bf16.msra.mxu0 0
    %466 = vmatpush.bf16.msra.mxu0 0
    %467 = vmatpush.bf16.msra.mxu0 0
    %468 = vmatpush.bf16.msra.mxu0 0
    %469 = vmatpush.bf16.msra.mxu0 0
    %470 = vmatpush.bf16.msra.mxu0 0
    %471 = vmatpush.bf16.msra.mxu0 0
    %472 = vmatpush.bf16.msra.mxu0 %v377
    %473 = vmatmul.bf16.gmra.mxu0 %v362
    %v474 = vpop.f32.mrf.mxu0
    %v475 = vadd.f32 0.0, %v474
    %v476 = vpop.f32.mrf.mxu0
    %v477 = vadd.f32 0.0, %v476
    %478 = vdwg.mxu0
    %479 = vmatpush.bf16.msra.mxu0 0
    %480 = vmatpush.bf16.msra.mxu0 0
    %481 = vmatpush.bf16.msra.mxu0 0
    %482 = vmatpush.bf16.msra.mxu0 0
    %483 = vmatpush.bf16.msra.mxu0 0
    %484 = vmatpush.bf16.msra.mxu0 0
    %485 = vmatpush.bf16.msra.mxu0 0
    %486 = vmatpush.bf16.msra.mxu0 %v379
    %487 = vmatmul.bf16.gmra.mxu0 %v362
    %v488 = vpop.f32.mrf.mxu0
    %v489 = vadd.f32 0.0, %v488
    %v490 = vpop.f32.mrf.mxu0
    %v491 = vadd.f32 0.0, %v490
    %492 = vdwg.mxu0
    %v497 = vunpack.c.l.b16 %v86
    %v498 = vunpack.c.h.b16 %v86
    %v499 = vunpack.c.l.b16 %v87
    %v500 = vunpack.c.h.b16 %v87
    %v501 = vunpack.c.l.b16 %v88
    %v502 = vunpack.c.h.b16 %v88
    %v503 = vunpack.c.l.b16 %v89
    %v504 = vunpack.c.h.b16 %v89
    %v505 = vpack.c.b16 %v501, %v497
    %v506 = vpack.c.b16 %v502, %v498
    %v507 = vpack.c.b16 %v503, %v499
    %v508 = vpack.c.b16 %v504, %v500
    %v769 = vunpack.c.l.b16 %v90
    %v770 = vunpack.c.h.b16 %v90
    %v771 = vunpack.c.l.b16 %v91
    %v772 = vunpack.c.h.b16 %v91
    %v773 = vunpack.c.l.b16 %v92
    %v774 = vunpack.c.h.b16 %v92
    %v775 = vunpack.c.l.b16 %v93
    %v776 = vunpack.c.h.b16 %v93
    %v777 = vunpack.c.l.b16 %v94
    %v778 = vunpack.c.h.b16 %v94
    %v779 = vunpack.c.l.b16 %v95
    %v780 = vunpack.c.h.b16 %v95
    %v781 = vunpack.c.l.b16 %v96
    %v782 = vunpack.c.h.b16 %v96
    %v783 = vunpack.c.l.b16 %v97
    %v784 = vunpack.c.h.b16 %v97
    %v785 = vunpack.c.l.b16 %v98
    %v786 = vunpack.c.h.b16 %v98
    %v787 = vunpack.c.l.b16 %v99
    %v788 = vunpack.c.h.b16 %v99
    %v789 = vunpack.c.l.b16 %v100
    %v790 = vunpack.c.h.b16 %v100
    %v791 = vunpack.c.l.b16 %v101
    %v792 = vunpack.c.h.b16 %v101
    %v793 = vunpack.c.l.b16 %v102
    %v794 = vunpack.c.h.b16 %v102
    %v795 = vunpack.c.l.b16 %v103
    %v796 = vunpack.c.h.b16 %v103
    %v797 = vunpack.c.l.b16 %v104
    %v798 = vunpack.c.h.b16 %v104
    %v799 = vunpack.c.l.b16 %v105
    %v800 = vunpack.c.h.b16 %v105
    %v801 = vunpack.c.l.b16 %v106
    %v802 = vunpack.c.h.b16 %v106
    %v803 = vunpack.c.l.b16 %v107
    %v804 = vunpack.c.h.b16 %v107
    %v805 = vunpack.c.l.b16 %v108
    %v806 = vunpack.c.h.b16 %v108
    %v807 = vunpack.c.l.b16 %v109
    %v808 = vunpack.c.h.b16 %v109
    %v809 = vunpack.c.l.b16 %v110
    %v810 = vunpack.c.h.b16 %v110
    %v811 = vunpack.c.l.b16 %v111
    %v812 = vunpack.c.h.b16 %v111
    %v813 = vunpack.c.l.b16 %v112
    %v814 = vunpack.c.h.b16 %v112
    %v815 = vunpack.c.l.b16 %v113
    %v816 = vunpack.c.h.b16 %v113
    %v817 = vunpack.c.l.b16 %v114
    %v818 = vunpack.c.h.b16 %v114
    %v819 = vunpack.c.l.b16 %v115
    %v820 = vunpack.c.h.b16 %v115
    %v821 = vunpack.c.l.b16 %v116
    %v822 = vunpack.c.h.b16 %v116
    %v823 = vunpack.c.l.b16 %v117
    %v824 = vunpack.c.h.b16 %v117
    %v825 = vunpack.c.l.b16 %v118
    %v826 = vunpack.c.h.b16 %v118
    %v827 = vunpack.c.l.b16 %v119
    %v828 = vunpack.c.h.b16 %v119
    %v829 = vunpack.c.l.b16 %v120
    %v830 = vunpack.c.h.b16 %v120
    %v831 = vunpack.c.l.b16 %v121
    %v832 = vunpack.c.h.b16 %v121
    %v833 = vunpack.c.l.b16 %v122
    %v834 = vunpack.c.h.b16 %v122
    %v835 = vunpack.c.l.b16 %v123
    %v836 = vunpack.c.h.b16 %v123
    %v837 = vunpack.c.l.b16 %v124
    %v838 = vunpack.c.h.b16 %v124
    %v839 = vunpack.c.l.b16 %v125
    %v840 = vunpack.c.h.b16 %v125
    %v841 = vunpack.c.l.b16 %v126
    %v842 = vunpack.c.h.b16 %v126
    %v843 = vunpack.c.l.b16 %v127
    %v844 = vunpack.c.h.b16 %v127
    %v845 = vunpack.c.l.b16 %v128
    %v846 = vunpack.c.h.b16 %v128
    %v847 = vunpack.c.l.b16 %v129
    %v848 = vunpack.c.h.b16 %v129
    %v849 = vunpack.c.l.b16 %v130
    %v850 = vunpack.c.h.b16 %v130
    %v851 = vunpack.c.l.b16 %v131
    %v852 = vunpack.c.h.b16 %v131
    %v853 = vunpack.c.l.b16 %v132
    %v854 = vunpack.c.h.b16 %v132
    %v855 = vunpack.c.l.b16 %v133
    %v856 = vunpack.c.h.b16 %v133
    %v857 = vunpack.c.l.b16 %v134
    %v858 = vunpack.c.h.b16 %v134
    %v859 = vunpack.c.l.b16 %v135
    %v860 = vunpack.c.h.b16 %v135
    %v861 = vunpack.c.l.b16 %v136
    %v862 = vunpack.c.h.b16 %v136
    %v863 = vunpack.c.l.b16 %v137
    %v864 = vunpack.c.h.b16 %v137
    %v865 = vunpack.c.l.b16 %v138
    %v866 = vunpack.c.h.b16 %v138
    %v867 = vunpack.c.l.b16 %v139
    %v868 = vunpack.c.h.b16 %v139
    %v869 = vunpack.c.l.b16 %v140
    %v870 = vunpack.c.h.b16 %v140
    %v871 = vunpack.c.l.b16 %v141
    %v872 = vunpack.c.h.b16 %v141
    %v873 = vunpack.c.l.b16 %v142
    %v874 = vunpack.c.h.b16 %v142
    %v875 = vunpack.c.l.b16 %v143
    %v876 = vunpack.c.h.b16 %v143
    %v877 = vunpack.c.l.b16 %v144
    %v878 = vunpack.c.h.b16 %v144
    %v879 = vunpack.c.l.b16 %v145
    %v880 = vunpack.c.h.b16 %v145
    %v881 = vunpack.c.l.b16 %v146
    %v882 = vunpack.c.h.b16 %v146
    %v883 = vunpack.c.l.b16 %v147
    %v884 = vunpack.c.h.b16 %v147
    %v885 = vunpack.c.l.b16 %v148
    %v886 = vunpack.c.h.b16 %v148
    %v887 = vunpack.c.l.b16 %v149
    %v888 = vunpack.c.h.b16 %v149
    %v889 = vunpack.c.l.b16 %v150
    %v890 = vunpack.c.h.b16 %v150
    %v891 = vunpack.c.l.b16 %v151
    %v892 = vunpack.c.h.b16 %v151
    %v893 = vunpack.c.l.b16 %v152
    %v894 = vunpack.c.h.b16 %v152
    %v895 = vunpack.c.l.b16 %v153
    %v896 = vunpack.c.h.b16 %v153
    %v897 = vunpack.c.l.b16 %v154
    %v898 = vunpack.c.h.b16 %v154
    %v899 = vunpack.c.l.b16 %v155
    %v900 = vunpack.c.h.b16 %v155
    %v901 = vunpack.c.l.b16 %v156
    %v902 = vunpack.c.h.b16 %v156
    %v903 = vunpack.c.l.b16 %v157
    %v904 = vunpack.c.h.b16 %v157
    %v905 = vunpack.c.l.b16 %v158
    %v906 = vunpack.c.h.b16 %v158
    %v907 = vunpack.c.l.b16 %v159
    %v908 = vunpack.c.h.b16 %v159
    %v909 = vunpack.c.l.b16 %v160
    %v910 = vunpack.c.h.b16 %v160
    %v911 = vunpack.c.l.b16 %v161
    %v912 = vunpack.c.h.b16 %v161
    %v913 = vunpack.c.l.b16 %v162
    %v914 = vunpack.c.h.b16 %v162
    %v915 = vunpack.c.l.b16 %v163
    %v916 = vunpack.c.h.b16 %v163
    %v917 = vunpack.c.l.b16 %v164
    %v918 = vunpack.c.h.b16 %v164
    %v919 = vunpack.c.l.b16 %v165
    %v920 = vunpack.c.h.b16 %v165
    %v921 = vunpack.c.l.b16 %v166
    %v922 = vunpack.c.h.b16 %v166
    %v923 = vunpack.c.l.b16 %v167
    %v924 = vunpack.c.h.b16 %v167
    %v925 = vunpack.c.l.b16 %v168
    %v926 = vunpack.c.h.b16 %v168
    %v927 = vunpack.c.l.b16 %v169
    %v928 = vunpack.c.h.b16 %v169
    %v929 = vunpack.c.l.b16 %v170
    %v930 = vunpack.c.h.b16 %v170
    %v931 = vunpack.c.l.b16 %v171
    %v932 = vunpack.c.h.b16 %v171
    %v933 = vunpack.c.l.b16 %v172
    %v934 = vunpack.c.h.b16 %v172
    %v935 = vunpack.c.l.b16 %v173
    %v936 = vunpack.c.h.b16 %v173
    %v937 = vunpack.c.l.b16 %v174
    %v938 = vunpack.c.h.b16 %v174
    %v939 = vunpack.c.l.b16 %v175
    %v940 = vunpack.c.h.b16 %v175
    %v941 = vunpack.c.l.b16 %v176
    %v942 = vunpack.c.h.b16 %v176
    %v943 = vunpack.c.l.b16 %v177
    %v944 = vunpack.c.h.b16 %v177
    %v945 = vunpack.c.l.b16 %v178
    %v946 = vunpack.c.h.b16 %v178
    %v947 = vunpack.c.l.b16 %v179
    %v948 = vunpack.c.h.b16 %v179
    %v949 = vunpack.c.l.b16 %v180
    %v950 = vunpack.c.h.b16 %v180
    %v951 = vunpack.c.l.b16 %v181
    %v952 = vunpack.c.h.b16 %v181
    %v953 = vunpack.c.l.b16 %v182
    %v954 = vunpack.c.h.b16 %v182
    %v955 = vunpack.c.l.b16 %v183
    %v956 = vunpack.c.h.b16 %v183
    %v957 = vunpack.c.l.b16 %v184
    %v958 = vunpack.c.h.b16 %v184
    %v959 = vunpack.c.l.b16 %v185
    %v960 = vunpack.c.h.b16 %v185
    %v961 = vunpack.c.l.b16 %v186
    %v962 = vunpack.c.h.b16 %v186
    %v963 = vunpack.c.l.b16 %v187
    %v964 = vunpack.c.h.b16 %v187
    %v965 = vunpack.c.l.b16 %v188
    %v966 = vunpack.c.h.b16 %v188
    %v967 = vunpack.c.l.b16 %v189
    %v968 = vunpack.c.h.b16 %v189
    %v969 = vunpack.c.l.b16 %v190
    %v970 = vunpack.c.h.b16 %v190
    %v971 = vunpack.c.l.b16 %v191
    %v972 = vunpack.c.h.b16 %v191
    %v973 = vunpack.c.l.b16 %v192
    %v974 = vunpack.c.h.b16 %v192
    %v975 = vunpack.c.l.b16 %v193
    %v976 = vunpack.c.h.b16 %v193
    %v977 = vunpack.c.l.b16 %v194
    %v978 = vunpack.c.h.b16 %v194
    %v979 = vunpack.c.l.b16 %v195
    %v980 = vunpack.c.h.b16 %v195
    %v981 = vunpack.c.l.b16 %v196
    %v982 = vunpack.c.h.b16 %v196
    %v983 = vunpack.c.l.b16 %v197
    %v984 = vunpack.c.h.b16 %v197
    %v985 = vunpack.c.l.b16 %v198
    %v986 = vunpack.c.h.b16 %v198
    %v987 = vunpack.c.l.b16 %v199
    %v988 = vunpack.c.h.b16 %v199
    %v989 = vunpack.c.l.b16 %v200
    %v990 = vunpack.c.h.b16 %v200
    %v991 = vunpack.c.l.b16 %v201
    %v992 = vunpack.c.h.b16 %v201
    %v993 = vunpack.c.l.b16 %v202
    %v994 = vunpack.c.h.b16 %v202
    %v995 = vunpack.c.l.b16 %v203
    %v996 = vunpack.c.h.b16 %v203
    %v997 = vunpack.c.l.b16 %v204
    %v998 = vunpack.c.h.b16 %v204
    %v999 = vunpack.c.l.b16 %v205
    %v1000 = vunpack.c.h.b16 %v205
    %v1001 = vunpack.c.l.b16 %v206
    %v1002 = vunpack.c.h.b16 %v206
    %v1003 = vunpack.c.l.b16 %v207
    %v1004 = vunpack.c.h.b16 %v207
    %v1005 = vunpack.c.l.b16 %v208
    %v1006 = vunpack.c.h.b16 %v208
    %v1007 = vunpack.c.l.b16 %v209
    %v1008 = vunpack.c.h.b16 %v209
    %v1009 = vunpack.c.l.b16 %v210
    %v1010 = vunpack.c.h.b16 %v210
    %v1011 = vunpack.c.l.b16 %v211
    %v1012 = vunpack.c.h.b16 %v211
    %v1013 = vunpack.c.l.b16 %v212
    %v1014 = vunpack.c.h.b16 %v212
    %v1015 = vunpack.c.l.b16 %v213
    %v1016 = vunpack.c.h.b16 %v213
    %v1017 = vunpack.c.l.b16 %v214
    %v1018 = vunpack.c.h.b16 %v214
    %v1019 = vunpack.c.l.b16 %v215
    %v1020 = vunpack.c.h.b16 %v215
    %v1021 = vunpack.c.l.b16 %v216
    %v1022 = vunpack.c.h.b16 %v216
    %v1023 = vunpack.c.l.b16 %v217
    %v1024 = vunpack.c.h.b16 %v217
    %v1025 = vunpack.c.l.b16 %v218
    %v1026 = vunpack.c.h.b16 %v218
    %v1027 = vunpack.c.l.b16 %v219
    %v1028 = vunpack.c.h.b16 %v219
    %v1029 = vunpack.c.l.b16 %v220
    %v1030 = vunpack.c.h.b16 %v220
    %v1031 = vunpack.c.l.b16 %v221
    %v1032 = vunpack.c.h.b16 %v221
    %v1033 = vunpack.c.l.b16 %v222
    %v1034 = vunpack.c.h.b16 %v222
    %v1035 = vunpack.c.l.b16 %v223
    %v1036 = vunpack.c.h.b16 %v223
    %v1037 = vunpack.c.l.b16 %v224
    %v1038 = vunpack.c.h.b16 %v224
    %v1039 = vunpack.c.l.b16 %v225
    %v1040 = vunpack.c.h.b16 %v225
    %v1041 = vunpack.c.l.b16 %v226
    %v1042 = vunpack.c.h.b16 %v226
    %v1043 = vunpack.c.l.b16 %v227
    %v1044 = vunpack.c.h.b16 %v227
    %v1045 = vunpack.c.l.b16 %v228
    %v1046 = vunpack.c.h.b16 %v228
    %v1047 = vunpack.c.l.b16 %v229
    %v1048 = vunpack.c.h.b16 %v229
    %v1049 = vunpack.c.l.b16 %v230
    %v1050 = vunpack.c.h.b16 %v230
    %v1051 = vunpack.c.l.b16 %v231
    %v1052 = vunpack.c.h.b16 %v231
    %v1053 = vunpack.c.l.b16 %v232
    %v1054 = vunpack.c.h.b16 %v232
    %v1055 = vunpack.c.l.b16 %v233
    %v1056 = vunpack.c.h.b16 %v233
    %v1057 = vunpack.c.l.b16 %v234
    %v1058 = vunpack.c.h.b16 %v234
    %v1059 = vunpack.c.l.b16 %v235
    %v1060 = vunpack.c.h.b16 %v235
    %v1061 = vunpack.c.l.b16 %v236
    %v1062 = vunpack.c.h.b16 %v236
    %v1063 = vunpack.c.l.b16 %v237
    %v1064 = vunpack.c.h.b16 %v237
    %v1065 = vunpack.c.l.b16 %v238
    %v1066 = vunpack.c.h.b16 %v238
    %v1067 = vunpack.c.l.b16 %v239
    %v1068 = vunpack.c.h.b16 %v239
    %v1069 = vunpack.c.l.b16 %v240
    %v1070 = vunpack.c.h.b16 %v240
    %v1071 = vunpack.c.l.b16 %v241
    %v1072 = vunpack.c.h.b16 %v241
    %v1073 = vunpack.c.l.b16 %v242
    %v1074 = vunpack.c.h.b16 %v242
    %v1075 = vunpack.c.l.b16 %v243
    %v1076 = vunpack.c.h.b16 %v243
    %v1077 = vunpack.c.l.b16 %v244
    %v1078 = vunpack.c.h.b16 %v244
    %v1079 = vunpack.c.l.b16 %v245
    %v1080 = vunpack.c.h.b16 %v245
    %v1081 = vunpack.c.l.b16 %v246
    %v1082 = vunpack.c.h.b16 %v246
    %v1083 = vunpack.c.l.b16 %v247
    %v1084 = vunpack.c.h.b16 %v247
    %v1085 = vunpack.c.l.b16 %v248
    %v1086 = vunpack.c.h.b16 %v248
    %v1087 = vunpack.c.l.b16 %v249
    %v1088 = vunpack.c.h.b16 %v249
    %v1089 = vunpack.c.l.b16 %v250
    %v1090 = vunpack.c.h.b16 %v250
    %v1091 = vunpack.c.l.b16 %v251
    %v1092 = vunpack.c.h.b16 %v251
    %v1093 = vunpack.c.l.b16 %v252
    %v1094 = vunpack.c.h.b16 %v252
    %v1095 = vunpack.c.l.b16 %v253
    %v1096 = vunpack.c.h.b16 %v253
    %v1097 = vunpack.c.l.b16 %v254
    %v1098 = vunpack.c.h.b16 %v254
    %v1099 = vunpack.c.l.b16 %v255
    %v1100 = vunpack.c.h.b16 %v255
    %v1101 = vunpack.c.l.b16 %v256
    %v1102 = vunpack.c.h.b16 %v256
    %v1103 = vunpack.c.l.b16 %v257
    %v1104 = vunpack.c.h.b16 %v257
    %v1105 = vunpack.c.l.b16 %v258
    %v1106 = vunpack.c.h.b16 %v258
    %v1107 = vunpack.c.l.b16 %v259
    %v1108 = vunpack.c.h.b16 %v259
    %v1109 = vunpack.c.l.b16 %v260
    %v1110 = vunpack.c.h.b16 %v260
    %v1111 = vunpack.c.l.b16 %v261
    %v1112 = vunpack.c.h.b16 %v261
    %v1113 = vunpack.c.l.b16 %v262
    %v1114 = vunpack.c.h.b16 %v262
    %v1115 = vunpack.c.l.b16 %v263
    %v1116 = vunpack.c.h.b16 %v263
    %v1117 = vunpack.c.l.b16 %v264
    %v1118 = vunpack.c.h.b16 %v264
    %v1119 = vunpack.c.l.b16 %v265
    %v1120 = vunpack.c.h.b16 %v265
    %v1121 = vunpack.c.l.b16 %v266
    %v1122 = vunpack.c.h.b16 %v266
    %v1123 = vunpack.c.l.b16 %v267
    %v1124 = vunpack.c.h.b16 %v267
    %v1125 = vunpack.c.l.b16 %v268
    %v1126 = vunpack.c.h.b16 %v268
    %v1127 = vunpack.c.l.b16 %v269
    %v1128 = vunpack.c.h.b16 %v269
    %v1129 = vunpack.c.l.b16 %v270
    %v1130 = vunpack.c.h.b16 %v270
    %v1131 = vunpack.c.l.b16 %v271
    %v1132 = vunpack.c.h.b16 %v271
    %v1133 = vunpack.c.l.b16 %v272
    %v1134 = vunpack.c.h.b16 %v272
    %v1135 = vunpack.c.l.b16 %v273
    %v1136 = vunpack.c.h.b16 %v273
    %v1137 = vunpack.c.l.b16 %v274
    %v1138 = vunpack.c.h.b16 %v274
    %v1139 = vunpack.c.l.b16 %v275
    %v1140 = vunpack.c.h.b16 %v275
    %v1141 = vunpack.c.l.b16 %v276
    %v1142 = vunpack.c.h.b16 %v276
    %v1143 = vunpack.c.l.b16 %v277
    %v1144 = vunpack.c.h.b16 %v277
    %v1145 = vunpack.c.l.b16 %v278
    %v1146 = vunpack.c.h.b16 %v278
    %v1147 = vunpack.c.l.b16 %v279
    %v1148 = vunpack.c.h.b16 %v279
    %v1149 = vunpack.c.l.b16 %v280
    %v1150 = vunpack.c.h.b16 %v280
    %v1151 = vunpack.c.l.b16 %v281
    %v1152 = vunpack.c.h.b16 %v281
    %v1153 = vunpack.c.l.b16 %v282
    %v1154 = vunpack.c.h.b16 %v282
    %v1155 = vunpack.c.l.b16 %v283
    %v1156 = vunpack.c.h.b16 %v283
    %v1157 = vunpack.c.l.b16 %v284
    %v1158 = vunpack.c.h.b16 %v284
    %v1159 = vunpack.c.l.b16 %v285
    %v1160 = vunpack.c.h.b16 %v285
    %v1161 = vunpack.c.l.b16 %v286
    %v1162 = vunpack.c.h.b16 %v286
    %v1163 = vunpack.c.l.b16 %v287
    %v1164 = vunpack.c.h.b16 %v287
    %v1165 = vunpack.c.l.b16 %v288
    %v1166 = vunpack.c.h.b16 %v288
    %v1167 = vunpack.c.l.b16 %v289
    %v1168 = vunpack.c.h.b16 %v289
    %v1169 = vunpack.c.l.b16 %v290
    %v1170 = vunpack.c.h.b16 %v290
    %v1171 = vunpack.c.l.b16 %v291
    %v1172 = vunpack.c.h.b16 %v291
    %v1173 = vunpack.c.l.b16 %v292
    %v1174 = vunpack.c.h.b16 %v292
    %v1175 = vunpack.c.l.b16 %v293
    %v1176 = vunpack.c.h.b16 %v293
    %v1177 = vunpack.c.l.b16 %v294
    %v1178 = vunpack.c.h.b16 %v294
    %v1179 = vunpack.c.l.b16 %v295
    %v1180 = vunpack.c.h.b16 %v295
    %v1181 = vunpack.c.l.b16 %v296
    %v1182 = vunpack.c.h.b16 %v296
    %v1183 = vunpack.c.l.b16 %v297
    %v1184 = vunpack.c.h.b16 %v297
    %v1185 = vunpack.c.l.b16 %v298
    %v1186 = vunpack.c.h.b16 %v298
    %v1187 = vunpack.c.l.b16 %v299
    %v1188 = vunpack.c.h.b16 %v299
    %v1189 = vunpack.c.l.b16 %v300
    %v1190 = vunpack.c.h.b16 %v300
    %v1191 = vunpack.c.l.b16 %v301
    %v1192 = vunpack.c.h.b16 %v301
    %v1193 = vunpack.c.l.b16 %v302
    %v1194 = vunpack.c.h.b16 %v302
    %v1195 = vunpack.c.l.b16 %v303
    %v1196 = vunpack.c.h.b16 %v303
    %v1197 = vunpack.c.l.b16 %v304
    %v1198 = vunpack.c.h.b16 %v304
    %v1199 = vunpack.c.l.b16 %v305
    %v1200 = vunpack.c.h.b16 %v305
    %v1201 = vunpack.c.l.b16 %v306
    %v1202 = vunpack.c.h.b16 %v306
    %v1203 = vunpack.c.l.b16 %v307
    %v1204 = vunpack.c.h.b16 %v307
    %v1205 = vunpack.c.l.b16 %v308
    %v1206 = vunpack.c.h.b16 %v308
    %v1207 = vunpack.c.l.b16 %v309
    %v1208 = vunpack.c.h.b16 %v309
    %v1209 = vunpack.c.l.b16 %v310
    %v1210 = vunpack.c.h.b16 %v310
    %v1211 = vunpack.c.l.b16 %v311
    %v1212 = vunpack.c.h.b16 %v311
    %v1213 = vunpack.c.l.b16 %v312
    %v1214 = vunpack.c.h.b16 %v312
    %v1215 = vunpack.c.l.b16 %v313
    %v1216 = vunpack.c.h.b16 %v313
    %v1217 = vunpack.c.l.b16 %v314
    %v1218 = vunpack.c.h.b16 %v314
    %v1219 = vunpack.c.l.b16 %v315
    %v1220 = vunpack.c.h.b16 %v315
    %v1221 = vunpack.c.l.b16 %v316
    %v1222 = vunpack.c.h.b16 %v316
    %v1223 = vunpack.c.l.b16 %v317
    %v1224 = vunpack.c.h.b16 %v317
    %v1225 = vunpack.c.l.b16 %v318
    %v1226 = vunpack.c.h.b16 %v318
    %v1227 = vunpack.c.l.b16 %v319
    %v1228 = vunpack.c.h.b16 %v319
    %v1229 = vunpack.c.l.b16 %v320
    %v1230 = vunpack.c.h.b16 %v320
    %v1231 = vunpack.c.l.b16 %v321
    %v1232 = vunpack.c.h.b16 %v321
    %v1233 = vunpack.c.l.b16 %v322
    %v1234 = vunpack.c.h.b16 %v322
    %v1235 = vunpack.c.l.b16 %v323
    %v1236 = vunpack.c.h.b16 %v323
    %v1237 = vunpack.c.l.b16 %v324
    %v1238 = vunpack.c.h.b16 %v324
    %v1239 = vunpack.c.l.b16 %v325
    %v1240 = vunpack.c.h.b16 %v325
    %v1241 = vunpack.c.l.b16 %v326
    %v1242 = vunpack.c.h.b16 %v326
    %v1243 = vunpack.c.l.b16 %v327
    %v1244 = vunpack.c.h.b16 %v327
    %v1245 = vunpack.c.l.b16 %v328
    %v1246 = vunpack.c.h.b16 %v328
    %v1247 = vunpack.c.l.b16 %v329
    %v1248 = vunpack.c.h.b16 %v329
    %v1249 = vunpack.c.l.b16 %v330
    %v1250 = vunpack.c.h.b16 %v330
    %v1251 = vunpack.c.l.b16 %v331
    %v1252 = vunpack.c.h.b16 %v331
    %v1253 = vunpack.c.l.b16 %v332
    %v1254 = vunpack.c.h.b16 %v332
    %v1255 = vunpack.c.l.b16 %v333
    %v1256 = vunpack.c.h.b16 %v333
    %v1257 = vunpack.c.l.b16 %v334
    %v1258 = vunpack.c.h.b16 %v334
    %v1259 = vunpack.c.l.b16 %v335
    %v1260 = vunpack.c.h.b16 %v335
    %v1261 = vunpack.c.l.b16 %v336
    %v1262 = vunpack.c.h.b16 %v336
    %v1263 = vunpack.c.l.b16 %v337
    %v1264 = vunpack.c.h.b16 %v337
    %v1265 = vunpack.c.l.b16 %v338
    %v1266 = vunpack.c.h.b16 %v338
    %v1267 = vunpack.c.l.b16 %v339
    %v1268 = vunpack.c.h.b16 %v339
    %v1269 = vunpack.c.l.b16 %v340
    %v1270 = vunpack.c.h.b16 %v340
    %v1271 = vunpack.c.l.b16 %v341
    %v1272 = vunpack.c.h.b16 %v341
    %v1273 = vunpack.c.l.b16 %v342
    %v1274 = vunpack.c.h.b16 %v342
    %v1275 = vunpack.c.l.b16 %v343
    %v1276 = vunpack.c.h.b16 %v343
    %v1277 = vunpack.c.l.b16 %v344
    %v1278 = vunpack.c.h.b16 %v344
    %v1279 = vunpack.c.l.b16 %v345
    %v1280 = vunpack.c.h.b16 %v345
    %v1281 = vpack.c.b16 %v777, %v769
    %v1282 = vpack.c.b16 %v778, %v770
    %v1283 = vpack.c.b16 %v779, %v771
    %v1284 = vpack.c.b16 %v780, %v772
    %v1285 = vpack.c.b16 %v781, %v773
    %v1286 = vpack.c.b16 %v782, %v774
    %v1287 = vpack.c.b16 %v783, %v775
    %v1288 = vpack.c.b16 %v784, %v776
    %v1289 = vpack.c.b16 %v793, %v785
    %v1290 = vpack.c.b16 %v794, %v786
    %v1291 = vpack.c.b16 %v795, %v787
    %v1292 = vpack.c.b16 %v796, %v788
    %v1293 = vpack.c.b16 %v797, %v789
    %v1294 = vpack.c.b16 %v798, %v790
    %v1295 = vpack.c.b16 %v799, %v791
    %v1296 = vpack.c.b16 %v800, %v792
    %v1297 = vpack.c.b16 %v809, %v801
    %v1298 = vpack.c.b16 %v810, %v802
    %v1299 = vpack.c.b16 %v811, %v803
    %v1300 = vpack.c.b16 %v812, %v804
    %v1301 = vpack.c.b16 %v813, %v805
    %v1302 = vpack.c.b16 %v814, %v806
    %v1303 = vpack.c.b16 %v815, %v807
    %v1304 = vpack.c.b16 %v816, %v808
    %v1305 = vpack.c.b16 %v825, %v817
    %v1306 = vpack.c.b16 %v826, %v818
    %v1307 = vpack.c.b16 %v827, %v819
    %v1308 = vpack.c.b16 %v828, %v820
    %v1309 = vpack.c.b16 %v829, %v821
    %v1310 = vpack.c.b16 %v830, %v822
    %v1311 = vpack.c.b16 %v831, %v823
    %v1312 = vpack.c.b16 %v832, %v824
    %v1313 = vpack.c.b16 %v841, %v833
    %v1314 = vpack.c.b16 %v842, %v834
    %v1315 = vpack.c.b16 %v843, %v835
    %v1316 = vpack.c.b16 %v844, %v836
    %v1317 = vpack.c.b16 %v845, %v837
    %v1318 = vpack.c.b16 %v846, %v838
    %v1319 = vpack.c.b16 %v847, %v839
    %v1320 = vpack.c.b16 %v848, %v840
    %v1321 = vpack.c.b16 %v857, %v849
    %v1322 = vpack.c.b16 %v858, %v850
    %v1323 = vpack.c.b16 %v859, %v851
    %v1324 = vpack.c.b16 %v860, %v852
    %v1325 = vpack.c.b16 %v861, %v853
    %v1326 = vpack.c.b16 %v862, %v854
    %v1327 = vpack.c.b16 %v863, %v855
    %v1328 = vpack.c.b16 %v864, %v856
    %v1329 = vpack.c.b16 %v873, %v865
    %v1330 = vpack.c.b16 %v874, %v866
    %v1331 = vpack.c.b16 %v875, %v867
    %v1332 = vpack.c.b16 %v876, %v868
    %v1333 = vpack.c.b16 %v877, %v869
    %v1334 = vpack.c.b16 %v878, %v870
    %v1335 = vpack.c.b16 %v879, %v871
    %v1336 = vpack.c.b16 %v880, %v872
    %v1337 = vpack.c.b16 %v889, %v881
    %v1338 = vpack.c.b16 %v890, %v882
    %v1339 = vpack.c.b16 %v891, %v883
    %v1340 = vpack.c.b16 %v892, %v884
    %v1341 = vpack.c.b16 %v893, %v885
    %v1342 = vpack.c.b16 %v894, %v886
    %v1343 = vpack.c.b16 %v895, %v887
    %v1344 = vpack.c.b16 %v896, %v888
    %v1345 = vpack.c.b16 %v905, %v897
    %v1346 = vpack.c.b16 %v906, %v898
    %v1347 = vpack.c.b16 %v907, %v899
    %v1348 = vpack.c.b16 %v908, %v900
    %v1349 = vpack.c.b16 %v909, %v901
    %v1350 = vpack.c.b16 %v910, %v902
    %v1351 = vpack.c.b16 %v911, %v903
    %v1352 = vpack.c.b16 %v912, %v904
    %v1353 = vpack.c.b16 %v921, %v913
    %v1354 = vpack.c.b16 %v922, %v914
    %v1355 = vpack.c.b16 %v923, %v915
    %v1356 = vpack.c.b16 %v924, %v916
    %v1357 = vpack.c.b16 %v925, %v917
    %v1358 = vpack.c.b16 %v926, %v918
    %v1359 = vpack.c.b16 %v927, %v919
    %v1360 = vpack.c.b16 %v928, %v920
    %v1361 = vpack.c.b16 %v937, %v929
    %v1362 = vpack.c.b16 %v938, %v930
    %v1363 = vpack.c.b16 %v939, %v931
    %v1364 = vpack.c.b16 %v940, %v932
    %v1365 = vpack.c.b16 %v941, %v933
    %v1366 = vpack.c.b16 %v942, %v934
    %v1367 = vpack.c.b16 %v943, %v935
    %v1368 = vpack.c.b16 %v944, %v936
    %v1369 = vpack.c.b16 %v953, %v945
    %v1370 = vpack.c.b16 %v954, %v946
    %v1371 = vpack.c.b16 %v955, %v947
    %v1372 = vpack.c.b16 %v956, %v948
    %v1373 = vpack.c.b16 %v957, %v949
    %v1374 = vpack.c.b16 %v958, %v950
    %v1375 = vpack.c.b16 %v959, %v951
    %v1376 = vpack.c.b16 %v960, %v952
    %v1377 = vpack.c.b16 %v969, %v961
    %v1378 = vpack.c.b16 %v970, %v962
    %v1379 = vpack.c.b16 %v971, %v963
    %v1380 = vpack.c.b16 %v972, %v964
    %v1381 = vpack.c.b16 %v973, %v965
    %v1382 = vpack.c.b16 %v974, %v966
    %v1383 = vpack.c.b16 %v975, %v967
    %v1384 = vpack.c.b16 %v976, %v968
    %v1385 = vpack.c.b16 %v985, %v977
    %v1386 = vpack.c.b16 %v986, %v978
    %v1387 = vpack.c.b16 %v987, %v979
    %v1388 = vpack.c.b16 %v988, %v980
    %v1389 = vpack.c.b16 %v989, %v981
    %v1390 = vpack.c.b16 %v990, %v982
    %v1391 = vpack.c.b16 %v991, %v983
    %v1392 = vpack.c.b16 %v992, %v984
    %v1393 = vpack.c.b16 %v1001, %v993
    %v1394 = vpack.c.b16 %v1002, %v994
    %v1395 = vpack.c.b16 %v1003, %v995
    %v1396 = vpack.c.b16 %v1004, %v996
    %v1397 = vpack.c.b16 %v1005, %v997
    %v1398 = vpack.c.b16 %v1006, %v998
    %v1399 = vpack.c.b16 %v1007, %v999
    %v1400 = vpack.c.b16 %v1008, %v1000
    %v1401 = vpack.c.b16 %v1017, %v1009
    %v1402 = vpack.c.b16 %v1018, %v1010
    %v1403 = vpack.c.b16 %v1019, %v1011
    %v1404 = vpack.c.b16 %v1020, %v1012
    %v1405 = vpack.c.b16 %v1021, %v1013
    %v1406 = vpack.c.b16 %v1022, %v1014
    %v1407 = vpack.c.b16 %v1023, %v1015
    %v1408 = vpack.c.b16 %v1024, %v1016
    %v1409 = vpack.c.b16 %v1033, %v1025
    %v1410 = vpack.c.b16 %v1034, %v1026
    %v1411 = vpack.c.b16 %v1035, %v1027
    %v1412 = vpack.c.b16 %v1036, %v1028
    %v1413 = vpack.c.b16 %v1037, %v1029
    %v1414 = vpack.c.b16 %v1038, %v1030
    %v1415 = vpack.c.b16 %v1039, %v1031
    %v1416 = vpack.c.b16 %v1040, %v1032
    %v1417 = vpack.c.b16 %v1049, %v1041
    %v1418 = vpack.c.b16 %v1050, %v1042
    %v1419 = vpack.c.b16 %v1051, %v1043
    %v1420 = vpack.c.b16 %v1052, %v1044
    %v1421 = vpack.c.b16 %v1053, %v1045
    %v1422 = vpack.c.b16 %v1054, %v1046
    %v1423 = vpack.c.b16 %v1055, %v1047
    %v1424 = vpack.c.b16 %v1056, %v1048
    %v1425 = vpack.c.b16 %v1065, %v1057
    %v1426 = vpack.c.b16 %v1066, %v1058
    %v1427 = vpack.c.b16 %v1067, %v1059
    %v1428 = vpack.c.b16 %v1068, %v1060
    %v1429 = vpack.c.b16 %v1069, %v1061
    %v1430 = vpack.c.b16 %v1070, %v1062
    %v1431 = vpack.c.b16 %v1071, %v1063
    %v1432 = vpack.c.b16 %v1072, %v1064
    %v1433 = vpack.c.b16 %v1081, %v1073
    %v1434 = vpack.c.b16 %v1082, %v1074
    %v1435 = vpack.c.b16 %v1083, %v1075
    %v1436 = vpack.c.b16 %v1084, %v1076
    %v1437 = vpack.c.b16 %v1085, %v1077
    %v1438 = vpack.c.b16 %v1086, %v1078
    %v1439 = vpack.c.b16 %v1087, %v1079
    %v1440 = vpack.c.b16 %v1088, %v1080
    %v1441 = vpack.c.b16 %v1097, %v1089
    %v1442 = vpack.c.b16 %v1098, %v1090
    %v1443 = vpack.c.b16 %v1099, %v1091
    %v1444 = vpack.c.b16 %v1100, %v1092
    %v1445 = vpack.c.b16 %v1101, %v1093
    %v1446 = vpack.c.b16 %v1102, %v1094
    %v1447 = vpack.c.b16 %v1103, %v1095
    %v1448 = vpack.c.b16 %v1104, %v1096
    %v1449 = vpack.c.b16 %v1113, %v1105
    %v1450 = vpack.c.b16 %v1114, %v1106
    %v1451 = vpack.c.b16 %v1115, %v1107
    %v1452 = vpack.c.b16 %v1116, %v1108
    %v1453 = vpack.c.b16 %v1117, %v1109
    %v1454 = vpack.c.b16 %v1118, %v1110
    %v1455 = vpack.c.b16 %v1119, %v1111
    %v1456 = vpack.c.b16 %v1120, %v1112
    %v1457 = vpack.c.b16 %v1129, %v1121
    %v1458 = vpack.c.b16 %v1130, %v1122
    %v1459 = vpack.c.b16 %v1131, %v1123
    %v1460 = vpack.c.b16 %v1132, %v1124
    %v1461 = vpack.c.b16 %v1133, %v1125
    %v1462 = vpack.c.b16 %v1134, %v1126
    %v1463 = vpack.c.b16 %v1135, %v1127
    %v1464 = vpack.c.b16 %v1136, %v1128
    %v1465 = vpack.c.b16 %v1145, %v1137
    %v1466 = vpack.c.b16 %v1146, %v1138
    %v1467 = vpack.c.b16 %v1147, %v1139
    %v1468 = vpack.c.b16 %v1148, %v1140
    %v1469 = vpack.c.b16 %v1149, %v1141
    %v1470 = vpack.c.b16 %v1150, %v1142
    %v1471 = vpack.c.b16 %v1151, %v1143
    %v1472 = vpack.c.b16 %v1152, %v1144
    %v1473 = vpack.c.b16 %v1161, %v1153
    %v1474 = vpack.c.b16 %v1162, %v1154
    %v1475 = vpack.c.b16 %v1163, %v1155
    %v1476 = vpack.c.b16 %v1164, %v1156
    %v1477 = vpack.c.b16 %v1165, %v1157
    %v1478 = vpack.c.b16 %v1166, %v1158
    %v1479 = vpack.c.b16 %v1167, %v1159
    %v1480 = vpack.c.b16 %v1168, %v1160
    %v1481 = vpack.c.b16 %v1177, %v1169
    %v1482 = vpack.c.b16 %v1178, %v1170
    %v1483 = vpack.c.b16 %v1179, %v1171
    %v1484 = vpack.c.b16 %v1180, %v1172
    %v1485 = vpack.c.b16 %v1181, %v1173
    %v1486 = vpack.c.b16 %v1182, %v1174
    %v1487 = vpack.c.b16 %v1183, %v1175
    %v1488 = vpack.c.b16 %v1184, %v1176
    %v1489 = vpack.c.b16 %v1193, %v1185
    %v1490 = vpack.c.b16 %v1194, %v1186
    %v1491 = vpack.c.b16 %v1195, %v1187
    %v1492 = vpack.c.b16 %v1196, %v1188
    %v1493 = vpack.c.b16 %v1197, %v1189
    %v1494 = vpack.c.b16 %v1198, %v1190
    %v1495 = vpack.c.b16 %v1199, %v1191
    %v1496 = vpack.c.b16 %v1200, %v1192
    %v1497 = vpack.c.b16 %v1209, %v1201
    %v1498 = vpack.c.b16 %v1210, %v1202
    %v1499 = vpack.c.b16 %v1211, %v1203
    %v1500 = vpack.c.b16 %v1212, %v1204
    %v1501 = vpack.c.b16 %v1213, %v1205
    %v1502 = vpack.c.b16 %v1214, %v1206
    %v1503 = vpack.c.b16 %v1215, %v1207
    %v1504 = vpack.c.b16 %v1216, %v1208
    %v1505 = vpack.c.b16 %v1225, %v1217
    %v1506 = vpack.c.b16 %v1226, %v1218
    %v1507 = vpack.c.b16 %v1227, %v1219
    %v1508 = vpack.c.b16 %v1228, %v1220
    %v1509 = vpack.c.b16 %v1229, %v1221
    %v1510 = vpack.c.b16 %v1230, %v1222
    %v1511 = vpack.c.b16 %v1231, %v1223
    %v1512 = vpack.c.b16 %v1232, %v1224
    %v1513 = vpack.c.b16 %v1241, %v1233
    %v1514 = vpack.c.b16 %v1242, %v1234
    %v1515 = vpack.c.b16 %v1243, %v1235
    %v1516 = vpack.c.b16 %v1244, %v1236
    %v1517 = vpack.c.b16 %v1245, %v1237
    %v1518 = vpack.c.b16 %v1246, %v1238
    %v1519 = vpack.c.b16 %v1247, %v1239
    %v1520 = vpack.c.b16 %v1248, %v1240
    %v1521 = vpack.c.b16 %v1257, %v1249
    %v1522 = vpack.c.b16 %v1258, %v1250
    %v1523 = vpack.c.b16 %v1259, %v1251
    %v1524 = vpack.c.b16 %v1260, %v1252
    %v1525 = vpack.c.b16 %v1261, %v1253
    %v1526 = vpack.c.b16 %v1262, %v1254
    %v1527 = vpack.c.b16 %v1263, %v1255
    %v1528 = vpack.c.b16 %v1264, %v1256
    %v1529 = vpack.c.b16 %v1273, %v1265
    %v1530 = vpack.c.b16 %v1274, %v1266
    %v1531 = vpack.c.b16 %v1275, %v1267
    %v1532 = vpack.c.b16 %v1276, %v1268
    %v1533 = vpack.c.b16 %v1277, %v1269
    %v1534 = vpack.c.b16 %v1278, %v1270
    %v1535 = vpack.c.b16 %v1279, %v1271
    %v1536 = vpack.c.b16 %v1280, %v1272
    %1793 = vmatpush.bf16.msra.mxu0 %v1337
    %1794 = vmatpush.bf16.msra.mxu0 %v1329
    %1795 = vmatpush.bf16.msra.mxu0 %v1321
    %1796 = vmatpush.bf16.msra.mxu0 %v1313
    %1797 = vmatpush.bf16.msra.mxu0 %v1305
    %1798 = vmatpush.bf16.msra.mxu0 %v1297
    %1799 = vmatpush.bf16.msra.mxu0 %v1289
    %1800 = vmatpush.bf16.msra.mxu0 %v1281
    %1801 = vmatmul.bf16.gmra.mxu0 %v505
    %v1802 = vpop.f32.mrf.mxu0
    %v1803 = vadd.f32 %v391, %v1802
    %v1804 = vpop.f32.mrf.mxu0
    %v1805 = vadd.f32 %v393, %v1804
    %1806 = vdwg.mxu0
    %1807 = vmatpush.bf16.msra.mxu0 %v1401
    %1808 = vmatpush.bf16.msra.mxu0 %v1393
    %1809 = vmatpush.bf16.msra.mxu0 %v1385
    %1810 = vmatpush.bf16.msra.mxu0 %v1377
    %1811 = vmatpush.bf16.msra.mxu0 %v1369
    %1812 = vmatpush.bf16.msra.mxu0 %v1361
    %1813 = vmatpush.bf16.msra.mxu0 %v1353
    %1814 = vmatpush.bf16.msra.mxu0 %v1345
    %1815 = vmatmul.bf16.gmra.mxu0 %v506
    %v1816 = vpop.f32.mrf.mxu0
    %v1817 = vadd.f32 %v1803, %v1816
    %v1818 = vpop.f32.mrf.mxu0
    %v1819 = vadd.f32 %v1805, %v1818
    %1820 = vdwg.mxu0
    %1821 = vmatpush.bf16.msra.mxu0 %v1465
    %1822 = vmatpush.bf16.msra.mxu0 %v1457
    %1823 = vmatpush.bf16.msra.mxu0 %v1449
    %1824 = vmatpush.bf16.msra.mxu0 %v1441
    %1825 = vmatpush.bf16.msra.mxu0 %v1433
    %1826 = vmatpush.bf16.msra.mxu0 %v1425
    %1827 = vmatpush.bf16.msra.mxu0 %v1417
    %1828 = vmatpush.bf16.msra.mxu0 %v1409
    %1829 = vmatmul.bf16.gmra.mxu0 %v507
    %v1830 = vpop.f32.mrf.mxu0
    %v1831 = vadd.f32 %v1817, %v1830
    %v1832 = vpop.f32.mrf.mxu0
    %v1833 = vadd.f32 %v1819, %v1832
    %1834 = vdwg.mxu0
    %1835 = vmatpush.bf16.msra.mxu0 %v1529
    %1836 = vmatpush.bf16.msra.mxu0 %v1521
    %1837 = vmatpush.bf16.msra.mxu0 %v1513
    %1838 = vmatpush.bf16.msra.mxu0 %v1505
    %1839 = vmatpush.bf16.msra.mxu0 %v1497
    %1840 = vmatpush.bf16.msra.mxu0 %v1489
    %1841 = vmatpush.bf16.msra.mxu0 %v1481
    %1842 = vmatpush.bf16.msra.mxu0 %v1473
    %1843 = vmatmul.bf16.gmra.mxu0 %v508
    %v1844 = vpop.f32.mrf.mxu0
    %v1845 = vadd.f32 %v1831, %v1844
    %v1846 = vpop.f32.mrf.mxu0
    %v1847 = vadd.f32 %v1833, %v1846
    %1848 = vdwg.mxu0
    %1849 = vmatpush.bf16.msra.mxu0 %v1338
    %1850 = vmatpush.bf16.msra.mxu0 %v1330
    %1851 = vmatpush.bf16.msra.mxu0 %v1322
    %1852 = vmatpush.bf16.msra.mxu0 %v1314
    %1853 = vmatpush.bf16.msra.mxu0 %v1306
    %1854 = vmatpush.bf16.msra.mxu0 %v1298
    %1855 = vmatpush.bf16.msra.mxu0 %v1290
    %1856 = vmatpush.bf16.msra.mxu0 %v1282
    %1857 = vmatmul.bf16.gmra.mxu0 %v505
    %v1858 = vpop.f32.mrf.mxu0
    %v1859 = vadd.f32 %v405, %v1858
    %v1860 = vpop.f32.mrf.mxu0
    %v1861 = vadd.f32 %v407, %v1860
    %1862 = vdwg.mxu0
    %1863 = vmatpush.bf16.msra.mxu0 %v1402
    %1864 = vmatpush.bf16.msra.mxu0 %v1394
    %1865 = vmatpush.bf16.msra.mxu0 %v1386
    %1866 = vmatpush.bf16.msra.mxu0 %v1378
    %1867 = vmatpush.bf16.msra.mxu0 %v1370
    %1868 = vmatpush.bf16.msra.mxu0 %v1362
    %1869 = vmatpush.bf16.msra.mxu0 %v1354
    %1870 = vmatpush.bf16.msra.mxu0 %v1346
    %1871 = vmatmul.bf16.gmra.mxu0 %v506
    %v1872 = vpop.f32.mrf.mxu0
    %v1873 = vadd.f32 %v1859, %v1872
    %v1874 = vpop.f32.mrf.mxu0
    %v1875 = vadd.f32 %v1861, %v1874
    %1876 = vdwg.mxu0
    %1877 = vmatpush.bf16.msra.mxu0 %v1466
    %1878 = vmatpush.bf16.msra.mxu0 %v1458
    %1879 = vmatpush.bf16.msra.mxu0 %v1450
    %1880 = vmatpush.bf16.msra.mxu0 %v1442
    %1881 = vmatpush.bf16.msra.mxu0 %v1434
    %1882 = vmatpush.bf16.msra.mxu0 %v1426
    %1883 = vmatpush.bf16.msra.mxu0 %v1418
    %1884 = vmatpush.bf16.msra.mxu0 %v1410
    %1885 = vmatmul.bf16.gmra.mxu0 %v507
    %v1886 = vpop.f32.mrf.mxu0
    %v1887 = vadd.f32 %v1873, %v1886
    %v1888 = vpop.f32.mrf.mxu0
    %v1889 = vadd.f32 %v1875, %v1888
    %1890 = vdwg.mxu0
    %1891 = vmatpush.bf16.msra.mxu0 %v1530
    %1892 = vmatpush.bf16.msra.mxu0 %v1522
    %1893 = vmatpush.bf16.msra.mxu0 %v1514
    %1894 = vmatpush.bf16.msra.mxu0 %v1506
    %1895 = vmatpush.bf16.msra.mxu0 %v1498
    %1896 = vmatpush.bf16.msra.mxu0 %v1490
    %1897 = vmatpush.bf16.msra.mxu0 %v1482
    %1898 = vmatpush.bf16.msra.mxu0 %v1474
    %1899 = vmatmul.bf16.gmra.mxu0 %v508
    %v1900 = vpop.f32.mrf.mxu0
    %v1901 = vadd.f32 %v1887, %v1900
    %v1902 = vpop.f32.mrf.mxu0
    %v1903 = vadd.f32 %v1889, %v1902
    %1904 = vdwg.mxu0
    %1905 = vmatpush.bf16.msra.mxu0 %v1339
    %1906 = vmatpush.bf16.msra.mxu0 %v1331
    %1907 = vmatpush.bf16.msra.mxu0 %v1323
    %1908 = vmatpush.bf16.msra.mxu0 %v1315
    %1909 = vmatpush.bf16.msra.mxu0 %v1307
    %1910 = vmatpush.bf16.msra.mxu0 %v1299
    %1911 = vmatpush.bf16.msra.mxu0 %v1291
    %1912 = vmatpush.bf16.msra.mxu0 %v1283
    %1913 = vmatmul.bf16.gmra.mxu0 %v505
    %v1914 = vpop.f32.mrf.mxu0
    %v1915 = vadd.f32 %v419, %v1914
    %v1916 = vpop.f32.mrf.mxu0
    %v1917 = vadd.f32 %v421, %v1916
    %1918 = vdwg.mxu0
    %1919 = vmatpush.bf16.msra.mxu0 %v1403
    %1920 = vmatpush.bf16.msra.mxu0 %v1395
    %1921 = vmatpush.bf16.msra.mxu0 %v1387
    %1922 = vmatpush.bf16.msra.mxu0 %v1379
    %1923 = vmatpush.bf16.msra.mxu0 %v1371
    %1924 = vmatpush.bf16.msra.mxu0 %v1363
    %1925 = vmatpush.bf16.msra.mxu0 %v1355
    %1926 = vmatpush.bf16.msra.mxu0 %v1347
    %1927 = vmatmul.bf16.gmra.mxu0 %v506
    %v1928 = vpop.f32.mrf.mxu0
    %v1929 = vadd.f32 %v1915, %v1928
    %v1930 = vpop.f32.mrf.mxu0
    %v1931 = vadd.f32 %v1917, %v1930
    %1932 = vdwg.mxu0
    %1933 = vmatpush.bf16.msra.mxu0 %v1467
    %1934 = vmatpush.bf16.msra.mxu0 %v1459
    %1935 = vmatpush.bf16.msra.mxu0 %v1451
    %1936 = vmatpush.bf16.msra.mxu0 %v1443
    %1937 = vmatpush.bf16.msra.mxu0 %v1435
    %1938 = vmatpush.bf16.msra.mxu0 %v1427
    %1939 = vmatpush.bf16.msra.mxu0 %v1419
    %1940 = vmatpush.bf16.msra.mxu0 %v1411
    %1941 = vmatmul.bf16.gmra.mxu0 %v507
    %v1942 = vpop.f32.mrf.mxu0
    %v1943 = vadd.f32 %v1929, %v1942
    %v1944 = vpop.f32.mrf.mxu0
    %v1945 = vadd.f32 %v1931, %v1944
    %1946 = vdwg.mxu0
    %1947 = vmatpush.bf16.msra.mxu0 %v1531
    %1948 = vmatpush.bf16.msra.mxu0 %v1523
    %1949 = vmatpush.bf16.msra.mxu0 %v1515
    %1950 = vmatpush.bf16.msra.mxu0 %v1507
    %1951 = vmatpush.bf16.msra.mxu0 %v1499
    %1952 = vmatpush.bf16.msra.mxu0 %v1491
    %1953 = vmatpush.bf16.msra.mxu0 %v1483
    %1954 = vmatpush.bf16.msra.mxu0 %v1475
    %1955 = vmatmul.bf16.gmra.mxu0 %v508
    %v1956 = vpop.f32.mrf.mxu0
    %v1957 = vadd.f32 %v1943, %v1956
    %v1958 = vpop.f32.mrf.mxu0
    %v1959 = vadd.f32 %v1945, %v1958
    %1960 = vdwg.mxu0
    %1961 = vmatpush.bf16.msra.mxu0 %v1340
    %1962 = vmatpush.bf16.msra.mxu0 %v1332
    %1963 = vmatpush.bf16.msra.mxu0 %v1324
    %1964 = vmatpush.bf16.msra.mxu0 %v1316
    %1965 = vmatpush.bf16.msra.mxu0 %v1308
    %1966 = vmatpush.bf16.msra.mxu0 %v1300
    %1967 = vmatpush.bf16.msra.mxu0 %v1292
    %1968 = vmatpush.bf16.msra.mxu0 %v1284
    %1969 = vmatmul.bf16.gmra.mxu0 %v505
    %v1970 = vpop.f32.mrf.mxu0
    %v1971 = vadd.f32 %v433, %v1970
    %v1972 = vpop.f32.mrf.mxu0
    %v1973 = vadd.f32 %v435, %v1972
    %1974 = vdwg.mxu0
    %1975 = vmatpush.bf16.msra.mxu0 %v1404
    %1976 = vmatpush.bf16.msra.mxu0 %v1396
    %1977 = vmatpush.bf16.msra.mxu0 %v1388
    %1978 = vmatpush.bf16.msra.mxu0 %v1380
    %1979 = vmatpush.bf16.msra.mxu0 %v1372
    %1980 = vmatpush.bf16.msra.mxu0 %v1364
    %1981 = vmatpush.bf16.msra.mxu0 %v1356
    %1982 = vmatpush.bf16.msra.mxu0 %v1348
    %1983 = vmatmul.bf16.gmra.mxu0 %v506
    %v1984 = vpop.f32.mrf.mxu0
    %v1985 = vadd.f32 %v1971, %v1984
    %v1986 = vpop.f32.mrf.mxu0
    %v1987 = vadd.f32 %v1973, %v1986
    %1988 = vdwg.mxu0
    %1989 = vmatpush.bf16.msra.mxu0 %v1468
    %1990 = vmatpush.bf16.msra.mxu0 %v1460
    %1991 = vmatpush.bf16.msra.mxu0 %v1452
    %1992 = vmatpush.bf16.msra.mxu0 %v1444
    %1993 = vmatpush.bf16.msra.mxu0 %v1436
    %1994 = vmatpush.bf16.msra.mxu0 %v1428
    %1995 = vmatpush.bf16.msra.mxu0 %v1420
    %1996 = vmatpush.bf16.msra.mxu0 %v1412
    %1997 = vmatmul.bf16.gmra.mxu0 %v507
    %v1998 = vpop.f32.mrf.mxu0
    %v1999 = vadd.f32 %v1985, %v1998
    %v2000 = vpop.f32.mrf.mxu0
    %v2001 = vadd.f32 %v1987, %v2000
    %2002 = vdwg.mxu0
    %2003 = vmatpush.bf16.msra.mxu0 %v1532
    %2004 = vmatpush.bf16.msra.mxu0 %v1524
    %2005 = vmatpush.bf16.msra.mxu0 %v1516
    %2006 = vmatpush.bf16.msra.mxu0 %v1508
    %2007 = vmatpush.bf16.msra.mxu0 %v1500
    %2008 = vmatpush.bf16.msra.mxu0 %v1492
    %2009 = vmatpush.bf16.msra.mxu0 %v1484
    %2010 = vmatpush.bf16.msra.mxu0 %v1476
    %2011 = vmatmul.bf16.gmra.mxu0 %v508
    %v2012 = vpop.f32.mrf.mxu0
    %v2013 = vadd.f32 %v1999, %v2012
    %v2014 = vpop.f32.mrf.mxu0
    %v2015 = vadd.f32 %v2001, %v2014
    %2016 = vdwg.mxu0
    %2017 = vmatpush.bf16.msra.mxu0 %v1341
    %2018 = vmatpush.bf16.msra.mxu0 %v1333
    %2019 = vmatpush.bf16.msra.mxu0 %v1325
    %2020 = vmatpush.bf16.msra.mxu0 %v1317
    %2021 = vmatpush.bf16.msra.mxu0 %v1309
    %2022 = vmatpush.bf16.msra.mxu0 %v1301
    %2023 = vmatpush.bf16.msra.mxu0 %v1293
    %2024 = vmatpush.bf16.msra.mxu0 %v1285
    %2025 = vmatmul.bf16.gmra.mxu0 %v505
    %v2026 = vpop.f32.mrf.mxu0
    %v2027 = vadd.f32 %v447, %v2026
    %v2028 = vpop.f32.mrf.mxu0
    %v2029 = vadd.f32 %v449, %v2028
    %2030 = vdwg.mxu0
    %2031 = vmatpush.bf16.msra.mxu0 %v1405
    %2032 = vmatpush.bf16.msra.mxu0 %v1397
    %2033 = vmatpush.bf16.msra.mxu0 %v1389
    %2034 = vmatpush.bf16.msra.mxu0 %v1381
    %2035 = vmatpush.bf16.msra.mxu0 %v1373
    %2036 = vmatpush.bf16.msra.mxu0 %v1365
    %2037 = vmatpush.bf16.msra.mxu0 %v1357
    %2038 = vmatpush.bf16.msra.mxu0 %v1349
    %2039 = vmatmul.bf16.gmra.mxu0 %v506
    %v2040 = vpop.f32.mrf.mxu0
    %v2041 = vadd.f32 %v2027, %v2040
    %v2042 = vpop.f32.mrf.mxu0
    %v2043 = vadd.f32 %v2029, %v2042
    %2044 = vdwg.mxu0
    %2045 = vmatpush.bf16.msra.mxu0 %v1469
    %2046 = vmatpush.bf16.msra.mxu0 %v1461
    %2047 = vmatpush.bf16.msra.mxu0 %v1453
    %2048 = vmatpush.bf16.msra.mxu0 %v1445
    %2049 = vmatpush.bf16.msra.mxu0 %v1437
    %2050 = vmatpush.bf16.msra.mxu0 %v1429
    %2051 = vmatpush.bf16.msra.mxu0 %v1421
    %2052 = vmatpush.bf16.msra.mxu0 %v1413
    %2053 = vmatmul.bf16.gmra.mxu0 %v507
    %v2054 = vpop.f32.mrf.mxu0
    %v2055 = vadd.f32 %v2041, %v2054
    %v2056 = vpop.f32.mrf.mxu0
    %v2057 = vadd.f32 %v2043, %v2056
    %2058 = vdwg.mxu0
    %2059 = vmatpush.bf16.msra.mxu0 %v1533
    %2060 = vmatpush.bf16.msra.mxu0 %v1525
    %2061 = vmatpush.bf16.msra.mxu0 %v1517
    %2062 = vmatpush.bf16.msra.mxu0 %v1509
    %2063 = vmatpush.bf16.msra.mxu0 %v1501
    %2064 = vmatpush.bf16.msra.mxu0 %v1493
    %2065 = vmatpush.bf16.msra.mxu0 %v1485
    %2066 = vmatpush.bf16.msra.mxu0 %v1477
    %2067 = vmatmul.bf16.gmra.mxu0 %v508
    %v2068 = vpop.f32.mrf.mxu0
    %v2069 = vadd.f32 %v2055, %v2068
    %v2070 = vpop.f32.mrf.mxu0
    %v2071 = vadd.f32 %v2057, %v2070
    %2072 = vdwg.mxu0
    %2073 = vmatpush.bf16.msra.mxu0 %v1342
    %2074 = vmatpush.bf16.msra.mxu0 %v1334
    %2075 = vmatpush.bf16.msra.mxu0 %v1326
    %2076 = vmatpush.bf16.msra.mxu0 %v1318
    %2077 = vmatpush.bf16.msra.mxu0 %v1310
    %2078 = vmatpush.bf16.msra.mxu0 %v1302
    %2079 = vmatpush.bf16.msra.mxu0 %v1294
    %2080 = vmatpush.bf16.msra.mxu0 %v1286
    %2081 = vmatmul.bf16.gmra.mxu0 %v505
    %v2082 = vpop.f32.mrf.mxu0
    %v2083 = vadd.f32 %v461, %v2082
    %v2084 = vpop.f32.mrf.mxu0
    %v2085 = vadd.f32 %v463, %v2084
    %2086 = vdwg.mxu0
    %2087 = vmatpush.bf16.msra.mxu0 %v1406
    %2088 = vmatpush.bf16.msra.mxu0 %v1398
    %2089 = vmatpush.bf16.msra.mxu0 %v1390
    %2090 = vmatpush.bf16.msra.mxu0 %v1382
    %2091 = vmatpush.bf16.msra.mxu0 %v1374
    %2092 = vmatpush.bf16.msra.mxu0 %v1366
    %2093 = vmatpush.bf16.msra.mxu0 %v1358
    %2094 = vmatpush.bf16.msra.mxu0 %v1350
    %2095 = vmatmul.bf16.gmra.mxu0 %v506
    %v2096 = vpop.f32.mrf.mxu0
    %v2097 = vadd.f32 %v2083, %v2096
    %v2098 = vpop.f32.mrf.mxu0
    %v2099 = vadd.f32 %v2085, %v2098
    %2100 = vdwg.mxu0
    %2101 = vmatpush.bf16.msra.mxu0 %v1470
    %2102 = vmatpush.bf16.msra.mxu0 %v1462
    %2103 = vmatpush.bf16.msra.mxu0 %v1454
    %2104 = vmatpush.bf16.msra.mxu0 %v1446
    %2105 = vmatpush.bf16.msra.mxu0 %v1438
    %2106 = vmatpush.bf16.msra.mxu0 %v1430
    %2107 = vmatpush.bf16.msra.mxu0 %v1422
    %2108 = vmatpush.bf16.msra.mxu0 %v1414
    %2109 = vmatmul.bf16.gmra.mxu0 %v507
    %v2110 = vpop.f32.mrf.mxu0
    %v2111 = vadd.f32 %v2097, %v2110
    %v2112 = vpop.f32.mrf.mxu0
    %v2113 = vadd.f32 %v2099, %v2112
    %2114 = vdwg.mxu0
    %2115 = vmatpush.bf16.msra.mxu0 %v1534
    %2116 = vmatpush.bf16.msra.mxu0 %v1526
    %2117 = vmatpush.bf16.msra.mxu0 %v1518
    %2118 = vmatpush.bf16.msra.mxu0 %v1510
    %2119 = vmatpush.bf16.msra.mxu0 %v1502
    %2120 = vmatpush.bf16.msra.mxu0 %v1494
    %2121 = vmatpush.bf16.msra.mxu0 %v1486
    %2122 = vmatpush.bf16.msra.mxu0 %v1478
    %2123 = vmatmul.bf16.gmra.mxu0 %v508
    %v2124 = vpop.f32.mrf.mxu0
    %v2125 = vadd.f32 %v2111, %v2124
    %v2126 = vpop.f32.mrf.mxu0
    %v2127 = vadd.f32 %v2113, %v2126
    %2128 = vdwg.mxu0
    %2129 = vmatpush.bf16.msra.mxu0 %v1343
    %2130 = vmatpush.bf16.msra.mxu0 %v1335
    %2131 = vmatpush.bf16.msra.mxu0 %v1327
    %2132 = vmatpush.bf16.msra.mxu0 %v1319
    %2133 = vmatpush.bf16.msra.mxu0 %v1311
    %2134 = vmatpush.bf16.msra.mxu0 %v1303
    %2135 = vmatpush.bf16.msra.mxu0 %v1295
    %2136 = vmatpush.bf16.msra.mxu0 %v1287
    %2137 = vmatmul.bf16.gmra.mxu0 %v505
    %v2138 = vpop.f32.mrf.mxu0
    %v2139 = vadd.f32 %v475, %v2138
    %v2140 = vpop.f32.mrf.mxu0
    %v2141 = vadd.f32 %v477, %v2140
    %2142 = vdwg.mxu0
    %2143 = vmatpush.bf16.msra.mxu0 %v1407
    %2144 = vmatpush.bf16.msra.mxu0 %v1399
    %2145 = vmatpush.bf16.msra.mxu0 %v1391
    %2146 = vmatpush.bf16.msra.mxu0 %v1383
    %2147 = vmatpush.bf16.msra.mxu0 %v1375
    %2148 = vmatpush.bf16.msra.mxu0 %v1367
    %2149 = vmatpush.bf16.msra.mxu0 %v1359
    %2150 = vmatpush.bf16.msra.mxu0 %v1351
    %2151 = vmatmul.bf16.gmra.mxu0 %v506
    %v2152 = vpop.f32.mrf.mxu0
    %v2153 = vadd.f32 %v2139, %v2152
    %v2154 = vpop.f32.mrf.mxu0
    %v2155 = vadd.f32 %v2141, %v2154
    %2156 = vdwg.mxu0
    %2157 = vmatpush.bf16.msra.mxu0 %v1471
    %2158 = vmatpush.bf16.msra.mxu0 %v1463
    %2159 = vmatpush.bf16.msra.mxu0 %v1455
    %2160 = vmatpush.bf16.msra.mxu0 %v1447
    %2161 = vmatpush.bf16.msra.mxu0 %v1439
    %2162 = vmatpush.bf16.msra.mxu0 %v1431
    %2163 = vmatpush.bf16.msra.mxu0 %v1423
    %2164 = vmatpush.bf16.msra.mxu0 %v1415
    %2165 = vmatmul.bf16.gmra.mxu0 %v507
    %v2166 = vpop.f32.mrf.mxu0
    %v2167 = vadd.f32 %v2153, %v2166
    %v2168 = vpop.f32.mrf.mxu0
    %v2169 = vadd.f32 %v2155, %v2168
    %2170 = vdwg.mxu0
    %2171 = vmatpush.bf16.msra.mxu0 %v1535
    %2172 = vmatpush.bf16.msra.mxu0 %v1527
    %2173 = vmatpush.bf16.msra.mxu0 %v1519
    %2174 = vmatpush.bf16.msra.mxu0 %v1511
    %2175 = vmatpush.bf16.msra.mxu0 %v1503
    %2176 = vmatpush.bf16.msra.mxu0 %v1495
    %2177 = vmatpush.bf16.msra.mxu0 %v1487
    %2178 = vmatpush.bf16.msra.mxu0 %v1479
    %2179 = vmatmul.bf16.gmra.mxu0 %v508
    %v2180 = vpop.f32.mrf.mxu0
    %v2181 = vadd.f32 %v2167, %v2180
    %v2182 = vpop.f32.mrf.mxu0
    %v2183 = vadd.f32 %v2169, %v2182
    %2184 = vdwg.mxu0
    %2185 = vmatpush.bf16.msra.mxu0 %v1344
    %2186 = vmatpush.bf16.msra.mxu0 %v1336
    %2187 = vmatpush.bf16.msra.mxu0 %v1328
    %2188 = vmatpush.bf16.msra.mxu0 %v1320
    %2189 = vmatpush.bf16.msra.mxu0 %v1312
    %2190 = vmatpush.bf16.msra.mxu0 %v1304
    %2191 = vmatpush.bf16.msra.mxu0 %v1296
    %2192 = vmatpush.bf16.msra.mxu0 %v1288
    %2193 = vmatmul.bf16.gmra.mxu0 %v505
    %v2194 = vpop.f32.mrf.mxu0
    %v2195 = vadd.f32 %v489, %v2194
    %v2196 = vpop.f32.mrf.mxu0
    %v2197 = vadd.f32 %v491, %v2196
    %2198 = vdwg.mxu0
    %2199 = vmatpush.bf16.msra.mxu0 %v1408
    %2200 = vmatpush.bf16.msra.mxu0 %v1400
    %2201 = vmatpush.bf16.msra.mxu0 %v1392
    %2202 = vmatpush.bf16.msra.mxu0 %v1384
    %2203 = vmatpush.bf16.msra.mxu0 %v1376
    %2204 = vmatpush.bf16.msra.mxu0 %v1368
    %2205 = vmatpush.bf16.msra.mxu0 %v1360
    %2206 = vmatpush.bf16.msra.mxu0 %v1352
    %2207 = vmatmul.bf16.gmra.mxu0 %v506
    %v2208 = vpop.f32.mrf.mxu0
    %v2209 = vadd.f32 %v2195, %v2208
    %v2210 = vpop.f32.mrf.mxu0
    %v2211 = vadd.f32 %v2197, %v2210
    %2212 = vdwg.mxu0
    %2213 = vmatpush.bf16.msra.mxu0 %v1472
    %2214 = vmatpush.bf16.msra.mxu0 %v1464
    %2215 = vmatpush.bf16.msra.mxu0 %v1456
    %2216 = vmatpush.bf16.msra.mxu0 %v1448
    %2217 = vmatpush.bf16.msra.mxu0 %v1440
    %2218 = vmatpush.bf16.msra.mxu0 %v1432
    %2219 = vmatpush.bf16.msra.mxu0 %v1424
    %2220 = vmatpush.bf16.msra.mxu0 %v1416
    %2221 = vmatmul.bf16.gmra.mxu0 %v507
    %v2222 = vpop.f32.mrf.mxu0
    %v2223 = vadd.f32 %v2209, %v2222
    %v2224 = vpop.f32.mrf.mxu0
    %v2225 = vadd.f32 %v2211, %v2224
    %2226 = vdwg.mxu0
    %2227 = vmatpush.bf16.msra.mxu0 %v1536
    %2228 = vmatpush.bf16.msra.mxu0 %v1528
    %2229 = vmatpush.bf16.msra.mxu0 %v1520
    %2230 = vmatpush.bf16.msra.mxu0 %v1512
    %2231 = vmatpush.bf16.msra.mxu0 %v1504
    %2232 = vmatpush.bf16.msra.mxu0 %v1496
    %2233 = vmatpush.bf16.msra.mxu0 %v1488
    %2234 = vmatpush.bf16.msra.mxu0 %v1480
    %2235 = vmatmul.bf16.gmra.mxu0 %v508
    %v2236 = vpop.f32.mrf.mxu0
    %v2237 = vadd.f32 %v2223, %v2236
    %v2238 = vpop.f32.mrf.mxu0
    %v2239 = vadd.f32 %v2225, %v2238
    %2240 = vdwg.mxu0
    %v2241 = vld [vmem:[%s4] sm:$0xff]
    %v2243 = vperm.slane %v2241, 0
    %v2244 = vperm.slane %v2241, 1
    %v2245 = vperm.slane %v2241, 2
    %v2246 = vperm.slane %v2241, 3
    %v2247 = vperm.slane %v2241, 4
    %v2248 = vperm.slane %v2241, 5
    %v2249 = vperm.slane %v2241, 6
    %v2250 = vperm.slane %v2241, 7
    %v2259 = vadd.f32 %v1845, %v2243
    %v2260 = vadd.f32 %v1901, %v2244
    %v2261 = vadd.f32 %v1957, %v2245
    %v2262 = vadd.f32 %v2013, %v2246
    %v2263 = vadd.f32 %v2069, %v2247
    %v2264 = vadd.f32 %v2125, %v2248
    %v2265 = vadd.f32 %v2181, %v2249
    %v2266 = vadd.f32 %v2237, %v2250
    %v2267 = vadd.f32 %v1847, %v2243
    %v2268 = vadd.f32 %v1903, %v2244
    %v2269 = vadd.f32 %v1959, %v2245
    %v2270 = vadd.f32 %v2015, %v2246
    %v2271 = vadd.f32 %v2071, %v2247
    %v2272 = vadd.f32 %v2127, %v2248
    %v2273 = vadd.f32 %v2183, %v2249
    %v2274 = vadd.f32 %v2239, %v2250
    %v2275 = vmax.f32 %v2259, 0.0
    %v2276 = vmax.f32 %v2260, 0.0
    %v2277 = vmax.f32 %v2261, 0.0
    %v2278 = vmax.f32 %v2262, 0.0
    %v2279 = vmax.f32 %v2263, 0.0
    %v2280 = vmax.f32 %v2264, 0.0
    %v2281 = vmax.f32 %v2265, 0.0
    %v2282 = vmax.f32 %v2266, 0.0
    %v2283 = vmax.f32 %v2267, 0.0
    %v2284 = vmax.f32 %v2268, 0.0
    %v2285 = vmax.f32 %v2269, 0.0
    %v2286 = vmax.f32 %v2270, 0.0
    %v2287 = vmax.f32 %v2271, 0.0
    %v2288 = vmax.f32 %v2272, 0.0
    %v2289 = vmax.f32 %v2273, 0.0
    %v2290 = vmax.f32 %v2274, 0.0
    %v2291 = vpack.c.bf16 %v2283, %v2275
    %v2292 = vpack.c.bf16 %v2284, %v2276
    %v2293 = vpack.c.bf16 %v2285, %v2277
    %v2294 = vpack.c.bf16 %v2286, %v2278
    %v2295 = vpack.c.bf16 %v2287, %v2279
    %v2296 = vpack.c.bf16 %v2288, %v2280
    %v2297 = vpack.c.bf16 %v2289, %v2281
    %v2298 = vpack.c.bf16 %v2290, %v2282
    %v2299 = vld [vmem:[#allocation4] sm:$0xff]
    %v2300 = vld [vmem:[#allocation4 + $0x8] sm:$0xff]
    %v2301 = vld [vmem:[#allocation4 + $0x10] sm:$0xff]
    %v2302 = vld [vmem:[#allocation4 + $0x18] sm:$0xff]
    %v2303 = vld [vmem:[#allocation4 + $0x20] sm:$0xff]
    %v2304 = vld [vmem:[#allocation4 + $0x28] sm:$0xff]
    %v2305 = vld [vmem:[#allocation4 + $0x30] sm:$0xff]
    %v2306 = vld [vmem:[#allocation4 + $0x38] sm:$0xff]
    %v2307 = vld [vmem:[#allocation4 + $0x40] sm:$0xff]
    %v2308 = vld [vmem:[#allocation4 + $0x48] sm:$0xff]
    %v2309 = vld [vmem:[#allocation4 + $0x50] sm:$0xff]
    %v2310 = vld [vmem:[#allocation4 + $0x58] sm:$0xff]
    %v2311 = vld [vmem:[#allocation4 + $0x60] sm:$0xff]
    %v2312 = vld [vmem:[#allocation4 + $0x68] sm:$0xff]
    %v2313 = vld [vmem:[#allocation4 + $0x70] sm:$0xff]
    %v2314 = vld [vmem:[#allocation4 + $0x78] sm:$0xff]
    %v2315 = vld [vmem:[#allocation4 + $0x80] sm:$0xff]
    %v2316 = vld [vmem:[#allocation4 + $0x88] sm:$0xff]
    %v2317 = vld [vmem:[#allocation4 + $0x90] sm:$0xff]
    %v2318 = vld [vmem:[#allocation4 + $0x98] sm:$0xff]
    %v2319 = vld [vmem:[#allocation4 + $0xa0] sm:$0xff]
    %v2320 = vld [vmem:[#allocation4 + $0xa8] sm:$0xff]
    %v2321 = vld [vmem:[#allocation4 + $0xb0] sm:$0xff]
    %v2322 = vld [vmem:[#allocation4 + $0xb8] sm:$0xff]
    %v2323 = vld [vmem:[#allocation4 + $0xc0] sm:$0xff]
    %v2324 = vld [vmem:[#allocation4 + $0xc8] sm:$0xff]
    %v2325 = vld [vmem:[#allocation4 + $0xd0] sm:$0xff]
    %v2326 = vld [vmem:[#allocation4 + $0xd8] sm:$0xff]
    %v2327 = vld [vmem:[#allocation4 + $0xe0] sm:$0xff]
    %v2328 = vld [vmem:[#allocation4 + $0xe8] sm:$0xff]
    %v2329 = vld [vmem:[#allocation4 + $0xf0] sm:$0xff]
    %v2330 = vld [vmem:[#allocation4 + $0xf8] sm:$0xff]
    %v2331 = vld [vmem:[#allocation4 + $0x100] sm:$0xff]
    %v2332 = vld [vmem:[#allocation4 + $0x108] sm:$0xff]
    %v2333 = vld [vmem:[#allocation4 + $0x110] sm:$0xff]
    %v2334 = vld [vmem:[#allocation4 + $0x118] sm:$0xff]
    %v2335 = vld [vmem:[#allocation4 + $0x120] sm:$0xff]
    %v2336 = vld [vmem:[#allocation4 + $0x128] sm:$0xff]
    %v2337 = vld [vmem:[#allocation4 + $0x130] sm:$0xff]
    %v2338 = vld [vmem:[#allocation4 + $0x138] sm:$0xff]
    %v2339 = vld [vmem:[#allocation4 + $0x140] sm:$0xff]
    %v2340 = vld [vmem:[#allocation4 + $0x148] sm:$0xff]
    %v2341 = vld [vmem:[#allocation4 + $0x150] sm:$0xff]
    %v2342 = vld [vmem:[#allocation4 + $0x158] sm:$0xff]
    %v2343 = vld [vmem:[#allocation4 + $0x160] sm:$0xff]
    %v2344 = vld [vmem:[#allocation4 + $0x168] sm:$0xff]
    %v2345 = vld [vmem:[#allocation4 + $0x170] sm:$0xff]
    %v2346 = vld [vmem:[#allocation4 + $0x178] sm:$0xff]
    %v2347 = vld [vmem:[#allocation4 + $0x180] sm:$0xff]
    %v2348 = vld [vmem:[#allocation4 + $0x188] sm:$0xff]
    %v2349 = vld [vmem:[#allocation4 + $0x190] sm:$0xff]
    %v2350 = vld [vmem:[#allocation4 + $0x198] sm:$0xff]
    %v2351 = vld [vmem:[#allocation4 + $0x1a0] sm:$0xff]
    %v2352 = vld [vmem:[#allocation4 + $0x1a8] sm:$0xff]
    %v2353 = vld [vmem:[#allocation4 + $0x1b0] sm:$0xff]
    %v2354 = vld [vmem:[#allocation4 + $0x1b8] sm:$0xff]
    %v2355 = vld [vmem:[#allocation4 + $0x1c0] sm:$0xff]
    %v2356 = vld [vmem:[#allocation4 + $0x1c8] sm:$0xff]
    %v2357 = vld [vmem:[#allocation4 + $0x1d0] sm:$0xff]
    %v2358 = vld [vmem:[#allocation4 + $0x1d8] sm:$0xff]
    %v2359 = vld [vmem:[#allocation4 + $0x1e0] sm:$0xff]
    %v2360 = vld [vmem:[#allocation4 + $0x1e8] sm:$0xff]
    %v2361 = vld [vmem:[#allocation4 + $0x1f0] sm:$0xff]
    %v2362 = vld [vmem:[#allocation4 + $0x1f8] sm:$0xff]
    %v2363 = vld [vmem:[#allocation4 + $0x200] sm:$0xff]
    %v2364 = vld [vmem:[#allocation4 + $0x208] sm:$0xff]
    %v2365 = vld [vmem:[#allocation4 + $0x210] sm:$0xff]
    %v2366 = vld [vmem:[#allocation4 + $0x218] sm:$0xff]
    %v2367 = vld [vmem:[#allocation4 + $0x220] sm:$0xff]
    %v2368 = vld [vmem:[#allocation4 + $0x228] sm:$0xff]
    %v2369 = vld [vmem:[#allocation4 + $0x230] sm:$0xff]
    %v2370 = vld [vmem:[#allocation4 + $0x238] sm:$0xff]
    %v2371 = vld [vmem:[#allocation4 + $0x240] sm:$0xff]
    %v2372 = vld [vmem:[#allocation4 + $0x248] sm:$0xff]
    %v2373 = vld [vmem:[#allocation4 + $0x250] sm:$0xff]
    %v2374 = vld [vmem:[#allocation4 + $0x258] sm:$0xff]
    %v2375 = vld [vmem:[#allocation4 + $0x260] sm:$0xff]
    %v2376 = vld [vmem:[#allocation4 + $0x268] sm:$0xff]
    %v2377 = vld [vmem:[#allocation4 + $0x270] sm:$0xff]
    %v2378 = vld [vmem:[#allocation4 + $0x278] sm:$0xff]
    %v2379 = vld [vmem:[#allocation4 + $0x280] sm:$0xff]
    %v2380 = vld [vmem:[#allocation4 + $0x288] sm:$0xff]
    %v2381 = vld [vmem:[#allocation4 + $0x290] sm:$0xff]
    %v2382 = vld [vmem:[#allocation4 + $0x298] sm:$0xff]
    %v2383 = vld [vmem:[#allocation4 + $0x2a0] sm:$0xff]
    %v2384 = vld [vmem:[#allocation4 + $0x2a8] sm:$0xff]
    %v2385 = vld [vmem:[#allocation4 + $0x2b0] sm:$0xff]
    %v2386 = vld [vmem:[#allocation4 + $0x2b8] sm:$0xff]
    %v2387 = vld [vmem:[#allocation4 + $0x2c0] sm:$0xff]
    %v2388 = vld [vmem:[#allocation4 + $0x2c8] sm:$0xff]
    %v2389 = vld [vmem:[#allocation4 + $0x2d0] sm:$0xff]
    %v2390 = vld [vmem:[#allocation4 + $0x2d8] sm:$0xff]
    %v2391 = vld [vmem:[#allocation4 + $0x2e0] sm:$0xff]
    %v2392 = vld [vmem:[#allocation4 + $0x2e8] sm:$0xff]
    %v2393 = vld [vmem:[#allocation4 + $0x2f0] sm:$0xff]
    %v2394 = vld [vmem:[#allocation4 + $0x2f8] sm:$0xff]
    %v2395 = vld [vmem:[#allocation4 + $0x300] sm:$0xff]
    %v2396 = vld [vmem:[#allocation4 + $0x308] sm:$0xff]
    %v2397 = vld [vmem:[#allocation4 + $0x310] sm:$0xff]
    %v2398 = vld [vmem:[#allocation4 + $0x318] sm:$0xff]
    %v2399 = vld [vmem:[#allocation4 + $0x320] sm:$0xff]
    %v2400 = vld [vmem:[#allocation4 + $0x328] sm:$0xff]
    %v2401 = vld [vmem:[#allocation4 + $0x330] sm:$0xff]
    %v2402 = vld [vmem:[#allocation4 + $0x338] sm:$0xff]
    %v2403 = vld [vmem:[#allocation4 + $0x340] sm:$0xff]
    %v2404 = vld [vmem:[#allocation4 + $0x348] sm:$0xff]
    %v2405 = vld [vmem:[#allocation4 + $0x350] sm:$0xff]
    %v2406 = vld [vmem:[#allocation4 + $0x358] sm:$0xff]
    %v2407 = vld [vmem:[#allocation4 + $0x360] sm:$0xff]
    %v2408 = vld [vmem:[#allocation4 + $0x368] sm:$0xff]
    %v2409 = vld [vmem:[#allocation4 + $0x370] sm:$0xff]
    %v2410 = vld [vmem:[#allocation4 + $0x378] sm:$0xff]
    %v2411 = vld [vmem:[#allocation4 + $0x380] sm:$0xff]
    %v2412 = vld [vmem:[#allocation4 + $0x388] sm:$0xff]
    %v2413 = vld [vmem:[#allocation4 + $0x390] sm:$0xff]
    %v2414 = vld [vmem:[#allocation4 + $0x398] sm:$0xff]
    %v2415 = vld [vmem:[#allocation4 + $0x3a0] sm:$0xff]
    %v2416 = vld [vmem:[#allocation4 + $0x3a8] sm:$0xff]
    %v2417 = vld [vmem:[#allocation4 + $0x3b0] sm:$0xff]
    %v2418 = vld [vmem:[#allocation4 + $0x3b8] sm:$0xff]
    %v2419 = vld [vmem:[#allocation4 + $0x3c0] sm:$0xff]
    %v2420 = vld [vmem:[#allocation4 + $0x3c8] sm:$0xff]
    %v2421 = vld [vmem:[#allocation4 + $0x3d0] sm:$0xff]
    %v2422 = vld [vmem:[#allocation4 + $0x3d8] sm:$0xff]
    %v2423 = vld [vmem:[#allocation4 + $0x3e0] sm:$0xff]
    %v2424 = vld [vmem:[#allocation4 + $0x3e8] sm:$0xff]
    %v2425 = vld [vmem:[#allocation4 + $0x3f0] sm:$0xff]
    %v2426 = vld [vmem:[#allocation4 + $0x3f8] sm:$0xff]
    %v2427 = vld [vmem:[#allocation4 + $0x400] sm:$0xff]
    %v2428 = vld [vmem:[#allocation4 + $0x408] sm:$0xff]
    %v2429 = vld [vmem:[#allocation4 + $0x410] sm:$0xff]
    %v2430 = vld [vmem:[#allocation4 + $0x418] sm:$0xff]
    %v2431 = vld [vmem:[#allocation4 + $0x420] sm:$0xff]
    %v2432 = vld [vmem:[#allocation4 + $0x428] sm:$0xff]
    %v2433 = vld [vmem:[#allocation4 + $0x430] sm:$0xff]
    %v2434 = vld [vmem:[#allocation4 + $0x438] sm:$0xff]
    %v2435 = vld [vmem:[#allocation4 + $0x440] sm:$0xff]
    %v2436 = vld [vmem:[#allocation4 + $0x448] sm:$0xff]
    %v2437 = vld [vmem:[#allocation4 + $0x450] sm:$0xff]
    %v2438 = vld [vmem:[#allocation4 + $0x458] sm:$0xff]
    %v2439 = vld [vmem:[#allocation4 + $0x460] sm:$0xff]
    %v2440 = vld [vmem:[#allocation4 + $0x468] sm:$0xff]
    %v2441 = vld [vmem:[#allocation4 + $0x470] sm:$0xff]
    %v2442 = vld [vmem:[#allocation4 + $0x478] sm:$0xff]
    %v2443 = vld [vmem:[#allocation4 + $0x480] sm:$0xff]
    %v2444 = vld [vmem:[#allocation4 + $0x488] sm:$0xff]
    %v2445 = vld [vmem:[#allocation4 + $0x490] sm:$0xff]
    %v2446 = vld [vmem:[#allocation4 + $0x498] sm:$0xff]
    %v2447 = vld [vmem:[#allocation4 + $0x4a0] sm:$0xff]
    %v2448 = vld [vmem:[#allocation4 + $0x4a8] sm:$0xff]
    %v2449 = vld [vmem:[#allocation4 + $0x4b0] sm:$0xff]
    %v2450 = vld [vmem:[#allocation4 + $0x4b8] sm:$0xff]
    %v2451 = vld [vmem:[#allocation4 + $0x4c0] sm:$0xff]
    %v2452 = vld [vmem:[#allocation4 + $0x4c8] sm:$0xff]
    %v2453 = vld [vmem:[#allocation4 + $0x4d0] sm:$0xff]
    %v2454 = vld [vmem:[#allocation4 + $0x4d8] sm:$0xff]
    %v2455 = vld [vmem:[#allocation4 + $0x4e0] sm:$0xff]
    %v2456 = vld [vmem:[#allocation4 + $0x4e8] sm:$0xff]
    %v2457 = vld [vmem:[#allocation4 + $0x4f0] sm:$0xff]
    %v2458 = vld [vmem:[#allocation4 + $0x4f8] sm:$0xff]
    %v2459 = vld [vmem:[#allocation4 + $0x500] sm:$0xff]
    %v2460 = vld [vmem:[#allocation4 + $0x508] sm:$0xff]
    %v2461 = vld [vmem:[#allocation4 + $0x510] sm:$0xff]
    %v2462 = vld [vmem:[#allocation4 + $0x518] sm:$0xff]
    %v2463 = vld [vmem:[#allocation4 + $0x520] sm:$0xff]
    %v2464 = vld [vmem:[#allocation4 + $0x528] sm:$0xff]
    %v2465 = vld [vmem:[#allocation4 + $0x530] sm:$0xff]
    %v2466 = vld [vmem:[#allocation4 + $0x538] sm:$0xff]
    %v2467 = vld [vmem:[#allocation4 + $0x540] sm:$0xff]
    %v2468 = vld [vmem:[#allocation4 + $0x548] sm:$0xff]
    %v2469 = vld [vmem:[#allocation4 + $0x550] sm:$0xff]
    %v2470 = vld [vmem:[#allocation4 + $0x558] sm:$0xff]
    %v2471 = vld [vmem:[#allocation4 + $0x560] sm:$0xff]
    %v2472 = vld [vmem:[#allocation4 + $0x568] sm:$0xff]
    %v2473 = vld [vmem:[#allocation4 + $0x570] sm:$0xff]
    %v2474 = vld [vmem:[#allocation4 + $0x578] sm:$0xff]
    %v2475 = vld [vmem:[#allocation4 + $0x580] sm:$0xff]
    %v2476 = vld [vmem:[#allocation4 + $0x588] sm:$0xff]
    %v2477 = vld [vmem:[#allocation4 + $0x590] sm:$0xff]
    %v2478 = vld [vmem:[#allocation4 + $0x598] sm:$0xff]
    %v2479 = vld [vmem:[#allocation4 + $0x5a0] sm:$0xff]
    %v2480 = vld [vmem:[#allocation4 + $0x5a8] sm:$0xff]
    %v2481 = vld [vmem:[#allocation4 + $0x5b0] sm:$0xff]
    %v2482 = vld [vmem:[#allocation4 + $0x5b8] sm:$0xff]
    %v2483 = vld [vmem:[#allocation4 + $0x5c0] sm:$0xff]
    %v2484 = vld [vmem:[#allocation4 + $0x5c8] sm:$0xff]
    %v2485 = vld [vmem:[#allocation4 + $0x5d0] sm:$0xff]
    %v2486 = vld [vmem:[#allocation4 + $0x5d8] sm:$0xff]
    %v2487 = vld [vmem:[#allocation4 + $0x5e0] sm:$0xff]
    %v2488 = vld [vmem:[#allocation4 + $0x5e8] sm:$0xff]
    %v2489 = vld [vmem:[#allocation4 + $0x5f0] sm:$0xff]
    %v2490 = vld [vmem:[#allocation4 + $0x5f8] sm:$0xff]
    %v2491 = vld [vmem:[#allocation4 + $0x600] sm:$0xff]
    %v2492 = vld [vmem:[#allocation4 + $0x608] sm:$0xff]
    %v2493 = vld [vmem:[#allocation4 + $0x610] sm:$0xff]
    %v2494 = vld [vmem:[#allocation4 + $0x618] sm:$0xff]
    %v2495 = vld [vmem:[#allocation4 + $0x620] sm:$0xff]
    %v2496 = vld [vmem:[#allocation4 + $0x628] sm:$0xff]
    %v2497 = vld [vmem:[#allocation4 + $0x630] sm:$0xff]
    %v2498 = vld [vmem:[#allocation4 + $0x638] sm:$0xff]
    %v2499 = vld [vmem:[#allocation4 + $0x640] sm:$0xff]
    %v2500 = vld [vmem:[#allocation4 + $0x648] sm:$0xff]
    %v2501 = vld [vmem:[#allocation4 + $0x650] sm:$0xff]
    %v2502 = vld [vmem:[#allocation4 + $0x658] sm:$0xff]
    %v2503 = vld [vmem:[#allocation4 + $0x660] sm:$0xff]
    %v2504 = vld [vmem:[#allocation4 + $0x668] sm:$0xff]
    %v2505 = vld [vmem:[#allocation4 + $0x670] sm:$0xff]
    %v2506 = vld [vmem:[#allocation4 + $0x678] sm:$0xff]
    %v2507 = vld [vmem:[#allocation4 + $0x680] sm:$0xff]
    %v2508 = vld [vmem:[#allocation4 + $0x688] sm:$0xff]
    %v2509 = vld [vmem:[#allocation4 + $0x690] sm:$0xff]
    %v2510 = vld [vmem:[#allocation4 + $0x698] sm:$0xff]
    %v2511 = vld [vmem:[#allocation4 + $0x6a0] sm:$0xff]
    %v2512 = vld [vmem:[#allocation4 + $0x6a8] sm:$0xff]
    %v2513 = vld [vmem:[#allocation4 + $0x6b0] sm:$0xff]
    %v2514 = vld [vmem:[#allocation4 + $0x6b8] sm:$0xff]
    %v2515 = vld [vmem:[#allocation4 + $0x6c0] sm:$0xff]
    %v2516 = vld [vmem:[#allocation4 + $0x6c8] sm:$0xff]
    %v2517 = vld [vmem:[#allocation4 + $0x6d0] sm:$0xff]
    %v2518 = vld [vmem:[#allocation4 + $0x6d8] sm:$0xff]
    %v2519 = vld [vmem:[#allocation4 + $0x6e0] sm:$0xff]
    %v2520 = vld [vmem:[#allocation4 + $0x6e8] sm:$0xff]
    %v2521 = vld [vmem:[#allocation4 + $0x6f0] sm:$0xff]
    %v2522 = vld [vmem:[#allocation4 + $0x6f8] sm:$0xff]
    %v2523 = vld [vmem:[#allocation4 + $0x700] sm:$0xff]
    %v2524 = vld [vmem:[#allocation4 + $0x708] sm:$0xff]
    %v2525 = vld [vmem:[#allocation4 + $0x710] sm:$0xff]
    %v2526 = vld [vmem:[#allocation4 + $0x718] sm:$0xff]
    %v2527 = vld [vmem:[#allocation4 + $0x720] sm:$0xff]
    %v2528 = vld [vmem:[#allocation4 + $0x728] sm:$0xff]
    %v2529 = vld [vmem:[#allocation4 + $0x730] sm:$0xff]
    %v2530 = vld [vmem:[#allocation4 + $0x738] sm:$0xff]
    %v2531 = vld [vmem:[#allocation4 + $0x740] sm:$0xff]
    %v2532 = vld [vmem:[#allocation4 + $0x748] sm:$0xff]
    %v2533 = vld [vmem:[#allocation4 + $0x750] sm:$0xff]
    %v2534 = vld [vmem:[#allocation4 + $0x758] sm:$0xff]
    %v2535 = vld [vmem:[#allocation4 + $0x760] sm:$0xff]
    %v2536 = vld [vmem:[#allocation4 + $0x768] sm:$0xff]
    %v2537 = vld [vmem:[#allocation4 + $0x770] sm:$0xff]
    %v2538 = vld [vmem:[#allocation4 + $0x778] sm:$0xff]
    %v2539 = vld [vmem:[#allocation4 + $0x780] sm:$0xff]
    %v2540 = vld [vmem:[#allocation4 + $0x788] sm:$0xff]
    %v2541 = vld [vmem:[#allocation4 + $0x790] sm:$0xff]
    %v2542 = vld [vmem:[#allocation4 + $0x798] sm:$0xff]
    %v2543 = vld [vmem:[#allocation4 + $0x7a0] sm:$0xff]
    %v2544 = vld [vmem:[#allocation4 + $0x7a8] sm:$0xff]
    %v2545 = vld [vmem:[#allocation4 + $0x7b0] sm:$0xff]
    %v2546 = vld [vmem:[#allocation4 + $0x7b8] sm:$0xff]
    %v2547 = vld [vmem:[#allocation4 + $0x7c0] sm:$0xff]
    %v2548 = vld [vmem:[#allocation4 + $0x7c8] sm:$0xff]
    %v2549 = vld [vmem:[#allocation4 + $0x7d0] sm:$0xff]
    %v2550 = vld [vmem:[#allocation4 + $0x7d8] sm:$0xff]
    %v2551 = vld [vmem:[#allocation4 + $0x7e0] sm:$0xff]
    %v2552 = vld [vmem:[#allocation4 + $0x7e8] sm:$0xff]
    %v2553 = vld [vmem:[#allocation4 + $0x7f0] sm:$0xff]
    %v2554 = vld [vmem:[#allocation4 + $0x7f8] sm:$0xff]
    %v2555 = vld [vmem:[%s6] sm:$0xf]
    %v2557 = vperm.slane %v2555, 0
    %v2558 = vperm.slane %v2555, 1
    %v2559 = vperm.slane %v2555, 2
    %v2560 = vperm.slane %v2555, 3
    %v2821 = vunpack.c.l.b16 %v2299
    %v2822 = vunpack.c.h.b16 %v2299
    %v2823 = vunpack.c.l.b16 %v2300
    %v2824 = vunpack.c.h.b16 %v2300
    %v2825 = vunpack.c.l.b16 %v2301
    %v2826 = vunpack.c.h.b16 %v2301
    %v2827 = vunpack.c.l.b16 %v2302
    %v2828 = vunpack.c.h.b16 %v2302
    %v2829 = vunpack.c.l.b16 %v2303
    %v2830 = vunpack.c.h.b16 %v2303
    %v2831 = vunpack.c.l.b16 %v2304
    %v2832 = vunpack.c.h.b16 %v2304
    %v2833 = vunpack.c.l.b16 %v2305
    %v2834 = vunpack.c.h.b16 %v2305
    %v2835 = vunpack.c.l.b16 %v2306
    %v2836 = vunpack.c.h.b16 %v2306
    %v2837 = vunpack.c.l.b16 %v2307
    %v2838 = vunpack.c.h.b16 %v2307
    %v2839 = vunpack.c.l.b16 %v2308
    %v2840 = vunpack.c.h.b16 %v2308
    %v2841 = vunpack.c.l.b16 %v2309
    %v2842 = vunpack.c.h.b16 %v2309
    %v2843 = vunpack.c.l.b16 %v2310
    %v2844 = vunpack.c.h.b16 %v2310
    %v2845 = vunpack.c.l.b16 %v2311
    %v2846 = vunpack.c.h.b16 %v2311
    %v2847 = vunpack.c.l.b16 %v2312
    %v2848 = vunpack.c.h.b16 %v2312
    %v2849 = vunpack.c.l.b16 %v2313
    %v2850 = vunpack.c.h.b16 %v2313
    %v2851 = vunpack.c.l.b16 %v2314
    %v2852 = vunpack.c.h.b16 %v2314
    %v2853 = vunpack.c.l.b16 %v2315
    %v2854 = vunpack.c.h.b16 %v2315
    %v2855 = vunpack.c.l.b16 %v2316
    %v2856 = vunpack.c.h.b16 %v2316
    %v2857 = vunpack.c.l.b16 %v2317
    %v2858 = vunpack.c.h.b16 %v2317
    %v2859 = vunpack.c.l.b16 %v2318
    %v2860 = vunpack.c.h.b16 %v2318
    %v2861 = vunpack.c.l.b16 %v2319
    %v2862 = vunpack.c.h.b16 %v2319
    %v2863 = vunpack.c.l.b16 %v2320
    %v2864 = vunpack.c.h.b16 %v2320
    %v2865 = vunpack.c.l.b16 %v2321
    %v2866 = vunpack.c.h.b16 %v2321
    %v2867 = vunpack.c.l.b16 %v2322
    %v2868 = vunpack.c.h.b16 %v2322
    %v2869 = vunpack.c.l.b16 %v2323
    %v2870 = vunpack.c.h.b16 %v2323
    %v2871 = vunpack.c.l.b16 %v2324
    %v2872 = vunpack.c.h.b16 %v2324
    %v2873 = vunpack.c.l.b16 %v2325
    %v2874 = vunpack.c.h.b16 %v2325
    %v2875 = vunpack.c.l.b16 %v2326
    %v2876 = vunpack.c.h.b16 %v2326
    %v2877 = vunpack.c.l.b16 %v2327
    %v2878 = vunpack.c.h.b16 %v2327
    %v2879 = vunpack.c.l.b16 %v2328
    %v2880 = vunpack.c.h.b16 %v2328
    %v2881 = vunpack.c.l.b16 %v2329
    %v2882 = vunpack.c.h.b16 %v2329
    %v2883 = vunpack.c.l.b16 %v2330
    %v2884 = vunpack.c.h.b16 %v2330
    %v2885 = vunpack.c.l.b16 %v2331
    %v2886 = vunpack.c.h.b16 %v2331
    %v2887 = vunpack.c.l.b16 %v2332
    %v2888 = vunpack.c.h.b16 %v2332
    %v2889 = vunpack.c.l.b16 %v2333
    %v2890 = vunpack.c.h.b16 %v2333
    %v2891 = vunpack.c.l.b16 %v2334
    %v2892 = vunpack.c.h.b16 %v2334
    %v2893 = vunpack.c.l.b16 %v2335
    %v2894 = vunpack.c.h.b16 %v2335
    %v2895 = vunpack.c.l.b16 %v2336
    %v2896 = vunpack.c.h.b16 %v2336
    %v2897 = vunpack.c.l.b16 %v2337
    %v2898 = vunpack.c.h.b16 %v2337
    %v2899 = vunpack.c.l.b16 %v2338
    %v2900 = vunpack.c.h.b16 %v2338
    %v2901 = vunpack.c.l.b16 %v2339
    %v2902 = vunpack.c.h.b16 %v2339
    %v2903 = vunpack.c.l.b16 %v2340
    %v2904 = vunpack.c.h.b16 %v2340
    %v2905 = vunpack.c.l.b16 %v2341
    %v2906 = vunpack.c.h.b16 %v2341
    %v2907 = vunpack.c.l.b16 %v2342
    %v2908 = vunpack.c.h.b16 %v2342
    %v2909 = vunpack.c.l.b16 %v2343
    %v2910 = vunpack.c.h.b16 %v2343
    %v2911 = vunpack.c.l.b16 %v2344
    %v2912 = vunpack.c.h.b16 %v2344
    %v2913 = vunpack.c.l.b16 %v2345
    %v2914 = vunpack.c.h.b16 %v2345
    %v2915 = vunpack.c.l.b16 %v2346
    %v2916 = vunpack.c.h.b16 %v2346
    %v2917 = vunpack.c.l.b16 %v2347
    %v2918 = vunpack.c.h.b16 %v2347
    %v2919 = vunpack.c.l.b16 %v2348
    %v2920 = vunpack.c.h.b16 %v2348
    %v2921 = vunpack.c.l.b16 %v2349
    %v2922 = vunpack.c.h.b16 %v2349
    %v2923 = vunpack.c.l.b16 %v2350
    %v2924 = vunpack.c.h.b16 %v2350
    %v2925 = vunpack.c.l.b16 %v2351
    %v2926 = vunpack.c.h.b16 %v2351
    %v2927 = vunpack.c.l.b16 %v2352
    %v2928 = vunpack.c.h.b16 %v2352
    %v2929 = vunpack.c.l.b16 %v2353
    %v2930 = vunpack.c.h.b16 %v2353
    %v2931 = vunpack.c.l.b16 %v2354
    %v2932 = vunpack.c.h.b16 %v2354
    %v2933 = vunpack.c.l.b16 %v2355
    %v2934 = vunpack.c.h.b16 %v2355
    %v2935 = vunpack.c.l.b16 %v2356
    %v2936 = vunpack.c.h.b16 %v2356
    %v2937 = vunpack.c.l.b16 %v2357
    %v2938 = vunpack.c.h.b16 %v2357
    %v2939 = vunpack.c.l.b16 %v2358
    %v2940 = vunpack.c.h.b16 %v2358
    %v2941 = vunpack.c.l.b16 %v2359
    %v2942 = vunpack.c.h.b16 %v2359
    %v2943 = vunpack.c.l.b16 %v2360
    %v2944 = vunpack.c.h.b16 %v2360
    %v2945 = vunpack.c.l.b16 %v2361
    %v2946 = vunpack.c.h.b16 %v2361
    %v2947 = vunpack.c.l.b16 %v2362
    %v2948 = vunpack.c.h.b16 %v2362
    %v2949 = vunpack.c.l.b16 %v2363
    %v2950 = vunpack.c.h.b16 %v2363
    %v2951 = vunpack.c.l.b16 %v2364
    %v2952 = vunpack.c.h.b16 %v2364
    %v2953 = vunpack.c.l.b16 %v2365
    %v2954 = vunpack.c.h.b16 %v2365
    %v2955 = vunpack.c.l.b16 %v2366
    %v2956 = vunpack.c.h.b16 %v2366
    %v2957 = vunpack.c.l.b16 %v2367
    %v2958 = vunpack.c.h.b16 %v2367
    %v2959 = vunpack.c.l.b16 %v2368
    %v2960 = vunpack.c.h.b16 %v2368
    %v2961 = vunpack.c.l.b16 %v2369
    %v2962 = vunpack.c.h.b16 %v2369
    %v2963 = vunpack.c.l.b16 %v2370
    %v2964 = vunpack.c.h.b16 %v2370
    %v2965 = vunpack.c.l.b16 %v2371
    %v2966 = vunpack.c.h.b16 %v2371
    %v2967 = vunpack.c.l.b16 %v2372
    %v2968 = vunpack.c.h.b16 %v2372
    %v2969 = vunpack.c.l.b16 %v2373
    %v2970 = vunpack.c.h.b16 %v2373
    %v2971 = vunpack.c.l.b16 %v2374
    %v2972 = vunpack.c.h.b16 %v2374
    %v2973 = vunpack.c.l.b16 %v2375
    %v2974 = vunpack.c.h.b16 %v2375
    %v2975 = vunpack.c.l.b16 %v2376
    %v2976 = vunpack.c.h.b16 %v2376
    %v2977 = vunpack.c.l.b16 %v2377
    %v2978 = vunpack.c.h.b16 %v2377
    %v2979 = vunpack.c.l.b16 %v2378
    %v2980 = vunpack.c.h.b16 %v2378
    %v2981 = vunpack.c.l.b16 %v2379
    %v2982 = vunpack.c.h.b16 %v2379
    %v2983 = vunpack.c.l.b16 %v2380
    %v2984 = vunpack.c.h.b16 %v2380
    %v2985 = vunpack.c.l.b16 %v2381
    %v2986 = vunpack.c.h.b16 %v2381
    %v2987 = vunpack.c.l.b16 %v2382
    %v2988 = vunpack.c.h.b16 %v2382
    %v2989 = vunpack.c.l.b16 %v2383
    %v2990 = vunpack.c.h.b16 %v2383
    %v2991 = vunpack.c.l.b16 %v2384
    %v2992 = vunpack.c.h.b16 %v2384
    %v2993 = vunpack.c.l.b16 %v2385
    %v2994 = vunpack.c.h.b16 %v2385
    %v2995 = vunpack.c.l.b16 %v2386
    %v2996 = vunpack.c.h.b16 %v2386
    %v2997 = vunpack.c.l.b16 %v2387
    %v2998 = vunpack.c.h.b16 %v2387
    %v2999 = vunpack.c.l.b16 %v2388
    %v3000 = vunpack.c.h.b16 %v2388
    %v3001 = vunpack.c.l.b16 %v2389
    %v3002 = vunpack.c.h.b16 %v2389
    %v3003 = vunpack.c.l.b16 %v2390
    %v3004 = vunpack.c.h.b16 %v2390
    %v3005 = vunpack.c.l.b16 %v2391
    %v3006 = vunpack.c.h.b16 %v2391
    %v3007 = vunpack.c.l.b16 %v2392
    %v3008 = vunpack.c.h.b16 %v2392
    %v3009 = vunpack.c.l.b16 %v2393
    %v3010 = vunpack.c.h.b16 %v2393
    %v3011 = vunpack.c.l.b16 %v2394
    %v3012 = vunpack.c.h.b16 %v2394
    %v3013 = vunpack.c.l.b16 %v2395
    %v3014 = vunpack.c.h.b16 %v2395
    %v3015 = vunpack.c.l.b16 %v2396
    %v3016 = vunpack.c.h.b16 %v2396
    %v3017 = vunpack.c.l.b16 %v2397
    %v3018 = vunpack.c.h.b16 %v2397
    %v3019 = vunpack.c.l.b16 %v2398
    %v3020 = vunpack.c.h.b16 %v2398
    %v3021 = vunpack.c.l.b16 %v2399
    %v3022 = vunpack.c.h.b16 %v2399
    %v3023 = vunpack.c.l.b16 %v2400
    %v3024 = vunpack.c.h.b16 %v2400
    %v3025 = vunpack.c.l.b16 %v2401
    %v3026 = vunpack.c.h.b16 %v2401
    %v3027 = vunpack.c.l.b16 %v2402
    %v3028 = vunpack.c.h.b16 %v2402
    %v3029 = vunpack.c.l.b16 %v2403
    %v3030 = vunpack.c.h.b16 %v2403
    %v3031 = vunpack.c.l.b16 %v2404
    %v3032 = vunpack.c.h.b16 %v2404
    %v3033 = vunpack.c.l.b16 %v2405
    %v3034 = vunpack.c.h.b16 %v2405
    %v3035 = vunpack.c.l.b16 %v2406
    %v3036 = vunpack.c.h.b16 %v2406
    %v3037 = vunpack.c.l.b16 %v2407
    %v3038 = vunpack.c.h.b16 %v2407
    %v3039 = vunpack.c.l.b16 %v2408
    %v3040 = vunpack.c.h.b16 %v2408
    %v3041 = vunpack.c.l.b16 %v2409
    %v3042 = vunpack.c.h.b16 %v2409
    %v3043 = vunpack.c.l.b16 %v2410
    %v3044 = vunpack.c.h.b16 %v2410
    %v3045 = vunpack.c.l.b16 %v2411
    %v3046 = vunpack.c.h.b16 %v2411
    %v3047 = vunpack.c.l.b16 %v2412
    %v3048 = vunpack.c.h.b16 %v2412
    %v3049 = vunpack.c.l.b16 %v2413
    %v3050 = vunpack.c.h.b16 %v2413
    %v3051 = vunpack.c.l.b16 %v2414
    %v3052 = vunpack.c.h.b16 %v2414
    %v3053 = vunpack.c.l.b16 %v2415
    %v3054 = vunpack.c.h.b16 %v2415
    %v3055 = vunpack.c.l.b16 %v2416
    %v3056 = vunpack.c.h.b16 %v2416
    %v3057 = vunpack.c.l.b16 %v2417
    %v3058 = vunpack.c.h.b16 %v2417
    %v3059 = vunpack.c.l.b16 %v2418
    %v3060 = vunpack.c.h.b16 %v2418
    %v3061 = vunpack.c.l.b16 %v2419
    %v3062 = vunpack.c.h.b16 %v2419
    %v3063 = vunpack.c.l.b16 %v2420
    %v3064 = vunpack.c.h.b16 %v2420
    %v3065 = vunpack.c.l.b16 %v2421
    %v3066 = vunpack.c.h.b16 %v2421
    %v3067 = vunpack.c.l.b16 %v2422
    %v3068 = vunpack.c.h.b16 %v2422
    %v3069 = vunpack.c.l.b16 %v2423
    %v3070 = vunpack.c.h.b16 %v2423
    %v3071 = vunpack.c.l.b16 %v2424
    %v3072 = vunpack.c.h.b16 %v2424
    %v3073 = vunpack.c.l.b16 %v2425
    %v3074 = vunpack.c.h.b16 %v2425
    %v3075 = vunpack.c.l.b16 %v2426
    %v3076 = vunpack.c.h.b16 %v2426
    %v3077 = vunpack.c.l.b16 %v2427
    %v3078 = vunpack.c.h.b16 %v2427
    %v3079 = vunpack.c.l.b16 %v2428
    %v3080 = vunpack.c.h.b16 %v2428
    %v3081 = vunpack.c.l.b16 %v2429
    %v3082 = vunpack.c.h.b16 %v2429
    %v3083 = vunpack.c.l.b16 %v2430
    %v3084 = vunpack.c.h.b16 %v2430
    %v3085 = vunpack.c.l.b16 %v2431
    %v3086 = vunpack.c.h.b16 %v2431
    %v3087 = vunpack.c.l.b16 %v2432
    %v3088 = vunpack.c.h.b16 %v2432
    %v3089 = vunpack.c.l.b16 %v2433
    %v3090 = vunpack.c.h.b16 %v2433
    %v3091 = vunpack.c.l.b16 %v2434
    %v3092 = vunpack.c.h.b16 %v2434
    %v3093 = vunpack.c.l.b16 %v2435
    %v3094 = vunpack.c.h.b16 %v2435
    %v3095 = vunpack.c.l.b16 %v2436
    %v3096 = vunpack.c.h.b16 %v2436
    %v3097 = vunpack.c.l.b16 %v2437
    %v3098 = vunpack.c.h.b16 %v2437
    %v3099 = vunpack.c.l.b16 %v2438
    %v3100 = vunpack.c.h.b16 %v2438
    %v3101 = vunpack.c.l.b16 %v2439
    %v3102 = vunpack.c.h.b16 %v2439
    %v3103 = vunpack.c.l.b16 %v2440
    %v3104 = vunpack.c.h.b16 %v2440
    %v3105 = vunpack.c.l.b16 %v2441
    %v3106 = vunpack.c.h.b16 %v2441
    %v3107 = vunpack.c.l.b16 %v2442
    %v3108 = vunpack.c.h.b16 %v2442
    %v3109 = vunpack.c.l.b16 %v2443
    %v3110 = vunpack.c.h.b16 %v2443
    %v3111 = vunpack.c.l.b16 %v2444
    %v3112 = vunpack.c.h.b16 %v2444
    %v3113 = vunpack.c.l.b16 %v2445
    %v3114 = vunpack.c.h.b16 %v2445
    %v3115 = vunpack.c.l.b16 %v2446
    %v3116 = vunpack.c.h.b16 %v2446
    %v3117 = vunpack.c.l.b16 %v2447
    %v3118 = vunpack.c.h.b16 %v2447
    %v3119 = vunpack.c.l.b16 %v2448
    %v3120 = vunpack.c.h.b16 %v2448
    %v3121 = vunpack.c.l.b16 %v2449
    %v3122 = vunpack.c.h.b16 %v2449
    %v3123 = vunpack.c.l.b16 %v2450
    %v3124 = vunpack.c.h.b16 %v2450
    %v3125 = vunpack.c.l.b16 %v2451
    %v3126 = vunpack.c.h.b16 %v2451
    %v3127 = vunpack.c.l.b16 %v2452
    %v3128 = vunpack.c.h.b16 %v2452
    %v3129 = vunpack.c.l.b16 %v2453
    %v3130 = vunpack.c.h.b16 %v2453
    %v3131 = vunpack.c.l.b16 %v2454
    %v3132 = vunpack.c.h.b16 %v2454
    %v3133 = vunpack.c.l.b16 %v2455
    %v3134 = vunpack.c.h.b16 %v2455
    %v3135 = vunpack.c.l.b16 %v2456
    %v3136 = vunpack.c.h.b16 %v2456
    %v3137 = vunpack.c.l.b16 %v2457
    %v3138 = vunpack.c.h.b16 %v2457
    %v3139 = vunpack.c.l.b16 %v2458
    %v3140 = vunpack.c.h.b16 %v2458
    %v3141 = vunpack.c.l.b16 %v2459
    %v3142 = vunpack.c.h.b16 %v2459
    %v3143 = vunpack.c.l.b16 %v2460
    %v3144 = vunpack.c.h.b16 %v2460
    %v3145 = vunpack.c.l.b16 %v2461
    %v3146 = vunpack.c.h.b16 %v2461
    %v3147 = vunpack.c.l.b16 %v2462
    %v3148 = vunpack.c.h.b16 %v2462
    %v3149 = vunpack.c.l.b16 %v2463
    %v3150 = vunpack.c.h.b16 %v2463
    %v3151 = vunpack.c.l.b16 %v2464
    %v3152 = vunpack.c.h.b16 %v2464
    %v3153 = vunpack.c.l.b16 %v2465
    %v3154 = vunpack.c.h.b16 %v2465
    %v3155 = vunpack.c.l.b16 %v2466
    %v3156 = vunpack.c.h.b16 %v2466
    %v3157 = vunpack.c.l.b16 %v2467
    %v3158 = vunpack.c.h.b16 %v2467
    %v3159 = vunpack.c.l.b16 %v2468
    %v3160 = vunpack.c.h.b16 %v2468
    %v3161 = vunpack.c.l.b16 %v2469
    %v3162 = vunpack.c.h.b16 %v2469
    %v3163 = vunpack.c.l.b16 %v2470
    %v3164 = vunpack.c.h.b16 %v2470
    %v3165 = vunpack.c.l.b16 %v2471
    %v3166 = vunpack.c.h.b16 %v2471
    %v3167 = vunpack.c.l.b16 %v2472
    %v3168 = vunpack.c.h.b16 %v2472
    %v3169 = vunpack.c.l.b16 %v2473
    %v3170 = vunpack.c.h.b16 %v2473
    %v3171 = vunpack.c.l.b16 %v2474
    %v3172 = vunpack.c.h.b16 %v2474
    %v3173 = vunpack.c.l.b16 %v2475
    %v3174 = vunpack.c.h.b16 %v2475
    %v3175 = vunpack.c.l.b16 %v2476
    %v3176 = vunpack.c.h.b16 %v2476
    %v3177 = vunpack.c.l.b16 %v2477
    %v3178 = vunpack.c.h.b16 %v2477
    %v3179 = vunpack.c.l.b16 %v2478
    %v3180 = vunpack.c.h.b16 %v2478
    %v3181 = vunpack.c.l.b16 %v2479
    %v3182 = vunpack.c.h.b16 %v2479
    %v3183 = vunpack.c.l.b16 %v2480
    %v3184 = vunpack.c.h.b16 %v2480
    %v3185 = vunpack.c.l.b16 %v2481
    %v3186 = vunpack.c.h.b16 %v2481
    %v3187 = vunpack.c.l.b16 %v2482
    %v3188 = vunpack.c.h.b16 %v2482
    %v3189 = vunpack.c.l.b16 %v2483
    %v3190 = vunpack.c.h.b16 %v2483
    %v3191 = vunpack.c.l.b16 %v2484
    %v3192 = vunpack.c.h.b16 %v2484
    %v3193 = vunpack.c.l.b16 %v2485
    %v3194 = vunpack.c.h.b16 %v2485
    %v3195 = vunpack.c.l.b16 %v2486
    %v3196 = vunpack.c.h.b16 %v2486
    %v3197 = vunpack.c.l.b16 %v2487
    %v3198 = vunpack.c.h.b16 %v2487
    %v3199 = vunpack.c.l.b16 %v2488
    %v3200 = vunpack.c.h.b16 %v2488
    %v3201 = vunpack.c.l.b16 %v2489
    %v3202 = vunpack.c.h.b16 %v2489
    %v3203 = vunpack.c.l.b16 %v2490
    %v3204 = vunpack.c.h.b16 %v2490
    %v3205 = vunpack.c.l.b16 %v2491
    %v3206 = vunpack.c.h.b16 %v2491
    %v3207 = vunpack.c.l.b16 %v2492
    %v3208 = vunpack.c.h.b16 %v2492
    %v3209 = vunpack.c.l.b16 %v2493
    %v3210 = vunpack.c.h.b16 %v2493
    %v3211 = vunpack.c.l.b16 %v2494
    %v3212 = vunpack.c.h.b16 %v2494
    %v3213 = vunpack.c.l.b16 %v2495
    %v3214 = vunpack.c.h.b16 %v2495
    %v3215 = vunpack.c.l.b16 %v2496
    %v3216 = vunpack.c.h.b16 %v2496
    %v3217 = vunpack.c.l.b16 %v2497
    %v3218 = vunpack.c.h.b16 %v2497
    %v3219 = vunpack.c.l.b16 %v2498
    %v3220 = vunpack.c.h.b16 %v2498
    %v3221 = vunpack.c.l.b16 %v2499
    %v3222 = vunpack.c.h.b16 %v2499
    %v3223 = vunpack.c.l.b16 %v2500
    %v3224 = vunpack.c.h.b16 %v2500
    %v3225 = vunpack.c.l.b16 %v2501
    %v3226 = vunpack.c.h.b16 %v2501
    %v3227 = vunpack.c.l.b16 %v2502
    %v3228 = vunpack.c.h.b16 %v2502
    %v3229 = vunpack.c.l.b16 %v2503
    %v3230 = vunpack.c.h.b16 %v2503
    %v3231 = vunpack.c.l.b16 %v2504
    %v3232 = vunpack.c.h.b16 %v2504
    %v3233 = vunpack.c.l.b16 %v2505
    %v3234 = vunpack.c.h.b16 %v2505
    %v3235 = vunpack.c.l.b16 %v2506
    %v3236 = vunpack.c.h.b16 %v2506
    %v3237 = vunpack.c.l.b16 %v2507
    %v3238 = vunpack.c.h.b16 %v2507
    %v3239 = vunpack.c.l.b16 %v2508
    %v3240 = vunpack.c.h.b16 %v2508
    %v3241 = vunpack.c.l.b16 %v2509
    %v3242 = vunpack.c.h.b16 %v2509
    %v3243 = vunpack.c.l.b16 %v2510
    %v3244 = vunpack.c.h.b16 %v2510
    %v3245 = vunpack.c.l.b16 %v2511
    %v3246 = vunpack.c.h.b16 %v2511
    %v3247 = vunpack.c.l.b16 %v2512
    %v3248 = vunpack.c.h.b16 %v2512
    %v3249 = vunpack.c.l.b16 %v2513
    %v3250 = vunpack.c.h.b16 %v2513
    %v3251 = vunpack.c.l.b16 %v2514
    %v3252 = vunpack.c.h.b16 %v2514
    %v3253 = vunpack.c.l.b16 %v2515
    %v3254 = vunpack.c.h.b16 %v2515
    %v3255 = vunpack.c.l.b16 %v2516
    %v3256 = vunpack.c.h.b16 %v2516
    %v3257 = vunpack.c.l.b16 %v2517
    %v3258 = vunpack.c.h.b16 %v2517
    %v3259 = vunpack.c.l.b16 %v2518
    %v3260 = vunpack.c.h.b16 %v2518
    %v3261 = vunpack.c.l.b16 %v2519
    %v3262 = vunpack.c.h.b16 %v2519
    %v3263 = vunpack.c.l.b16 %v2520
    %v3264 = vunpack.c.h.b16 %v2520
    %v3265 = vunpack.c.l.b16 %v2521
    %v3266 = vunpack.c.h.b16 %v2521
    %v3267 = vunpack.c.l.b16 %v2522
    %v3268 = vunpack.c.h.b16 %v2522
    %v3269 = vunpack.c.l.b16 %v2523
    %v3270 = vunpack.c.h.b16 %v2523
    %v3271 = vunpack.c.l.b16 %v2524
    %v3272 = vunpack.c.h.b16 %v2524
    %v3273 = vunpack.c.l.b16 %v2525
    %v3274 = vunpack.c.h.b16 %v2525
    %v3275 = vunpack.c.l.b16 %v2526
    %v3276 = vunpack.c.h.b16 %v2526
    %v3277 = vunpack.c.l.b16 %v2527
    %v3278 = vunpack.c.h.b16 %v2527
    %v3279 = vunpack.c.l.b16 %v2528
    %v3280 = vunpack.c.h.b16 %v2528
    %v3281 = vunpack.c.l.b16 %v2529
    %v3282 = vunpack.c.h.b16 %v2529
    %v3283 = vunpack.c.l.b16 %v2530
    %v3284 = vunpack.c.h.b16 %v2530
    %v3285 = vunpack.c.l.b16 %v2531
    %v3286 = vunpack.c.h.b16 %v2531
    %v3287 = vunpack.c.l.b16 %v2532
    %v3288 = vunpack.c.h.b16 %v2532
    %v3289 = vunpack.c.l.b16 %v2533
    %v3290 = vunpack.c.h.b16 %v2533
    %v3291 = vunpack.c.l.b16 %v2534
    %v3292 = vunpack.c.h.b16 %v2534
    %v3293 = vunpack.c.l.b16 %v2535
    %v3294 = vunpack.c.h.b16 %v2535
    %v3295 = vunpack.c.l.b16 %v2536
    %v3296 = vunpack.c.h.b16 %v2536
    %v3297 = vunpack.c.l.b16 %v2537
    %v3298 = vunpack.c.h.b16 %v2537
    %v3299 = vunpack.c.l.b16 %v2538
    %v3300 = vunpack.c.h.b16 %v2538
    %v3301 = vunpack.c.l.b16 %v2539
    %v3302 = vunpack.c.h.b16 %v2539
    %v3303 = vunpack.c.l.b16 %v2540
    %v3304 = vunpack.c.h.b16 %v2540
    %v3305 = vunpack.c.l.b16 %v2541
    %v3306 = vunpack.c.h.b16 %v2541
    %v3307 = vunpack.c.l.b16 %v2542
    %v3308 = vunpack.c.h.b16 %v2542
    %v3309 = vunpack.c.l.b16 %v2543
    %v3310 = vunpack.c.h.b16 %v2543
    %v3311 = vunpack.c.l.b16 %v2544
    %v3312 = vunpack.c.h.b16 %v2544
    %v3313 = vunpack.c.l.b16 %v2545
    %v3314 = vunpack.c.h.b16 %v2545
    %v3315 = vunpack.c.l.b16 %v2546
    %v3316 = vunpack.c.h.b16 %v2546
    %v3317 = vunpack.c.l.b16 %v2547
    %v3318 = vunpack.c.h.b16 %v2547
    %v3319 = vunpack.c.l.b16 %v2548
    %v3320 = vunpack.c.h.b16 %v2548
    %v3321 = vunpack.c.l.b16 %v2549
    %v3322 = vunpack.c.h.b16 %v2549
    %v3323 = vunpack.c.l.b16 %v2550
    %v3324 = vunpack.c.h.b16 %v2550
    %v3325 = vunpack.c.l.b16 %v2551
    %v3326 = vunpack.c.h.b16 %v2551
    %v3327 = vunpack.c.l.b16 %v2552
    %v3328 = vunpack.c.h.b16 %v2552
    %v3329 = vunpack.c.l.b16 %v2553
    %v3330 = vunpack.c.h.b16 %v2553
    %v3331 = vunpack.c.l.b16 %v2554
    %v3332 = vunpack.c.h.b16 %v2554
    %v3333 = vpack.c.b16 %v2825, %v2821
    %v3334 = vpack.c.b16 %v2826, %v2822
    %v3335 = vpack.c.b16 %v2827, %v2823
    %v3336 = vpack.c.b16 %v2828, %v2824
    %v3337 = vpack.c.b16 %v2833, %v2829
    %v3338 = vpack.c.b16 %v2834, %v2830
    %v3339 = vpack.c.b16 %v2835, %v2831
    %v3340 = vpack.c.b16 %v2836, %v2832
    %v3341 = vpack.c.b16 %v2841, %v2837
    %v3342 = vpack.c.b16 %v2842, %v2838
    %v3343 = vpack.c.b16 %v2843, %v2839
    %v3344 = vpack.c.b16 %v2844, %v2840
    %v3345 = vpack.c.b16 %v2849, %v2845
    %v3346 = vpack.c.b16 %v2850, %v2846
    %v3347 = vpack.c.b16 %v2851, %v2847
    %v3348 = vpack.c.b16 %v2852, %v2848
    %v3349 = vpack.c.b16 %v2857, %v2853
    %v3350 = vpack.c.b16 %v2858, %v2854
    %v3351 = vpack.c.b16 %v2859, %v2855
    %v3352 = vpack.c.b16 %v2860, %v2856
    %v3353 = vpack.c.b16 %v2865, %v2861
    %v3354 = vpack.c.b16 %v2866, %v2862
    %v3355 = vpack.c.b16 %v2867, %v2863
    %v3356 = vpack.c.b16 %v2868, %v2864
    %v3357 = vpack.c.b16 %v2873, %v2869
    %v3358 = vpack.c.b16 %v2874, %v2870
    %v3359 = vpack.c.b16 %v2875, %v2871
    %v3360 = vpack.c.b16 %v2876, %v2872
    %v3361 = vpack.c.b16 %v2881, %v2877
    %v3362 = vpack.c.b16 %v2882, %v2878
    %v3363 = vpack.c.b16 %v2883, %v2879
    %v3364 = vpack.c.b16 %v2884, %v2880
    %v3365 = vpack.c.b16 %v2889, %v2885
    %v3366 = vpack.c.b16 %v2890, %v2886
    %v3367 = vpack.c.b16 %v2891, %v2887
    %v3368 = vpack.c.b16 %v2892, %v2888
    %v3369 = vpack.c.b16 %v2897, %v2893
    %v3370 = vpack.c.b16 %v2898, %v2894
    %v3371 = vpack.c.b16 %v2899, %v2895
    %v3372 = vpack.c.b16 %v2900, %v2896
    %v3373 = vpack.c.b16 %v2905, %v2901
    %v3374 = vpack.c.b16 %v2906, %v2902
    %v3375 = vpack.c.b16 %v2907, %v2903
    %v3376 = vpack.c.b16 %v2908, %v2904
    %v3377 = vpack.c.b16 %v2913, %v2909
    %v3378 = vpack.c.b16 %v2914, %v2910
    %v3379 = vpack.c.b16 %v2915, %v2911
    %v3380 = vpack.c.b16 %v2916, %v2912
    %v3381 = vpack.c.b16 %v2921, %v2917
    %v3382 = vpack.c.b16 %v2922, %v2918
    %v3383 = vpack.c.b16 %v2923, %v2919
    %v3384 = vpack.c.b16 %v2924, %v2920
    %v3385 = vpack.c.b16 %v2929, %v2925
    %v3386 = vpack.c.b16 %v2930, %v2926
    %v3387 = vpack.c.b16 %v2931, %v2927
    %v3388 = vpack.c.b16 %v2932, %v2928
    %v3389 = vpack.c.b16 %v2937, %v2933
    %v3390 = vpack.c.b16 %v2938, %v2934
    %v3391 = vpack.c.b16 %v2939, %v2935
    %v3392 = vpack.c.b16 %v2940, %v2936
    %v3393 = vpack.c.b16 %v2945, %v2941
    %v3394 = vpack.c.b16 %v2946, %v2942
    %v3395 = vpack.c.b16 %v2947, %v2943
    %v3396 = vpack.c.b16 %v2948, %v2944
    %v3397 = vpack.c.b16 %v2953, %v2949
    %v3398 = vpack.c.b16 %v2954, %v2950
    %v3399 = vpack.c.b16 %v2955, %v2951
    %v3400 = vpack.c.b16 %v2956, %v2952
    %v3401 = vpack.c.b16 %v2961, %v2957
    %v3402 = vpack.c.b16 %v2962, %v2958
    %v3403 = vpack.c.b16 %v2963, %v2959
    %v3404 = vpack.c.b16 %v2964, %v2960
    %v3405 = vpack.c.b16 %v2969, %v2965
    %v3406 = vpack.c.b16 %v2970, %v2966
    %v3407 = vpack.c.b16 %v2971, %v2967
    %v3408 = vpack.c.b16 %v2972, %v2968
    %v3409 = vpack.c.b16 %v2977, %v2973
    %v3410 = vpack.c.b16 %v2978, %v2974
    %v3411 = vpack.c.b16 %v2979, %v2975
    %v3412 = vpack.c.b16 %v2980, %v2976
    %v3413 = vpack.c.b16 %v2985, %v2981
    %v3414 = vpack.c.b16 %v2986, %v2982
    %v3415 = vpack.c.b16 %v2987, %v2983
    %v3416 = vpack.c.b16 %v2988, %v2984
    %v3417 = vpack.c.b16 %v2993, %v2989
    %v3418 = vpack.c.b16 %v2994, %v2990
    %v3419 = vpack.c.b16 %v2995, %v2991
    %v3420 = vpack.c.b16 %v2996, %v2992
    %v3421 = vpack.c.b16 %v3001, %v2997
    %v3422 = vpack.c.b16 %v3002, %v2998
    %v3423 = vpack.c.b16 %v3003, %v2999
    %v3424 = vpack.c.b16 %v3004, %v3000
    %v3425 = vpack.c.b16 %v3009, %v3005
    %v3426 = vpack.c.b16 %v3010, %v3006
    %v3427 = vpack.c.b16 %v3011, %v3007
    %v3428 = vpack.c.b16 %v3012, %v3008
    %v3429 = vpack.c.b16 %v3017, %v3013
    %v3430 = vpack.c.b16 %v3018, %v3014
    %v3431 = vpack.c.b16 %v3019, %v3015
    %v3432 = vpack.c.b16 %v3020, %v3016
    %v3433 = vpack.c.b16 %v3025, %v3021
    %v3434 = vpack.c.b16 %v3026, %v3022
    %v3435 = vpack.c.b16 %v3027, %v3023
    %v3436 = vpack.c.b16 %v3028, %v3024
    %v3437 = vpack.c.b16 %v3033, %v3029
    %v3438 = vpack.c.b16 %v3034, %v3030
    %v3439 = vpack.c.b16 %v3035, %v3031
    %v3440 = vpack.c.b16 %v3036, %v3032
    %v3441 = vpack.c.b16 %v3041, %v3037
    %v3442 = vpack.c.b16 %v3042, %v3038
    %v3443 = vpack.c.b16 %v3043, %v3039
    %v3444 = vpack.c.b16 %v3044, %v3040
    %v3445 = vpack.c.b16 %v3049, %v3045
    %v3446 = vpack.c.b16 %v3050, %v3046
    %v3447 = vpack.c.b16 %v3051, %v3047
    %v3448 = vpack.c.b16 %v3052, %v3048
    %v3449 = vpack.c.b16 %v3057, %v3053
    %v3450 = vpack.c.b16 %v3058, %v3054
    %v3451 = vpack.c.b16 %v3059, %v3055
    %v3452 = vpack.c.b16 %v3060, %v3056
    %v3453 = vpack.c.b16 %v3065, %v3061
    %v3454 = vpack.c.b16 %v3066, %v3062
    %v3455 = vpack.c.b16 %v3067, %v3063
    %v3456 = vpack.c.b16 %v3068, %v3064
    %v3457 = vpack.c.b16 %v3073, %v3069
    %v3458 = vpack.c.b16 %v3074, %v3070
    %v3459 = vpack.c.b16 %v3075, %v3071
    %v3460 = vpack.c.b16 %v3076, %v3072
    %v3461 = vpack.c.b16 %v3081, %v3077
    %v3462 = vpack.c.b16 %v3082, %v3078
    %v3463 = vpack.c.b16 %v3083, %v3079
    %v3464 = vpack.c.b16 %v3084, %v3080
    %v3465 = vpack.c.b16 %v3089, %v3085
    %v3466 = vpack.c.b16 %v3090, %v3086
    %v3467 = vpack.c.b16 %v3091, %v3087
    %v3468 = vpack.c.b16 %v3092, %v3088
    %v3469 = vpack.c.b16 %v3097, %v3093
    %v3470 = vpack.c.b16 %v3098, %v3094
    %v3471 = vpack.c.b16 %v3099, %v3095
    %v3472 = vpack.c.b16 %v3100, %v3096
    %v3473 = vpack.c.b16 %v3105, %v3101
    %v3474 = vpack.c.b16 %v3106, %v3102
    %v3475 = vpack.c.b16 %v3107, %v3103
    %v3476 = vpack.c.b16 %v3108, %v3104
    %v3477 = vpack.c.b16 %v3113, %v3109
    %v3478 = vpack.c.b16 %v3114, %v3110
    %v3479 = vpack.c.b16 %v3115, %v3111
    %v3480 = vpack.c.b16 %v3116, %v3112
    %v3481 = vpack.c.b16 %v3121, %v3117
    %v3482 = vpack.c.b16 %v3122, %v3118
    %v3483 = vpack.c.b16 %v3123, %v3119
    %v3484 = vpack.c.b16 %v3124, %v3120
    %v3485 = vpack.c.b16 %v3129, %v3125
    %v3486 = vpack.c.b16 %v3130, %v3126
    %v3487 = vpack.c.b16 %v3131, %v3127
    %v3488 = vpack.c.b16 %v3132, %v3128
    %v3489 = vpack.c.b16 %v3137, %v3133
    %v3490 = vpack.c.b16 %v3138, %v3134
    %v3491 = vpack.c.b16 %v3139, %v3135
    %v3492 = vpack.c.b16 %v3140, %v3136
    %v3493 = vpack.c.b16 %v3145, %v3141
    %v3494 = vpack.c.b16 %v3146, %v3142
    %v3495 = vpack.c.b16 %v3147, %v3143
    %v3496 = vpack.c.b16 %v3148, %v3144
    %v3497 = vpack.c.b16 %v3153, %v3149
    %v3498 = vpack.c.b16 %v3154, %v3150
    %v3499 = vpack.c.b16 %v3155, %v3151
    %v3500 = vpack.c.b16 %v3156, %v3152
    %v3501 = vpack.c.b16 %v3161, %v3157
    %v3502 = vpack.c.b16 %v3162, %v3158
    %v3503 = vpack.c.b16 %v3163, %v3159
    %v3504 = vpack.c.b16 %v3164, %v3160
    %v3505 = vpack.c.b16 %v3169, %v3165
    %v3506 = vpack.c.b16 %v3170, %v3166
    %v3507 = vpack.c.b16 %v3171, %v3167
    %v3508 = vpack.c.b16 %v3172, %v3168
    %v3509 = vpack.c.b16 %v3177, %v3173
    %v3510 = vpack.c.b16 %v3178, %v3174
    %v3511 = vpack.c.b16 %v3179, %v3175
    %v3512 = vpack.c.b16 %v3180, %v3176
    %v3513 = vpack.c.b16 %v3185, %v3181
    %v3514 = vpack.c.b16 %v3186, %v3182
    %v3515 = vpack.c.b16 %v3187, %v3183
    %v3516 = vpack.c.b16 %v3188, %v3184
    %v3517 = vpack.c.b16 %v3193, %v3189
    %v3518 = vpack.c.b16 %v3194, %v3190
    %v3519 = vpack.c.b16 %v3195, %v3191
    %v3520 = vpack.c.b16 %v3196, %v3192
    %v3521 = vpack.c.b16 %v3201, %v3197
    %v3522 = vpack.c.b16 %v3202, %v3198
    %v3523 = vpack.c.b16 %v3203, %v3199
    %v3524 = vpack.c.b16 %v3204, %v3200
    %v3525 = vpack.c.b16 %v3209, %v3205
    %v3526 = vpack.c.b16 %v3210, %v3206
    %v3527 = vpack.c.b16 %v3211, %v3207
    %v3528 = vpack.c.b16 %v3212, %v3208
    %v3529 = vpack.c.b16 %v3217, %v3213
    %v3530 = vpack.c.b16 %v3218, %v3214
    %v3531 = vpack.c.b16 %v3219, %v3215
    %v3532 = vpack.c.b16 %v3220, %v3216
    %v3533 = vpack.c.b16 %v3225, %v3221
    %v3534 = vpack.c.b16 %v3226, %v3222
    %v3535 = vpack.c.b16 %v3227, %v3223
    %v3536 = vpack.c.b16 %v3228, %v3224
    %v3537 = vpack.c.b16 %v3233, %v3229
    %v3538 = vpack.c.b16 %v3234, %v3230
    %v3539 = vpack.c.b16 %v3235, %v3231
    %v3540 = vpack.c.b16 %v3236, %v3232
    %v3541 = vpack.c.b16 %v3241, %v3237
    %v3542 = vpack.c.b16 %v3242, %v3238
    %v3543 = vpack.c.b16 %v3243, %v3239
    %v3544 = vpack.c.b16 %v3244, %v3240
    %v3545 = vpack.c.b16 %v3249, %v3245
    %v3546 = vpack.c.b16 %v3250, %v3246
    %v3547 = vpack.c.b16 %v3251, %v3247
    %v3548 = vpack.c.b16 %v3252, %v3248
    %v3549 = vpack.c.b16 %v3257, %v3253
    %v3550 = vpack.c.b16 %v3258, %v3254
    %v3551 = vpack.c.b16 %v3259, %v3255
    %v3552 = vpack.c.b16 %v3260, %v3256
    %v3553 = vpack.c.b16 %v3265, %v3261
    %v3554 = vpack.c.b16 %v3266, %v3262
    %v3555 = vpack.c.b16 %v3267, %v3263
    %v3556 = vpack.c.b16 %v3268, %v3264
    %v3557 = vpack.c.b16 %v3273, %v3269
    %v3558 = vpack.c.b16 %v3274, %v3270
    %v3559 = vpack.c.b16 %v3275, %v3271
    %v3560 = vpack.c.b16 %v3276, %v3272
    %v3561 = vpack.c.b16 %v3281, %v3277
    %v3562 = vpack.c.b16 %v3282, %v3278
    %v3563 = vpack.c.b16 %v3283, %v3279
    %v3564 = vpack.c.b16 %v3284, %v3280
    %v3565 = vpack.c.b16 %v3289, %v3285
    %v3566 = vpack.c.b16 %v3290, %v3286
    %v3567 = vpack.c.b16 %v3291, %v3287
    %v3568 = vpack.c.b16 %v3292, %v3288
    %v3569 = vpack.c.b16 %v3297, %v3293
    %v3570 = vpack.c.b16 %v3298, %v3294
    %v3571 = vpack.c.b16 %v3299, %v3295
    %v3572 = vpack.c.b16 %v3300, %v3296
    %v3573 = vpack.c.b16 %v3305, %v3301
    %v3574 = vpack.c.b16 %v3306, %v3302
    %v3575 = vpack.c.b16 %v3307, %v3303
    %v3576 = vpack.c.b16 %v3308, %v3304
    %v3577 = vpack.c.b16 %v3313, %v3309
    %v3578 = vpack.c.b16 %v3314, %v3310
    %v3579 = vpack.c.b16 %v3315, %v3311
    %v3580 = vpack.c.b16 %v3316, %v3312
    %v3581 = vpack.c.b16 %v3321, %v3317
    %v3582 = vpack.c.b16 %v3322, %v3318
    %v3583 = vpack.c.b16 %v3323, %v3319
    %v3584 = vpack.c.b16 %v3324, %v3320
    %v3585 = vpack.c.b16 %v3329, %v3325
    %v3586 = vpack.c.b16 %v3330, %v3326
    %v3587 = vpack.c.b16 %v3331, %v3327
    %v3588 = vpack.c.b16 %v3332, %v3328
    %3845 = vmatpush.bf16.msra.mxu0 %v3361
    %3846 = vmatpush.bf16.msra.mxu0 %v3357
    %3847 = vmatpush.bf16.msra.mxu0 %v3353
    %3848 = vmatpush.bf16.msra.mxu0 %v3349
    %3849 = vmatpush.bf16.msra.mxu0 %v3345
    %3850 = vmatpush.bf16.msra.mxu0 %v3341
    %3851 = vmatpush.bf16.msra.mxu0 %v3337
    %3852 = vmatpush.bf16.msra.mxu0 %v3333
    %3853 = vmatmul.bf16.gmra.mxu0 %v2291
    %v3854 = vpop.f32.mrf.mxu0
    %v3855 = vadd.f32 %v2557, %v3854
    %v3856 = vpop.f32.mrf.mxu0
    %v3857 = vadd.f32 %v2557, %v3856
    %3858 = vdwg.mxu0
    %3859 = vmatpush.bf16.msra.mxu0 %v3393
    %3860 = vmatpush.bf16.msra.mxu0 %v3389
    %3861 = vmatpush.bf16.msra.mxu0 %v3385
    %3862 = vmatpush.bf16.msra.mxu0 %v3381
    %3863 = vmatpush.bf16.msra.mxu0 %v3377
    %3864 = vmatpush.bf16.msra.mxu0 %v3373
    %3865 = vmatpush.bf16.msra.mxu0 %v3369
    %3866 = vmatpush.bf16.msra.mxu0 %v3365
    %3867 = vmatmul.bf16.gmra.mxu0 %v2292
    %v3868 = vpop.f32.mrf.mxu0
    %v3869 = vadd.f32 %v3855, %v3868
    %v3870 = vpop.f32.mrf.mxu0
    %v3871 = vadd.f32 %v3857, %v3870
    %3872 = vdwg.mxu0
    %3873 = vmatpush.bf16.msra.mxu0 %v3425
    %3874 = vmatpush.bf16.msra.mxu0 %v3421
    %3875 = vmatpush.bf16.msra.mxu0 %v3417
    %3876 = vmatpush.bf16.msra.mxu0 %v3413
    %3877 = vmatpush.bf16.msra.mxu0 %v3409
    %3878 = vmatpush.bf16.msra.mxu0 %v3405
    %3879 = vmatpush.bf16.msra.mxu0 %v3401
    %3880 = vmatpush.bf16.msra.mxu0 %v3397
    %3881 = vmatmul.bf16.gmra.mxu0 %v2293
    %v3882 = vpop.f32.mrf.mxu0
    %v3883 = vadd.f32 %v3869, %v3882
    %v3884 = vpop.f32.mrf.mxu0
    %v3885 = vadd.f32 %v3871, %v3884
    %3886 = vdwg.mxu0
    %3887 = vmatpush.bf16.msra.mxu0 %v3457
    %3888 = vmatpush.bf16.msra.mxu0 %v3453
    %3889 = vmatpush.bf16.msra.mxu0 %v3449
    %3890 = vmatpush.bf16.msra.mxu0 %v3445
    %3891 = vmatpush.bf16.msra.mxu0 %v3441
    %3892 = vmatpush.bf16.msra.mxu0 %v3437
    %3893 = vmatpush.bf16.msra.mxu0 %v3433
    %3894 = vmatpush.bf16.msra.mxu0 %v3429
    %3895 = vmatmul.bf16.gmra.mxu0 %v2294
    %v3896 = vpop.f32.mrf.mxu0
    %v3897 = vadd.f32 %v3883, %v3896
    %v3898 = vpop.f32.mrf.mxu0
    %v3899 = vadd.f32 %v3885, %v3898
    %3900 = vdwg.mxu0
    %3901 = vmatpush.bf16.msra.mxu0 %v3489
    %3902 = vmatpush.bf16.msra.mxu0 %v3485
    %3903 = vmatpush.bf16.msra.mxu0 %v3481
    %3904 = vmatpush.bf16.msra.mxu0 %v3477
    %3905 = vmatpush.bf16.msra.mxu0 %v3473
    %3906 = vmatpush.bf16.msra.mxu0 %v3469
    %3907 = vmatpush.bf16.msra.mxu0 %v3465
    %3908 = vmatpush.bf16.msra.mxu0 %v3461
    %3909 = vmatmul.bf16.gmra.mxu0 %v2295
    %v3910 = vpop.f32.mrf.mxu0
    %v3911 = vadd.f32 %v3897, %v3910
    %v3912 = vpop.f32.mrf.mxu0
    %v3913 = vadd.f32 %v3899, %v3912
    %3914 = vdwg.mxu0
    %3915 = vmatpush.bf16.msra.mxu0 %v3521
    %3916 = vmatpush.bf16.msra.mxu0 %v3517
    %3917 = vmatpush.bf16.msra.mxu0 %v3513
    %3918 = vmatpush.bf16.msra.mxu0 %v3509
    %3919 = vmatpush.bf16.msra.mxu0 %v3505
    %3920 = vmatpush.bf16.msra.mxu0 %v3501
    %3921 = vmatpush.bf16.msra.mxu0 %v3497
    %3922 = vmatpush.bf16.msra.mxu0 %v3493
    %3923 = vmatmul.bf16.gmra.mxu0 %v2296
    %v3924 = vpop.f32.mrf.mxu0
    %v3925 = vadd.f32 %v3911, %v3924
    %v3926 = vpop.f32.mrf.mxu0
    %v3927 = vadd.f32 %v3913, %v3926
    %3928 = vdwg.mxu0
    %3929 = vmatpush.bf16.msra.mxu0 %v3553
    %3930 = vmatpush.bf16.msra.mxu0 %v3549
    %3931 = vmatpush.bf16.msra.mxu0 %v3545
    %3932 = vmatpush.bf16.msra.mxu0 %v3541
    %3933 = vmatpush.bf16.msra.mxu0 %v3537
    %3934 = vmatpush.bf16.msra.mxu0 %v3533
    %3935 = vmatpush.bf16.msra.mxu0 %v3529
    %3936 = vmatpush.bf16.msra.mxu0 %v3525
    %3937 = vmatmul.bf16.gmra.mxu0 %v2297
    %v3938 = vpop.f32.mrf.mxu0
    %v3939 = vadd.f32 %v3925, %v3938
    %v3940 = vpop.f32.mrf.mxu0
    %v3941 = vadd.f32 %v3927, %v3940
    %3942 = vdwg.mxu0
    %3943 = vmatpush.bf16.msra.mxu0 %v3585
    %3944 = vmatpush.bf16.msra.mxu0 %v3581
    %3945 = vmatpush.bf16.msra.mxu0 %v3577
    %3946 = vmatpush.bf16.msra.mxu0 %v3573
    %3947 = vmatpush.bf16.msra.mxu0 %v3569
    %3948 = vmatpush.bf16.msra.mxu0 %v3565
    %3949 = vmatpush.bf16.msra.mxu0 %v3561
    %3950 = vmatpush.bf16.msra.mxu0 %v3557
    %3951 = vmatmul.bf16.gmra.mxu0 %v2298
    %v3952 = vpop.f32.mrf.mxu0
    %v3953 = vadd.f32 %v3939, %v3952
    %v3954 = vpop.f32.mrf.mxu0
    %v3955 = vadd.f32 %v3941, %v3954
    %3956 = vdwg.mxu0
    %3957 = vmatpush.bf16.msra.mxu0 %v3362
    %3958 = vmatpush.bf16.msra.mxu0 %v3358
    %3959 = vmatpush.bf16.msra.mxu0 %v3354
    %3960 = vmatpush.bf16.msra.mxu0 %v3350
    %3961 = vmatpush.bf16.msra.mxu0 %v3346
    %3962 = vmatpush.bf16.msra.mxu0 %v3342
    %3963 = vmatpush.bf16.msra.mxu0 %v3338
    %3964 = vmatpush.bf16.msra.mxu0 %v3334
    %3965 = vmatmul.bf16.gmra.mxu0 %v2291
    %v3966 = vpop.f32.mrf.mxu0
    %v3967 = vadd.f32 %v2558, %v3966
    %v3968 = vpop.f32.mrf.mxu0
    %v3969 = vadd.f32 %v2558, %v3968
    %3970 = vdwg.mxu0
    %3971 = vmatpush.bf16.msra.mxu0 %v3394
    %3972 = vmatpush.bf16.msra.mxu0 %v3390
    %3973 = vmatpush.bf16.msra.mxu0 %v3386
    %3974 = vmatpush.bf16.msra.mxu0 %v3382
    %3975 = vmatpush.bf16.msra.mxu0 %v3378
    %3976 = vmatpush.bf16.msra.mxu0 %v3374
    %3977 = vmatpush.bf16.msra.mxu0 %v3370
    %3978 = vmatpush.bf16.msra.mxu0 %v3366
    %3979 = vmatmul.bf16.gmra.mxu0 %v2292
    %v3980 = vpop.f32.mrf.mxu0
    %v3981 = vadd.f32 %v3967, %v3980
    %v3982 = vpop.f32.mrf.mxu0
    %v3983 = vadd.f32 %v3969, %v3982
    %3984 = vdwg.mxu0
    %3985 = vmatpush.bf16.msra.mxu0 %v3426
    %3986 = vmatpush.bf16.msra.mxu0 %v3422
    %3987 = vmatpush.bf16.msra.mxu0 %v3418
    %3988 = vmatpush.bf16.msra.mxu0 %v3414
    %3989 = vmatpush.bf16.msra.mxu0 %v3410
    %3990 = vmatpush.bf16.msra.mxu0 %v3406
    %3991 = vmatpush.bf16.msra.mxu0 %v3402
    %3992 = vmatpush.bf16.msra.mxu0 %v3398
    %3993 = vmatmul.bf16.gmra.mxu0 %v2293
    %v3994 = vpop.f32.mrf.mxu0
    %v3995 = vadd.f32 %v3981, %v3994
    %v3996 = vpop.f32.mrf.mxu0
    %v3997 = vadd.f32 %v3983, %v3996
    %3998 = vdwg.mxu0
    %3999 = vmatpush.bf16.msra.mxu0 %v3458
    %4000 = vmatpush.bf16.msra.mxu0 %v3454
    %4001 = vmatpush.bf16.msra.mxu0 %v3450
    %4002 = vmatpush.bf16.msra.mxu0 %v3446
    %4003 = vmatpush.bf16.msra.mxu0 %v3442
    %4004 = vmatpush.bf16.msra.mxu0 %v3438
    %4005 = vmatpush.bf16.msra.mxu0 %v3434
    %4006 = vmatpush.bf16.msra.mxu0 %v3430
    %4007 = vmatmul.bf16.gmra.mxu0 %v2294
    %v4008 = vpop.f32.mrf.mxu0
    %v4009 = vadd.f32 %v3995, %v4008
    %v4010 = vpop.f32.mrf.mxu0
    %v4011 = vadd.f32 %v3997, %v4010
    %4012 = vdwg.mxu0
    %4013 = vmatpush.bf16.msra.mxu0 %v3490
    %4014 = vmatpush.bf16.msra.mxu0 %v3486
    %4015 = vmatpush.bf16.msra.mxu0 %v3482
    %4016 = vmatpush.bf16.msra.mxu0 %v3478
    %4017 = vmatpush.bf16.msra.mxu0 %v3474
    %4018 = vmatpush.bf16.msra.mxu0 %v3470
    %4019 = vmatpush.bf16.msra.mxu0 %v3466
    %4020 = vmatpush.bf16.msra.mxu0 %v3462
    %4021 = vmatmul.bf16.gmra.mxu0 %v2295
    %v4022 = vpop.f32.mrf.mxu0
    %v4023 = vadd.f32 %v4009, %v4022
    %v4024 = vpop.f32.mrf.mxu0
    %v4025 = vadd.f32 %v4011, %v4024
    %4026 = vdwg.mxu0
    %4027 = vmatpush.bf16.msra.mxu0 %v3522
    %4028 = vmatpush.bf16.msra.mxu0 %v3518
    %4029 = vmatpush.bf16.msra.mxu0 %v3514
    %4030 = vmatpush.bf16.msra.mxu0 %v3510
    %4031 = vmatpush.bf16.msra.mxu0 %v3506
    %4032 = vmatpush.bf16.msra.mxu0 %v3502
    %4033 = vmatpush.bf16.msra.mxu0 %v3498
    %4034 = vmatpush.bf16.msra.mxu0 %v3494
    %4035 = vmatmul.bf16.gmra.mxu0 %v2296
    %v4036 = vpop.f32.mrf.mxu0
    %v4037 = vadd.f32 %v4023, %v4036
    %v4038 = vpop.f32.mrf.mxu0
    %v4039 = vadd.f32 %v4025, %v4038
    %4040 = vdwg.mxu0
    %4041 = vmatpush.bf16.msra.mxu0 %v3554
    %4042 = vmatpush.bf16.msra.mxu0 %v3550
    %4043 = vmatpush.bf16.msra.mxu0 %v3546
    %4044 = vmatpush.bf16.msra.mxu0 %v3542
    %4045 = vmatpush.bf16.msra.mxu0 %v3538
    %4046 = vmatpush.bf16.msra.mxu0 %v3534
    %4047 = vmatpush.bf16.msra.mxu0 %v3530
    %4048 = vmatpush.bf16.msra.mxu0 %v3526
    %4049 = vmatmul.bf16.gmra.mxu0 %v2297
    %v4050 = vpop.f32.mrf.mxu0
    %v4051 = vadd.f32 %v4037, %v4050
    %v4052 = vpop.f32.mrf.mxu0
    %v4053 = vadd.f32 %v4039, %v4052
    %4054 = vdwg.mxu0
    %4055 = vmatpush.bf16.msra.mxu0 %v3586
    %4056 = vmatpush.bf16.msra.mxu0 %v3582
    %4057 = vmatpush.bf16.msra.mxu0 %v3578
    %4058 = vmatpush.bf16.msra.mxu0 %v3574
    %4059 = vmatpush.bf16.msra.mxu0 %v3570
    %4060 = vmatpush.bf16.msra.mxu0 %v3566
    %4061 = vmatpush.bf16.msra.mxu0 %v3562
    %4062 = vmatpush.bf16.msra.mxu0 %v3558
    %4063 = vmatmul.bf16.gmra.mxu0 %v2298
    %v4064 = vpop.f32.mrf.mxu0
    %v4065 = vadd.f32 %v4051, %v4064
    %v4066 = vpop.f32.mrf.mxu0
    %v4067 = vadd.f32 %v4053, %v4066
    %4068 = vdwg.mxu0
    %4069 = vmatpush.bf16.msra.mxu0 %v3363
    %4070 = vmatpush.bf16.msra.mxu0 %v3359
    %4071 = vmatpush.bf16.msra.mxu0 %v3355
    %4072 = vmatpush.bf16.msra.mxu0 %v3351
    %4073 = vmatpush.bf16.msra.mxu0 %v3347
    %4074 = vmatpush.bf16.msra.mxu0 %v3343
    %4075 = vmatpush.bf16.msra.mxu0 %v3339
    %4076 = vmatpush.bf16.msra.mxu0 %v3335
    %4077 = vmatmul.bf16.gmra.mxu0 %v2291
    %v4078 = vpop.f32.mrf.mxu0
    %v4079 = vadd.f32 %v2559, %v4078
    %v4080 = vpop.f32.mrf.mxu0
    %v4081 = vadd.f32 %v2559, %v4080
    %4082 = vdwg.mxu0
    %4083 = vmatpush.bf16.msra.mxu0 %v3395
    %4084 = vmatpush.bf16.msra.mxu0 %v3391
    %4085 = vmatpush.bf16.msra.mxu0 %v3387
    %4086 = vmatpush.bf16.msra.mxu0 %v3383
    %4087 = vmatpush.bf16.msra.mxu0 %v3379
    %4088 = vmatpush.bf16.msra.mxu0 %v3375
    %4089 = vmatpush.bf16.msra.mxu0 %v3371
    %4090 = vmatpush.bf16.msra.mxu0 %v3367
    %4091 = vmatmul.bf16.gmra.mxu0 %v2292
    %v4092 = vpop.f32.mrf.mxu0
    %v4093 = vadd.f32 %v4079, %v4092
    %v4094 = vpop.f32.mrf.mxu0
    %v4095 = vadd.f32 %v4081, %v4094
    %4096 = vdwg.mxu0
    %4097 = vmatpush.bf16.msra.mxu0 %v3427
    %4098 = vmatpush.bf16.msra.mxu0 %v3423
    %4099 = vmatpush.bf16.msra.mxu0 %v3419
    %4100 = vmatpush.bf16.msra.mxu0 %v3415
    %4101 = vmatpush.bf16.msra.mxu0 %v3411
    %4102 = vmatpush.bf16.msra.mxu0 %v3407
    %4103 = vmatpush.bf16.msra.mxu0 %v3403
    %4104 = vmatpush.bf16.msra.mxu0 %v3399
    %4105 = vmatmul.bf16.gmra.mxu0 %v2293
    %v4106 = vpop.f32.mrf.mxu0
    %v4107 = vadd.f32 %v4093, %v4106
    %v4108 = vpop.f32.mrf.mxu0
    %v4109 = vadd.f32 %v4095, %v4108
    %4110 = vdwg.mxu0
    %4111 = vmatpush.bf16.msra.mxu0 %v3459
    %4112 = vmatpush.bf16.msra.mxu0 %v3455
    %4113 = vmatpush.bf16.msra.mxu0 %v3451
    %4114 = vmatpush.bf16.msra.mxu0 %v3447
    %4115 = vmatpush.bf16.msra.mxu0 %v3443
    %4116 = vmatpush.bf16.msra.mxu0 %v3439
    %4117 = vmatpush.bf16.msra.mxu0 %v3435
    %4118 = vmatpush.bf16.msra.mxu0 %v3431
    %4119 = vmatmul.bf16.gmra.mxu0 %v2294
    %v4120 = vpop.f32.mrf.mxu0
    %v4121 = vadd.f32 %v4107, %v4120
    %v4122 = vpop.f32.mrf.mxu0
    %v4123 = vadd.f32 %v4109, %v4122
    %4124 = vdwg.mxu0
    %4125 = vmatpush.bf16.msra.mxu0 %v3491
    %4126 = vmatpush.bf16.msra.mxu0 %v3487
    %4127 = vmatpush.bf16.msra.mxu0 %v3483
    %4128 = vmatpush.bf16.msra.mxu0 %v3479
    %4129 = vmatpush.bf16.msra.mxu0 %v3475
    %4130 = vmatpush.bf16.msra.mxu0 %v3471
    %4131 = vmatpush.bf16.msra.mxu0 %v3467
    %4132 = vmatpush.bf16.msra.mxu0 %v3463
    %4133 = vmatmul.bf16.gmra.mxu0 %v2295
    %v4134 = vpop.f32.mrf.mxu0
    %v4135 = vadd.f32 %v4121, %v4134
    %v4136 = vpop.f32.mrf.mxu0
    %v4137 = vadd.f32 %v4123, %v4136
    %4138 = vdwg.mxu0
    %4139 = vmatpush.bf16.msra.mxu0 %v3523
    %4140 = vmatpush.bf16.msra.mxu0 %v3519
    %4141 = vmatpush.bf16.msra.mxu0 %v3515
    %4142 = vmatpush.bf16.msra.mxu0 %v3511
    %4143 = vmatpush.bf16.msra.mxu0 %v3507
    %4144 = vmatpush.bf16.msra.mxu0 %v3503
    %4145 = vmatpush.bf16.msra.mxu0 %v3499
    %4146 = vmatpush.bf16.msra.mxu0 %v3495
    %4147 = vmatmul.bf16.gmra.mxu0 %v2296
    %v4148 = vpop.f32.mrf.mxu0
    %v4149 = vadd.f32 %v4135, %v4148
    %v4150 = vpop.f32.mrf.mxu0
    %v4151 = vadd.f32 %v4137, %v4150
    %4152 = vdwg.mxu0
    %4153 = vmatpush.bf16.msra.mxu0 %v3555
    %4154 = vmatpush.bf16.msra.mxu0 %v3551
    %4155 = vmatpush.bf16.msra.mxu0 %v3547
    %4156 = vmatpush.bf16.msra.mxu0 %v3543
    %4157 = vmatpush.bf16.msra.mxu0 %v3539
    %4158 = vmatpush.bf16.msra.mxu0 %v3535
    %4159 = vmatpush.bf16.msra.mxu0 %v3531
    %4160 = vmatpush.bf16.msra.mxu0 %v3527
    %4161 = vmatmul.bf16.gmra.mxu0 %v2297
    %v4162 = vpop.f32.mrf.mxu0
    %v4163 = vadd.f32 %v4149, %v4162
    %v4164 = vpop.f32.mrf.mxu0
    %v4165 = vadd.f32 %v4151, %v4164
    %4166 = vdwg.mxu0
    %4167 = vmatpush.bf16.msra.mxu0 %v3587
    %4168 = vmatpush.bf16.msra.mxu0 %v3583
    %4169 = vmatpush.bf16.msra.mxu0 %v3579
    %4170 = vmatpush.bf16.msra.mxu0 %v3575
    %4171 = vmatpush.bf16.msra.mxu0 %v3571
    %4172 = vmatpush.bf16.msra.mxu0 %v3567
    %4173 = vmatpush.bf16.msra.mxu0 %v3563
    %4174 = vmatpush.bf16.msra.mxu0 %v3559
    %4175 = vmatmul.bf16.gmra.mxu0 %v2298
    %v4176 = vpop.f32.mrf.mxu0
    %v4177 = vadd.f32 %v4163, %v4176
    %v4178 = vpop.f32.mrf.mxu0
    %v4179 = vadd.f32 %v4165, %v4178
    %4180 = vdwg.mxu0
    %4181 = vmatpush.bf16.msra.mxu0 %v3364
    %4182 = vmatpush.bf16.msra.mxu0 %v3360
    %4183 = vmatpush.bf16.msra.mxu0 %v3356
    %4184 = vmatpush.bf16.msra.mxu0 %v3352
    %4185 = vmatpush.bf16.msra.mxu0 %v3348
    %4186 = vmatpush.bf16.msra.mxu0 %v3344
    %4187 = vmatpush.bf16.msra.mxu0 %v3340
    %4188 = vmatpush.bf16.msra.mxu0 %v3336
    %4189 = vmatmul.bf16.gmra.mxu0 %v2291
    %v4190 = vpop.f32.mrf.mxu0
    %v4191 = vadd.f32 %v2560, %v4190
    %v4192 = vpop.f32.mrf.mxu0
    %v4193 = vadd.f32 %v2560, %v4192
    %4194 = vdwg.mxu0
    %4195 = vmatpush.bf16.msra.mxu0 %v3396
    %4196 = vmatpush.bf16.msra.mxu0 %v3392
    %4197 = vmatpush.bf16.msra.mxu0 %v3388
    %4198 = vmatpush.bf16.msra.mxu0 %v3384
    %4199 = vmatpush.bf16.msra.mxu0 %v3380
    %4200 = vmatpush.bf16.msra.mxu0 %v3376
    %4201 = vmatpush.bf16.msra.mxu0 %v3372
    %4202 = vmatpush.bf16.msra.mxu0 %v3368
    %4203 = vmatmul.bf16.gmra.mxu0 %v2292
    %v4204 = vpop.f32.mrf.mxu0
    %v4205 = vadd.f32 %v4191, %v4204
    %v4206 = vpop.f32.mrf.mxu0
    %v4207 = vadd.f32 %v4193, %v4206
    %4208 = vdwg.mxu0
    %4209 = vmatpush.bf16.msra.mxu0 %v3428
    %4210 = vmatpush.bf16.msra.mxu0 %v3424
    %4211 = vmatpush.bf16.msra.mxu0 %v3420
    %4212 = vmatpush.bf16.msra.mxu0 %v3416
    %4213 = vmatpush.bf16.msra.mxu0 %v3412
    %4214 = vmatpush.bf16.msra.mxu0 %v3408
    %4215 = vmatpush.bf16.msra.mxu0 %v3404
    %4216 = vmatpush.bf16.msra.mxu0 %v3400
    %4217 = vmatmul.bf16.gmra.mxu0 %v2293
    %v4218 = vpop.f32.mrf.mxu0
    %v4219 = vadd.f32 %v4205, %v4218
    %v4220 = vpop.f32.mrf.mxu0
    %v4221 = vadd.f32 %v4207, %v4220
    %4222 = vdwg.mxu0
    %4223 = vmatpush.bf16.msra.mxu0 %v3460
    %4224 = vmatpush.bf16.msra.mxu0 %v3456
    %4225 = vmatpush.bf16.msra.mxu0 %v3452
    %4226 = vmatpush.bf16.msra.mxu0 %v3448
    %4227 = vmatpush.bf16.msra.mxu0 %v3444
    %4228 = vmatpush.bf16.msra.mxu0 %v3440
    %4229 = vmatpush.bf16.msra.mxu0 %v3436
    %4230 = vmatpush.bf16.msra.mxu0 %v3432
    %4231 = vmatmul.bf16.gmra.mxu0 %v2294
    %v4232 = vpop.f32.mrf.mxu0
    %v4233 = vadd.f32 %v4219, %v4232
    %v4234 = vpop.f32.mrf.mxu0
    %v4235 = vadd.f32 %v4221, %v4234
    %4236 = vdwg.mxu0
    %4237 = vmatpush.bf16.msra.mxu0 %v3492
    %4238 = vmatpush.bf16.msra.mxu0 %v3488
    %4239 = vmatpush.bf16.msra.mxu0 %v3484
    %4240 = vmatpush.bf16.msra.mxu0 %v3480
    %4241 = vmatpush.bf16.msra.mxu0 %v3476
    %4242 = vmatpush.bf16.msra.mxu0 %v3472
    %4243 = vmatpush.bf16.msra.mxu0 %v3468
    %4244 = vmatpush.bf16.msra.mxu0 %v3464
    %4245 = vmatmul.bf16.gmra.mxu0 %v2295
    %v4246 = vpop.f32.mrf.mxu0
    %v4247 = vadd.f32 %v4233, %v4246
    %v4248 = vpop.f32.mrf.mxu0
    %v4249 = vadd.f32 %v4235, %v4248
    %4250 = vdwg.mxu0
    %4251 = vmatpush.bf16.msra.mxu0 %v3524
    %4252 = vmatpush.bf16.msra.mxu0 %v3520
    %4253 = vmatpush.bf16.msra.mxu0 %v3516
    %4254 = vmatpush.bf16.msra.mxu0 %v3512
    %4255 = vmatpush.bf16.msra.mxu0 %v3508
    %4256 = vmatpush.bf16.msra.mxu0 %v3504
    %4257 = vmatpush.bf16.msra.mxu0 %v3500
    %4258 = vmatpush.bf16.msra.mxu0 %v3496
    %4259 = vmatmul.bf16.gmra.mxu0 %v2296
    %v4260 = vpop.f32.mrf.mxu0
    %v4261 = vadd.f32 %v4247, %v4260
    %v4262 = vpop.f32.mrf.mxu0
    %v4263 = vadd.f32 %v4249, %v4262
    %4264 = vdwg.mxu0
    %4265 = vmatpush.bf16.msra.mxu0 %v3556
    %4266 = vmatpush.bf16.msra.mxu0 %v3552
    %4267 = vmatpush.bf16.msra.mxu0 %v3548
    %4268 = vmatpush.bf16.msra.mxu0 %v3544
    %4269 = vmatpush.bf16.msra.mxu0 %v3540
    %4270 = vmatpush.bf16.msra.mxu0 %v3536
    %4271 = vmatpush.bf16.msra.mxu0 %v3532
    %4272 = vmatpush.bf16.msra.mxu0 %v3528
    %4273 = vmatmul.bf16.gmra.mxu0 %v2297
    %v4274 = vpop.f32.mrf.mxu0
    %v4275 = vadd.f32 %v4261, %v4274
    %v4276 = vpop.f32.mrf.mxu0
    %v4277 = vadd.f32 %v4263, %v4276
    %4278 = vdwg.mxu0
    %4279 = vmatpush.bf16.msra.mxu0 %v3588
    %4280 = vmatpush.bf16.msra.mxu0 %v3584
    %4281 = vmatpush.bf16.msra.mxu0 %v3580
    %4282 = vmatpush.bf16.msra.mxu0 %v3576
    %4283 = vmatpush.bf16.msra.mxu0 %v3572
    %4284 = vmatpush.bf16.msra.mxu0 %v3568
    %4285 = vmatpush.bf16.msra.mxu0 %v3564
    %4286 = vmatpush.bf16.msra.mxu0 %v3560
    %4287 = vmatmul.bf16.gmra.mxu0 %v2298
    %v4288 = vpop.f32.mrf.mxu0
    %v4289 = vadd.f32 %v4275, %v4288
    %v4290 = vpop.f32.mrf.mxu0
    %v4291 = vadd.f32 %v4277, %v4290
    %4292 = vdwg.mxu0
    %v4293 = vmax.f32 %v3953, 0.0
    %v4294 = vmax.f32 %v4065, 0.0
    %v4295 = vmax.f32 %v4177, 0.0
    %v4296 = vmax.f32 %v4289, 0.0
    %v4297 = vmax.f32 %v3955, 0.0
    %v4298 = vmax.f32 %v4067, 0.0
    %v4299 = vmax.f32 %v4179, 0.0
    %v4300 = vmax.f32 %v4291, 0.0
    %v4301 = vpack.c.bf16 %v4297, %v4293
    %v4302 = vpack.c.bf16 %v4298, %v4294
    %v4303 = vpack.c.bf16 %v4299, %v4295
    %v4304 = vpack.c.bf16 %v4300, %v4296
    %v4305 = vld [vmem:[#allocation6] sm:$0xff]
    %v4306 = vld [vmem:[#allocation6 + $0x8] sm:$0xff]
    %v4307 = vld [vmem:[#allocation6 + $0x10] sm:$0xff]
    %v4308 = vld [vmem:[#allocation6 + $0x18] sm:$0xff]
    %v4309 = vld [vmem:[#allocation6 + $0x20] sm:$0xff]
    %v4310 = vld [vmem:[#allocation6 + $0x28] sm:$0xff]
    %v4311 = vld [vmem:[#allocation6 + $0x30] sm:$0xff]
    %v4312 = vld [vmem:[#allocation6 + $0x38] sm:$0xff]
    %v4313 = vld [vmem:[#allocation6 + $0x40] sm:$0xff]
    %v4314 = vld [vmem:[#allocation6 + $0x48] sm:$0xff]
    %v4315 = vld [vmem:[#allocation6 + $0x50] sm:$0xff]
    %v4316 = vld [vmem:[#allocation6 + $0x58] sm:$0xff]
    %v4317 = vld [vmem:[#allocation6 + $0x60] sm:$0xff]
    %v4318 = vld [vmem:[#allocation6 + $0x68] sm:$0xff]
    %v4319 = vld [vmem:[#allocation6 + $0x70] sm:$0xff]
    %v4320 = vld [vmem:[#allocation6 + $0x78] sm:$0xff]
    %v4321 = vld [vmem:[#allocation6 + $0x80] sm:$0xff]
    %v4322 = vld [vmem:[#allocation6 + $0x88] sm:$0xff]
    %v4323 = vld [vmem:[#allocation6 + $0x90] sm:$0xff]
    %v4324 = vld [vmem:[#allocation6 + $0x98] sm:$0xff]
    %v4325 = vld [vmem:[#allocation6 + $0xa0] sm:$0xff]
    %v4326 = vld [vmem:[#allocation6 + $0xa8] sm:$0xff]
    %v4327 = vld [vmem:[#allocation6 + $0xb0] sm:$0xff]
    %v4328 = vld [vmem:[#allocation6 + $0xb8] sm:$0xff]
    %v4329 = vld [vmem:[#allocation6 + $0xc0] sm:$0xff]
    %v4330 = vld [vmem:[#allocation6 + $0xc8] sm:$0xff]
    %v4331 = vld [vmem:[#allocation6 + $0xd0] sm:$0xff]
    %v4332 = vld [vmem:[#allocation6 + $0xd8] sm:$0xff]
    %v4333 = vld [vmem:[#allocation6 + $0xe0] sm:$0xff]
    %v4334 = vld [vmem:[#allocation6 + $0xe8] sm:$0xff]
    %v4335 = vld [vmem:[#allocation6 + $0xf0] sm:$0xff]
    %v4336 = vld [vmem:[#allocation6 + $0xf8] sm:$0xff]
    %v4337 = vld [vmem:[#allocation6 + $0x100] sm:$0xff]
    %v4338 = vld [vmem:[#allocation6 + $0x108] sm:$0xff]
    %v4339 = vld [vmem:[#allocation6 + $0x110] sm:$0xff]
    %v4340 = vld [vmem:[#allocation6 + $0x118] sm:$0xff]
    %v4341 = vld [vmem:[#allocation6 + $0x120] sm:$0xff]
    %v4342 = vld [vmem:[#allocation6 + $0x128] sm:$0xff]
    %v4343 = vld [vmem:[#allocation6 + $0x130] sm:$0xff]
    %v4344 = vld [vmem:[#allocation6 + $0x138] sm:$0xff]
    %v4345 = vld [vmem:[#allocation6 + $0x140] sm:$0xff]
    %v4346 = vld [vmem:[#allocation6 + $0x148] sm:$0xff]
    %v4347 = vld [vmem:[#allocation6 + $0x150] sm:$0xff]
    %v4348 = vld [vmem:[#allocation6 + $0x158] sm:$0xff]
    %v4349 = vld [vmem:[#allocation6 + $0x160] sm:$0xff]
    %v4350 = vld [vmem:[#allocation6 + $0x168] sm:$0xff]
    %v4351 = vld [vmem:[#allocation6 + $0x170] sm:$0xff]
    %v4352 = vld [vmem:[#allocation6 + $0x178] sm:$0xff]
    %v4353 = vld [vmem:[#allocation6 + $0x180] sm:$0xff]
    %v4354 = vld [vmem:[#allocation6 + $0x188] sm:$0xff]
    %v4355 = vld [vmem:[#allocation6 + $0x190] sm:$0xff]
    %v4356 = vld [vmem:[#allocation6 + $0x198] sm:$0xff]
    %v4357 = vld [vmem:[#allocation6 + $0x1a0] sm:$0xff]
    %v4358 = vld [vmem:[#allocation6 + $0x1a8] sm:$0xff]
    %v4359 = vld [vmem:[#allocation6 + $0x1b0] sm:$0xff]
    %v4360 = vld [vmem:[#allocation6 + $0x1b8] sm:$0xff]
    %v4361 = vld [vmem:[#allocation6 + $0x1c0] sm:$0xff]
    %v4362 = vld [vmem:[#allocation6 + $0x1c8] sm:$0xff]
    %v4363 = vld [vmem:[#allocation6 + $0x1d0] sm:$0xff]
    %v4364 = vld [vmem:[#allocation6 + $0x1d8] sm:$0xff]
    %v4365 = vld [vmem:[#allocation6 + $0x1e0] sm:$0xff]
    %v4366 = vld [vmem:[#allocation6 + $0x1e8] sm:$0xff]
    %v4367 = vld [vmem:[#allocation6 + $0x1f0] sm:$0xff]
    %v4368 = vld [vmem:[#allocation6 + $0x1f8] sm:$0xff]
    %v4369 = vld [vmem:[%s8] sm:$0x3]
    %v4371 = vperm.slane %v4369, 0
    %v4372 = vperm.slane %v4369, 1
    %v4439 = vunpack.c.l.b16 %v4305
    %v4440 = vunpack.c.h.b16 %v4305
    %v4441 = vunpack.c.l.b16 %v4306
    %v4442 = vunpack.c.h.b16 %v4306
    %v4443 = vunpack.c.l.b16 %v4307
    %v4444 = vunpack.c.h.b16 %v4307
    %v4445 = vunpack.c.l.b16 %v4308
    %v4446 = vunpack.c.h.b16 %v4308
    %v4447 = vunpack.c.l.b16 %v4309
    %v4448 = vunpack.c.h.b16 %v4309
    %v4449 = vunpack.c.l.b16 %v4310
    %v4450 = vunpack.c.h.b16 %v4310
    %v4451 = vunpack.c.l.b16 %v4311
    %v4452 = vunpack.c.h.b16 %v4311
    %v4453 = vunpack.c.l.b16 %v4312
    %v4454 = vunpack.c.h.b16 %v4312
    %v4455 = vunpack.c.l.b16 %v4313
    %v4456 = vunpack.c.h.b16 %v4313
    %v4457 = vunpack.c.l.b16 %v4314
    %v4458 = vunpack.c.h.b16 %v4314
    %v4459 = vunpack.c.l.b16 %v4315
    %v4460 = vunpack.c.h.b16 %v4315
    %v4461 = vunpack.c.l.b16 %v4316
    %v4462 = vunpack.c.h.b16 %v4316
    %v4463 = vunpack.c.l.b16 %v4317
    %v4464 = vunpack.c.h.b16 %v4317
    %v4465 = vunpack.c.l.b16 %v4318
    %v4466 = vunpack.c.h.b16 %v4318
    %v4467 = vunpack.c.l.b16 %v4319
    %v4468 = vunpack.c.h.b16 %v4319
    %v4469 = vunpack.c.l.b16 %v4320
    %v4470 = vunpack.c.h.b16 %v4320
    %v4471 = vunpack.c.l.b16 %v4321
    %v4472 = vunpack.c.h.b16 %v4321
    %v4473 = vunpack.c.l.b16 %v4322
    %v4474 = vunpack.c.h.b16 %v4322
    %v4475 = vunpack.c.l.b16 %v4323
    %v4476 = vunpack.c.h.b16 %v4323
    %v4477 = vunpack.c.l.b16 %v4324
    %v4478 = vunpack.c.h.b16 %v4324
    %v4479 = vunpack.c.l.b16 %v4325
    %v4480 = vunpack.c.h.b16 %v4325
    %v4481 = vunpack.c.l.b16 %v4326
    %v4482 = vunpack.c.h.b16 %v4326
    %v4483 = vunpack.c.l.b16 %v4327
    %v4484 = vunpack.c.h.b16 %v4327
    %v4485 = vunpack.c.l.b16 %v4328
    %v4486 = vunpack.c.h.b16 %v4328
    %v4487 = vunpack.c.l.b16 %v4329
    %v4488 = vunpack.c.h.b16 %v4329
    %v4489 = vunpack.c.l.b16 %v4330
    %v4490 = vunpack.c.h.b16 %v4330
    %v4491 = vunpack.c.l.b16 %v4331
    %v4492 = vunpack.c.h.b16 %v4331
    %v4493 = vunpack.c.l.b16 %v4332
    %v4494 = vunpack.c.h.b16 %v4332
    %v4495 = vunpack.c.l.b16 %v4333
    %v4496 = vunpack.c.h.b16 %v4333
    %v4497 = vunpack.c.l.b16 %v4334
    %v4498 = vunpack.c.h.b16 %v4334
    %v4499 = vunpack.c.l.b16 %v4335
    %v4500 = vunpack.c.h.b16 %v4335
    %v4501 = vunpack.c.l.b16 %v4336
    %v4502 = vunpack.c.h.b16 %v4336
    %v4503 = vunpack.c.l.b16 %v4337
    %v4504 = vunpack.c.h.b16 %v4337
    %v4505 = vunpack.c.l.b16 %v4338
    %v4506 = vunpack.c.h.b16 %v4338
    %v4507 = vunpack.c.l.b16 %v4339
    %v4508 = vunpack.c.h.b16 %v4339
    %v4509 = vunpack.c.l.b16 %v4340
    %v4510 = vunpack.c.h.b16 %v4340
    %v4511 = vunpack.c.l.b16 %v4341
    %v4512 = vunpack.c.h.b16 %v4341
    %v4513 = vunpack.c.l.b16 %v4342
    %v4514 = vunpack.c.h.b16 %v4342
    %v4515 = vunpack.c.l.b16 %v4343
    %v4516 = vunpack.c.h.b16 %v4343
    %v4517 = vunpack.c.l.b16 %v4344
    %v4518 = vunpack.c.h.b16 %v4344
    %v4519 = vunpack.c.l.b16 %v4345
    %v4520 = vunpack.c.h.b16 %v4345
    %v4521 = vunpack.c.l.b16 %v4346
    %v4522 = vunpack.c.h.b16 %v4346
    %v4523 = vunpack.c.l.b16 %v4347
    %v4524 = vunpack.c.h.b16 %v4347
    %v4525 = vunpack.c.l.b16 %v4348
    %v4526 = vunpack.c.h.b16 %v4348
    %v4527 = vunpack.c.l.b16 %v4349
    %v4528 = vunpack.c.h.b16 %v4349
    %v4529 = vunpack.c.l.b16 %v4350
    %v4530 = vunpack.c.h.b16 %v4350
    %v4531 = vunpack.c.l.b16 %v4351
    %v4532 = vunpack.c.h.b16 %v4351
    %v4533 = vunpack.c.l.b16 %v4352
    %v4534 = vunpack.c.h.b16 %v4352
    %v4535 = vunpack.c.l.b16 %v4353
    %v4536 = vunpack.c.h.b16 %v4353
    %v4537 = vunpack.c.l.b16 %v4354
    %v4538 = vunpack.c.h.b16 %v4354
    %v4539 = vunpack.c.l.b16 %v4355
    %v4540 = vunpack.c.h.b16 %v4355
    %v4541 = vunpack.c.l.b16 %v4356
    %v4542 = vunpack.c.h.b16 %v4356
    %v4543 = vunpack.c.l.b16 %v4357
    %v4544 = vunpack.c.h.b16 %v4357
    %v4545 = vunpack.c.l.b16 %v4358
    %v4546 = vunpack.c.h.b16 %v4358
    %v4547 = vunpack.c.l.b16 %v4359
    %v4548 = vunpack.c.h.b16 %v4359
    %v4549 = vunpack.c.l.b16 %v4360
    %v4550 = vunpack.c.h.b16 %v4360
    %v4551 = vunpack.c.l.b16 %v4361
    %v4552 = vunpack.c.h.b16 %v4361
    %v4553 = vunpack.c.l.b16 %v4362
    %v4554 = vunpack.c.h.b16 %v4362
    %v4555 = vunpack.c.l.b16 %v4363
    %v4556 = vunpack.c.h.b16 %v4363
    %v4557 = vunpack.c.l.b16 %v4364
    %v4558 = vunpack.c.h.b16 %v4364
    %v4559 = vunpack.c.l.b16 %v4365
    %v4560 = vunpack.c.h.b16 %v4365
    %v4561 = vunpack.c.l.b16 %v4366
    %v4562 = vunpack.c.h.b16 %v4366
    %v4563 = vunpack.c.l.b16 %v4367
    %v4564 = vunpack.c.h.b16 %v4367
    %v4565 = vunpack.c.l.b16 %v4368
    %v4566 = vunpack.c.h.b16 %v4368
    %v4567 = vpack.c.b16 %v4441, %v4439
    %v4568 = vpack.c.b16 %v4442, %v4440
    %v4569 = vpack.c.b16 %v4445, %v4443
    %v4570 = vpack.c.b16 %v4446, %v4444
    %v4571 = vpack.c.b16 %v4449, %v4447
    %v4572 = vpack.c.b16 %v4450, %v4448
    %v4573 = vpack.c.b16 %v4453, %v4451
    %v4574 = vpack.c.b16 %v4454, %v4452
    %v4575 = vpack.c.b16 %v4457, %v4455
    %v4576 = vpack.c.b16 %v4458, %v4456
    %v4577 = vpack.c.b16 %v4461, %v4459
    %v4578 = vpack.c.b16 %v4462, %v4460
    %v4579 = vpack.c.b16 %v4465, %v4463
    %v4580 = vpack.c.b16 %v4466, %v4464
    %v4581 = vpack.c.b16 %v4469, %v4467
    %v4582 = vpack.c.b16 %v4470, %v4468
    %v4583 = vpack.c.b16 %v4473, %v4471
    %v4584 = vpack.c.b16 %v4474, %v4472
    %v4585 = vpack.c.b16 %v4477, %v4475
    %v4586 = vpack.c.b16 %v4478, %v4476
    %v4587 = vpack.c.b16 %v4481, %v4479
    %v4588 = vpack.c.b16 %v4482, %v4480
    %v4589 = vpack.c.b16 %v4485, %v4483
    %v4590 = vpack.c.b16 %v4486, %v4484
    %v4591 = vpack.c.b16 %v4489, %v4487
    %v4592 = vpack.c.b16 %v4490, %v4488
    %v4593 = vpack.c.b16 %v4493, %v4491
    %v4594 = vpack.c.b16 %v4494, %v4492
    %v4595 = vpack.c.b16 %v4497, %v4495
    %v4596 = vpack.c.b16 %v4498, %v4496
    %v4597 = vpack.c.b16 %v4501, %v4499
    %v4598 = vpack.c.b16 %v4502, %v4500
    %v4599 = vpack.c.b16 %v4505, %v4503
    %v4600 = vpack.c.b16 %v4506, %v4504
    %v4601 = vpack.c.b16 %v4509, %v4507
    %v4602 = vpack.c.b16 %v4510, %v4508
    %v4603 = vpack.c.b16 %v4513, %v4511
    %v4604 = vpack.c.b16 %v4514, %v4512
    %v4605 = vpack.c.b16 %v4517, %v4515
    %v4606 = vpack.c.b16 %v4518, %v4516
    %v4607 = vpack.c.b16 %v4521, %v4519
    %v4608 = vpack.c.b16 %v4522, %v4520
    %v4609 = vpack.c.b16 %v4525, %v4523
    %v4610 = vpack.c.b16 %v4526, %v4524
    %v4611 = vpack.c.b16 %v4529, %v4527
    %v4612 = vpack.c.b16 %v4530, %v4528
    %v4613 = vpack.c.b16 %v4533, %v4531
    %v4614 = vpack.c.b16 %v4534, %v4532
    %v4615 = vpack.c.b16 %v4537, %v4535
    %v4616 = vpack.c.b16 %v4538, %v4536
    %v4617 = vpack.c.b16 %v4541, %v4539
    %v4618 = vpack.c.b16 %v4542, %v4540
    %v4619 = vpack.c.b16 %v4545, %v4543
    %v4620 = vpack.c.b16 %v4546, %v4544
    %v4621 = vpack.c.b16 %v4549, %v4547
    %v4622 = vpack.c.b16 %v4550, %v4548
    %v4623 = vpack.c.b16 %v4553, %v4551
    %v4624 = vpack.c.b16 %v4554, %v4552
    %v4625 = vpack.c.b16 %v4557, %v4555
    %v4626 = vpack.c.b16 %v4558, %v4556
    %v4627 = vpack.c.b16 %v4561, %v4559
    %v4628 = vpack.c.b16 %v4562, %v4560
    %v4629 = vpack.c.b16 %v4565, %v4563
    %v4630 = vpack.c.b16 %v4566, %v4564
    %4695 = vmatpush.bf16.msra.mxu0 %v4581
    %4696 = vmatpush.bf16.msra.mxu0 %v4579
    %4697 = vmatpush.bf16.msra.mxu0 %v4577
    %4698 = vmatpush.bf16.msra.mxu0 %v4575
    %4699 = vmatpush.bf16.msra.mxu0 %v4573
    %4700 = vmatpush.bf16.msra.mxu0 %v4571
    %4701 = vmatpush.bf16.msra.mxu0 %v4569
    %4702 = vmatpush.bf16.msra.mxu0 %v4567
    %4703 = vmatmul.bf16.gmra.mxu0 %v4301
    %v4704 = vpop.f32.mrf.mxu0
    %v4705 = vadd.f32 %v4371, %v4704
    %v4706 = vpop.f32.mrf.mxu0
    %v4707 = vadd.f32 %v4371, %v4706
    %4708 = vdwg.mxu0
    %4709 = vmatpush.bf16.msra.mxu0 %v4597
    %4710 = vmatpush.bf16.msra.mxu0 %v4595
    %4711 = vmatpush.bf16.msra.mxu0 %v4593
    %4712 = vmatpush.bf16.msra.mxu0 %v4591
    %4713 = vmatpush.bf16.msra.mxu0 %v4589
    %4714 = vmatpush.bf16.msra.mxu0 %v4587
    %4715 = vmatpush.bf16.msra.mxu0 %v4585
    %4716 = vmatpush.bf16.msra.mxu0 %v4583
    %4717 = vmatmul.bf16.gmra.mxu0 %v4302
    %v4718 = vpop.f32.mrf.mxu0
    %v4719 = vadd.f32 %v4705, %v4718
    %v4720 = vpop.f32.mrf.mxu0
    %v4721 = vadd.f32 %v4707, %v4720
    %4722 = vdwg.mxu0
    %4723 = vmatpush.bf16.msra.mxu0 %v4613
    %4724 = vmatpush.bf16.msra.mxu0 %v4611
    %4725 = vmatpush.bf16.msra.mxu0 %v4609
    %4726 = vmatpush.bf16.msra.mxu0 %v4607
    %4727 = vmatpush.bf16.msra.mxu0 %v4605
    %4728 = vmatpush.bf16.msra.mxu0 %v4603
    %4729 = vmatpush.bf16.msra.mxu0 %v4601
    %4730 = vmatpush.bf16.msra.mxu0 %v4599
    %4731 = vmatmul.bf16.gmra.mxu0 %v4303
    %v4732 = vpop.f32.mrf.mxu0
    %v4733 = vadd.f32 %v4719, %v4732
    %v4734 = vpop.f32.mrf.mxu0
    %v4735 = vadd.f32 %v4721, %v4734
    %4736 = vdwg.mxu0
    %4737 = vmatpush.bf16.msra.mxu0 %v4629
    %4738 = vmatpush.bf16.msra.mxu0 %v4627
    %4739 = vmatpush.bf16.msra.mxu0 %v4625
    %4740 = vmatpush.bf16.msra.mxu0 %v4623
    %4741 = vmatpush.bf16.msra.mxu0 %v4621
    %4742 = vmatpush.bf16.msra.mxu0 %v4619
    %4743 = vmatpush.bf16.msra.mxu0 %v4617
    %4744 = vmatpush.bf16.msra.mxu0 %v4615
    %4745 = vmatmul.bf16.gmra.mxu0 %v4304
    %v4746 = vpop.f32.mrf.mxu0
    %v4747 = vadd.f32 %v4733, %v4746
    %v4748 = vpop.f32.mrf.mxu0
    %v4749 = vadd.f32 %v4735, %v4748
    %4750 = vdwg.mxu0
    %4751 = vmatpush.bf16.msra.mxu0 %v4582
    %4752 = vmatpush.bf16.msra.mxu0 %v4580
    %4753 = vmatpush.bf16.msra.mxu0 %v4578
    %4754 = vmatpush.bf16.msra.mxu0 %v4576
    %4755 = vmatpush.bf16.msra.mxu0 %v4574
    %4756 = vmatpush.bf16.msra.mxu0 %v4572
    %4757 = vmatpush.bf16.msra.mxu0 %v4570
    %4758 = vmatpush.bf16.msra.mxu0 %v4568
    %4759 = vmatmul.bf16.gmra.mxu0 %v4301
    %v4760 = vpop.f32.mrf.mxu0
    %v4761 = vadd.f32 %v4372, %v4760
    %v4762 = vpop.f32.mrf.mxu0
    %v4763 = vadd.f32 %v4372, %v4762
    %4764 = vdwg.mxu0
    %4765 = vmatpush.bf16.msra.mxu0 %v4598
    %4766 = vmatpush.bf16.msra.mxu0 %v4596
    %4767 = vmatpush.bf16.msra.mxu0 %v4594
    %4768 = vmatpush.bf16.msra.mxu0 %v4592
    %4769 = vmatpush.bf16.msra.mxu0 %v4590
    %4770 = vmatpush.bf16.msra.mxu0 %v4588
    %4771 = vmatpush.bf16.msra.mxu0 %v4586
    %4772 = vmatpush.bf16.msra.mxu0 %v4584
    %4773 = vmatmul.bf16.gmra.mxu0 %v4302
    %v4774 = vpop.f32.mrf.mxu0
    %v4775 = vadd.f32 %v4761, %v4774
    %v4776 = vpop.f32.mrf.mxu0
    %v4777 = vadd.f32 %v4763, %v4776
    %4778 = vdwg.mxu0
    %4779 = vmatpush.bf16.msra.mxu0 %v4614
    %4780 = vmatpush.bf16.msra.mxu0 %v4612
    %4781 = vmatpush.bf16.msra.mxu0 %v4610
    %4782 = vmatpush.bf16.msra.mxu0 %v4608
    %4783 = vmatpush.bf16.msra.mxu0 %v4606
    %4784 = vmatpush.bf16.msra.mxu0 %v4604
    %4785 = vmatpush.bf16.msra.mxu0 %v4602
    %4786 = vmatpush.bf16.msra.mxu0 %v4600
    %4787 = vmatmul.bf16.gmra.mxu0 %v4303
    %v4788 = vpop.f32.mrf.mxu0
    %v4789 = vadd.f32 %v4775, %v4788
    %v4790 = vpop.f32.mrf.mxu0
    %v4791 = vadd.f32 %v4777, %v4790
    %4792 = vdwg.mxu0
    %4793 = vmatpush.bf16.msra.mxu0 %v4630
    %4794 = vmatpush.bf16.msra.mxu0 %v4628
    %4795 = vmatpush.bf16.msra.mxu0 %v4626
    %4796 = vmatpush.bf16.msra.mxu0 %v4624
    %4797 = vmatpush.bf16.msra.mxu0 %v4622
    %4798 = vmatpush.bf16.msra.mxu0 %v4620
    %4799 = vmatpush.bf16.msra.mxu0 %v4618
    %4800 = vmatpush.bf16.msra.mxu0 %v4616
    %4801 = vmatmul.bf16.gmra.mxu0 %v4304
    %v4802 = vpop.f32.mrf.mxu0
    %v4803 = vadd.f32 %v4789, %v4802
    %v4804 = vpop.f32.mrf.mxu0
    %v4805 = vadd.f32 %v4791, %v4804
    %4806 = vdwg.mxu0
    %v4807 = vmax.f32 %v4747, 0.0
    %v4808 = vmax.f32 %v4803, 0.0
    %v4809 = vmax.f32 %v4749, 0.0
    %v4810 = vmax.f32 %v4805, 0.0
    %v4811 = vpack.c.bf16 %v4809, %v4807
    %v4812 = vpack.c.bf16 %v4810, %v4808
    %v4813 = vld [vmem:[%s9] sm:$0xf]
    %v4814 = vld [vmem:[%s9 + $0x4] sm:$0xf]
    %v4815 = vld [vmem:[%s9 + $0x8] sm:$0xf]
    %v4816 = vld [vmem:[%s9 + $0xc] sm:$0xf]
    %v4817 = vld [vmem:[%s9 + $0x10] sm:$0xf]
    %v4818 = vld [vmem:[%s9 + $0x14] sm:$0xf]
    %v4819 = vld [vmem:[%s9 + $0x18] sm:$0xf]
    %v4820 = vld [vmem:[%s9 + $0x1c] sm:$0xf]
    %v4821 = vld [vmem:[%s9 + $0x20] sm:$0xf]
    %v4822 = vld [vmem:[%s9 + $0x24] sm:$0xf]
    %v4823 = vld [vmem:[%s9 + $0x28] sm:$0xf]
    %v4824 = vld [vmem:[%s9 + $0x2c] sm:$0xf]
    %v4825 = vld [vmem:[%s9 + $0x30] sm:$0xf]
    %v4826 = vld [vmem:[%s9 + $0x34] sm:$0xf]
    %v4827 = vld [vmem:[%s9 + $0x38] sm:$0xf]
    %v4828 = vld [vmem:[%s9 + $0x3c] sm:$0xf]
    %v4829 = vld [vmem:[%s9 + $0x40] sm:$0xf]
    %v4830 = vld [vmem:[%s9 + $0x44] sm:$0xf]
    %v4831 = vld [vmem:[%s9 + $0x48] sm:$0xf]
    %v4832 = vld [vmem:[%s9 + $0x4c] sm:$0xf]
    %v4833 = vld [vmem:[%s9 + $0x50] sm:$0xf]
    %v4834 = vld [vmem:[%s9 + $0x54] sm:$0xf]
    %v4835 = vld [vmem:[%s9 + $0x58] sm:$0xf]
    %v4836 = vld [vmem:[%s9 + $0x5c] sm:$0xf]
    %v4837 = vld [vmem:[%s9 + $0x60] sm:$0xf]
    %v4838 = vld [vmem:[%s9 + $0x64] sm:$0xf]
    %v4839 = vld [vmem:[%s9 + $0x68] sm:$0xf]
    %v4840 = vld [vmem:[%s9 + $0x6c] sm:$0xf]
    %v4841 = vld [vmem:[%s9 + $0x70] sm:$0xf]
    %v4842 = vld [vmem:[%s9 + $0x74] sm:$0xf]
    %v4843 = vld [vmem:[%s9 + $0x78] sm:$0xf]
    %v4844 = vld [vmem:[%s9 + $0x7c] sm:$0xf]
    %v4845 = vld [vmem:[%s10] sm:$0x1]
    %v4847 = vperm.slane %v4845, 0
    %v4881 = vunpack.c.l.b16 %v4813
    %v4882 = vunpack.c.l.b16 %v4814
    %v4883 = vunpack.c.l.b16 %v4815
    %v4884 = vunpack.c.l.b16 %v4816
    %v4885 = vunpack.c.l.b16 %v4817
    %v4886 = vunpack.c.l.b16 %v4818
    %v4887 = vunpack.c.l.b16 %v4819
    %v4888 = vunpack.c.l.b16 %v4820
    %v4889 = vunpack.c.l.b16 %v4821
    %v4890 = vunpack.c.l.b16 %v4822
    %v4891 = vunpack.c.l.b16 %v4823
    %v4892 = vunpack.c.l.b16 %v4824
    %v4893 = vunpack.c.l.b16 %v4825
    %v4894 = vunpack.c.l.b16 %v4826
    %v4895 = vunpack.c.l.b16 %v4827
    %v4896 = vunpack.c.l.b16 %v4828
    %v4897 = vunpack.c.l.b16 %v4829
    %v4898 = vunpack.c.l.b16 %v4830
    %v4899 = vunpack.c.l.b16 %v4831
    %v4900 = vunpack.c.l.b16 %v4832
    %v4901 = vunpack.c.l.b16 %v4833
    %v4902 = vunpack.c.l.b16 %v4834
    %v4903 = vunpack.c.l.b16 %v4835
    %v4904 = vunpack.c.l.b16 %v4836
    %v4905 = vunpack.c.l.b16 %v4837
    %v4906 = vunpack.c.l.b16 %v4838
    %v4907 = vunpack.c.l.b16 %v4839
    %v4908 = vunpack.c.l.b16 %v4840
    %v4909 = vunpack.c.l.b16 %v4841
    %v4910 = vunpack.c.l.b16 %v4842
    %v4911 = vunpack.c.l.b16 %v4843
    %v4912 = vunpack.c.l.b16 %v4844
    %v4913 = vpack.c.b16 %v4882, %v4881
    %v4914 = vpack.c.b16 %v4884, %v4883
    %v4915 = vpack.c.b16 %v4886, %v4885
    %v4916 = vpack.c.b16 %v4888, %v4887
    %v4917 = vpack.c.b16 %v4890, %v4889
    %v4918 = vpack.c.b16 %v4892, %v4891
    %v4919 = vpack.c.b16 %v4894, %v4893
    %v4920 = vpack.c.b16 %v4896, %v4895
    %v4921 = vpack.c.b16 %v4898, %v4897
    %v4922 = vpack.c.b16 %v4900, %v4899
    %v4923 = vpack.c.b16 %v4902, %v4901
    %v4924 = vpack.c.b16 %v4904, %v4903
    %v4925 = vpack.c.b16 %v4906, %v4905
    %v4926 = vpack.c.b16 %v4908, %v4907
    %v4927 = vpack.c.b16 %v4910, %v4909
    %v4928 = vpack.c.b16 %v4912, %v4911
    %4945 = vmatpush.bf16.msra.mxu0 %v4920
    %4946 = vmatpush.bf16.msra.mxu0 %v4919
    %4947 = vmatpush.bf16.msra.mxu0 %v4918
    %4948 = vmatpush.bf16.msra.mxu0 %v4917
    %4949 = vmatpush.bf16.msra.mxu0 %v4916
    %4950 = vmatpush.bf16.msra.mxu0 %v4915
    %4951 = vmatpush.bf16.msra.mxu0 %v4914
    %4952 = vmatpush.bf16.msra.mxu0 %v4913
    %4953 = vmatmul.bf16.gmra.mxu0 %v4811
    %v4954 = vpop.f32.mrf.mxu0
    %v4955 = vadd.f32 %v4847, %v4954
    %v4956 = vpop.f32.mrf.mxu0
    %v4957 = vadd.f32 %v4847, %v4956
    %4958 = vdwg.mxu0
    %4959 = vmatpush.bf16.msra.mxu0 %v4928
    %4960 = vmatpush.bf16.msra.mxu0 %v4927
    %4961 = vmatpush.bf16.msra.mxu0 %v4926
    %4962 = vmatpush.bf16.msra.mxu0 %v4925
    %4963 = vmatpush.bf16.msra.mxu0 %v4924
    %4964 = vmatpush.bf16.msra.mxu0 %v4923
    %4965 = vmatpush.bf16.msra.mxu0 %v4922
    %4966 = vmatpush.bf16.msra.mxu0 %v4921
    %4967 = vmatmul.bf16.gmra.mxu0 %v4812
    %v4968 = vpop.f32.mrf.mxu0
    %v4969 = vadd.f32 %v4955, %v4968
    %v4970 = vpop.f32.mrf.mxu0
    %v4971 = vadd.f32 %v4957, %v4970
    %4972 = vdwg.mxu0
    %v4973 = vmul.f32 %v4969, 0.5
    %v4974 = vmul.f32 %v4971, 0.5
    %v4975 = vmul.f32 %v4973, 1.442695
    %v4976 = vpow.pop %v4975
    %v4977 = vmul.f32 %v4974, 1.442695
    %v4978 = vpow.pop %v4977
    %4981 = vrot.lane.b32.xlu0 %v346, 96
    %v4982 = vpop.permute.xlu0 %4981
    %4983 = vrot.lane.b32.xlu0 %v347, 96
    %v4984 = vpop.permute.xlu0 %4983
    %v4987 = vmul.f32 %v4976, %v4982
    %v4988 = vmul.f32 %v4978, %v4984
    %4991 = vrot.lane.b32.xlu0 %v4987, 96
    %v4992 = vpop.permute.xlu0 %4991
    %4993 = vrot.lane.b32.xlu0 %v4988, 96
    %v4994 = vpop.permute.xlu0 %4993
    %v4997 = vadd.f32 %v4969, %v4992
    %v4998 = vadd.f32 %v4971, %v4994
    %5001 = vrot.lane.b32.xlu0 %v4997, 64
    %v5002 = vpop.permute.xlu0 %5001
    %5003 = vrot.lane.b32.xlu0 %v4998, 64
    %v5004 = vpop.permute.xlu0 %5003
    %vm5007 = vcmask 523264
    %v5008 = vsel %vm5007, %v4969, %v5002
    %v5009 = vsel %vm5007, %v4971, %v5004
    %vm5010 = vcmask 785408
    %v5011 = vsel %vm5010, %v5008, 0.0
    %v5012 = vsel %vm5010, %v5009, 0.0
    %5013 = vst [vmem:[%s11] sm:$0xff] %v5011
    %5014 = vst [vmem:[%s11 + $0x8] sm:$0xff] %v5012
    // Predicated region
    $region58: #{encoder_forward.1} parent=1 // pred_check
      _
    $region59: #{encoder_forward.1} parent=1 // pred_check_branch
      %5016 = sbr.rel (0) target = $region61
    $region60: #{encoder_forward.1} parent=1 // pred_region
      _
    $region61: #{encoder_forward.1} parent=1 // pred_fallthru
      _
    // Predicated region
    $region62: #{encoder_forward.1} parent=1 // pred_check
      _
    $region63: #{encoder_forward.1} parent=1 // pred_check_branch
      %5018 = sbr.rel (0) target = $region65
    $region64: #{encoder_forward.1} parent=1 // pred_region
      _
    $region65: #{encoder_forward.1} parent=1 // pred_fallthru
      _
    %5019 = vsyncpa [#allocation3], 1
    %5020 = vsyncpa [#allocation5], 1

</llo_original>
